<compile_context>
chip_gen: v6e
topology: v6e:2x2x1
jax: 0.10.0
libtpu: 0.0.40
codegen_flags: <defaults>
</compile_context>

<pallas_src>
import jax
import jax.numpy as jnp
from jax.experimental import pallas as pl
from jax.experimental.pallas import tpu as pltpu


def _equal_room_size_kernel(r1_ref, r2_ref, mask_ref, wa_ref, wb_ref,
                            b1_ref, w2_ref, b2_ref, o_ref):
    # r1_ref, r2_ref : (tn, 4, H, W)      -- depth cubes, original layout/dtype
    # mask_ref       : (tn, 1)  int32     -- 1 if op == 'bigger' else 0
    # wa_ref, wb_ref : (8, fc)  f32       -- BN-folded, concat-folded layer-1 weights
    # b1_ref         : (1, fc)  f32       -- BN-folded layer-1 bias
    # w2_ref         : (2, fc)  f32
    # b2_ref         : (1, 2)   f32
    # o_ref          : (tn, 1)  f32
    hgt = r1_ref.shape[-2]
    wdt = r1_ref.shape[-1]
    inv_hw = 1.0 / float(hgt * wdt)

    def room_feats(r_ref):
        # Per-direction spatial means.  Each r_ref[:, k] is a contiguous sub-block
        # (dim 1 is a major dim), so every (8,128) tile is streamed exactly once;
        # the two chained last-axis sums are VALU accumulate + a small XLU pass.
        d = []
        for k in range(4):
            x = r_ref[:, k, :, :].astype(jnp.float32)          # (tn, H, W)
            s = jnp.sum(x, axis=-1)                            # (tn, H)
            s = jnp.sum(s, axis=-1, keepdims=True)             # (tn, 1)
            d.append(s * inv_hw)
        d0, d1, d2, d3 = d
        p02 = d0 * d2
        p13 = d1 * d3
        return (d0, d1, d2, d3, (d0 + d2) * (d1 + d3), p02, p13, p02 * p13)

    f1 = room_feats(r1_ref)
    f2 = room_feats(r2_ref)

    # First layer + folded eval-mode BatchNorm: 16 rank-1 VPU updates (no MXU).
    wa = wa_ref[...]
    wb = wb_ref[...]
    h = b1_ref[...]                                            # (1, fc) -> broadcasts
    for j in range(8):
        h = h + f1[j] * wa[j:j + 1, :]
        h = h + f2[j] * wb[j:j + 1, :]
    h = jnp.maximum(h, 0.0)                                    # ReLU
    # Dropout(p) is identity at inference time.
    # TODO(synk): training-mode BatchNorm (batch stats) and Dropout not implemented.

    # Second layer (output width 2): VPU multiply + lane reduction instead of MXU.
    w2 = w2_ref[...]
    b2 = b2_ref[...]
    s0 = jnp.sum(h * w2[0:1, :], axis=-1, keepdims=True) + b2[:, 0:1]
    s1 = jnp.sum(h * w2[1:2, :], axis=-1, keepdims=True) + b2[:, 1:2]

    # scores.gather(1, mask): pick column mask[i] for each row.
    s = jnp.where(mask_ref[...] == 1, s1, s0)
    o_ref[...] = jax.nn.sigmoid(s).astype(o_ref.dtype)


def equal_room_size(room1, room2, masks, w1, b1, gamma, beta,
                    running_mean, running_var, w2, b2, *, eps=1e-5, tn=8):
    """room1/room2: (n, 4, H, W); masks: (n,) int (1='bigger'); mlp params per module."""
    n, c, hgt, wdt = room1.shape
    assert c == 4 and room2.shape == room1.shape
    fc = w1.shape[0]
    assert w1.shape == (fc, 24) and w2.shape == (2, fc)

    # Row tile: multiple of the f32 sublane tile (8).  For tiny batches shrink to n
    # (single exact tile, no overhang).  For n % tn != 0 with n > tn, the last room
    # tile overhangs (padded reads, rows discarded) — the big tensors are never
    # copied/padded; only the tiny mask/output arrays get padded.
    tn = max(8, (tn // 8) * 8)
    if n < tn:
        tn = n
    n_tiles = pl.cdiv(n, tn)
    n_pad = n_tiles * tn

    m = masks.reshape(n, 1).astype(jnp.int32)
    if n_pad != n:
        m = jnp.pad(m, ((0, n_pad - n), (0, 0)))

    # Fold eval-mode BatchNorm into the first Linear.
    scale = gamma / jnp.sqrt(running_var + eps)                # (fc,)
    w1_bn = w1 * scale[:, None]                                # (fc, 24)
    b1_bn = scale * (b1 - running_mean) + beta                 # (fc,)
    # Fold cat([f1, f2, f1 - f2]) away: x@W.T = f1@(A+C).T + f2@(B-C).T
    A, B, C = w1_bn[:, 0:8], w1_bn[:, 8:16], w1_bn[:, 16:24]
    wa = (A + C).T.astype(jnp.float32)                         # (8, fc)
    wb = (B - C).T.astype(jnp.float32)                         # (8, fc)
    b1_2d = b1_bn.reshape(1, fc).astype(jnp.float32)
    b2_2d = b2.reshape(1, 2).astype(jnp.float32)

    # VMEM budget: 2 rooms x 2 pipeline buffers x one (tn, 4, H, W) block after
    # (8,128) tile padding of the trailing dims, plus margin for weights/scratch.
    itemsize = jnp.dtype(room1.dtype).itemsize
    blk_bytes = tn * c * (-(-hgt // 8) * 8) * (-(-wdt // 128) * 128) * itemsize
    vmem_bytes = min(max(4 * blk_bytes + (8 << 20), 32 << 20), 112 << 20)

    out = pl.pallas_call(
        _equal_room_size_kernel,
        out_shape=jax.ShapeDtypeStruct((n_pad, 1), jnp.float32),
        grid_spec=pltpu.PrefetchScalarGridSpec(
            num_scalar_prefetch=0,
            grid=(n_tiles,),
            in_specs=[
                pl.BlockSpec((tn, c, hgt, wdt), lambda i: (i, 0, 0, 0)),  # room1
                pl.BlockSpec((tn, c, hgt, wdt), lambda i: (i, 0, 0, 0)),  # room2
                pl.BlockSpec((tn, 1), lambda i: (i, 0)),                  # op masks
                pl.BlockSpec((8, fc), lambda i: (0, 0)),                  # Wa (resident)
                pl.BlockSpec((8, fc), lambda i: (0, 0)),                  # Wb (resident)
                pl.BlockSpec((1, fc), lambda i: (0, 0)),                  # b1 (BN folded)
                pl.BlockSpec((2, fc), lambda i: (0, 0)),                  # W2
                pl.BlockSpec((1, 2), lambda i: (0, 0)),                   # b2
            ],
            out_specs=pl.BlockSpec((tn, 1), lambda i: (i, 0)),
        ),
        compiler_params=pltpu.CompilerParams(
            dimension_semantics=("parallel",),      # shards row tiles across v7x TCs
            vmem_limit_bytes=vmem_bytes,
        ),
    )(room1, room2, m, wa, wb, b1_2d, w2, b2_2d)
    return out.reshape(-1)[:n]


def _reference(room1, room2, masks, w1, b1, gamma, beta, rmean, rvar, w2, b2,
               eps=1e-5):
    def extract(cube):
        dm = cube.reshape(cube.shape[0], 4, -1).astype(jnp.float32).mean(axis=-1)
        d0, d1, d2, d3 = dm[:, 0], dm[:, 1], dm[:, 2], dm[:, 3]
        return jnp.stack(
            [d0, d1, d2, d3, (d0 + d2) * (d1 + d3), d0 * d2, d1 * d3,
             d0 * d1 * d2 * d3], axis=1)
    f1 = extract(room1)
    f2 = extract(room2)
    feats = jnp.concatenate([f1, f2, f1 - f2], axis=1)
    x = feats @ w1.T + b1
    x = gamma * (x - rmean) / jnp.sqrt(rvar + eps) + beta
    h = jax.nn.relu(x)
    scores = h @ w2.T + b2
    sel = jnp.take_along_axis(scores, masks.reshape(-1, 1).astype(jnp.int32), axis=1)
    return jax.nn.sigmoid(sel.reshape(-1))


if __name__ == "__main__":
    # Shapes consistent with the module: (n, 4, 224, 224) depth cubes.
    n, H, W = 2, 224, 224
    input_dim, fc_dim = 8, 32
    key = jax.random.PRNGKey(0)
    ks = jax.random.split(key, 10)

    room1 = jax.random.uniform(ks[0], (n, 4, H, W), dtype=jnp.float32,
                               minval=0.5, maxval=3.0)
    room2 = jax.random.uniform(ks[1], (n, 4, H, W), dtype=jnp.float32,
                               minval=0.5, maxval=3.0)
    ops = ["bigger", "smaller"]
    masks = jnp.array([1 if op == "bigger" else 0 for op in ops], dtype=jnp.int32)

    # Deterministic parameters: Linear(24->fc), BatchNorm1d(fc) eval stats, Linear(fc->2).
    w1 = 0.1 * jax.random.normal(ks[2], (fc_dim, 3 * input_dim), dtype=jnp.float32)
    b1 = 0.1 * jax.random.normal(ks[3], (fc_dim,), dtype=jnp.float32)
    gamma = 1.0 + 0.1 * jax.random.normal(ks[4], (fc_dim,), dtype=jnp.float32)
    beta = 0.1 * jax.random.normal(ks[5], (fc_dim,), dtype=jnp.float32)
    running_mean = 0.1 * jax.random.normal(ks[6], (fc_dim,), dtype=jnp.float32)
    running_var = jax.random.uniform(ks[7], (fc_dim,), dtype=jnp.float32,
                                     minval=0.5, maxval=1.5)
    w2 = 0.1 * jax.random.normal(ks[8], (2, fc_dim), dtype=jnp.float32)
    b2 = 0.1 * jax.random.normal(ks[9], (2,), dtype=jnp.float32)

    out = equal_room_size(room1, room2, masks, w1, b1, gamma, beta,
                          running_mean, running_var, w2, b2)
    jax.block_until_ready(out)

    ref = _reference(room1, room2, masks, w1, b1, gamma, beta,
                     running_mean, running_var, w2, b2)
    assert out.shape == (n,)
    assert jnp.allclose(out, ref, atol=2e-5, rtol=1e-3), (out, ref)
    print("KERNEL_OK")
</pallas_src>

<mosaic_0001>
module attributes {stable_mosaic.version = 11 : i64} {
  func.func @_equal_room_size_kernel(%arg0: i32, %arg1: memref<2x4x224x224xf32, #tpu.memory_space<vmem>>, %arg2: memref<2x4x224x224xf32, #tpu.memory_space<vmem>>, %arg3: memref<2x1xi32, #tpu.memory_space<vmem>>, %arg4: memref<8x32xf32, #tpu.memory_space<vmem>>, %arg5: memref<8x32xf32, #tpu.memory_space<vmem>>, %arg6: memref<1x32xf32, #tpu.memory_space<vmem>>, %arg7: memref<2x32xf32, #tpu.memory_space<vmem>>, %arg8: memref<1x2xf32, #tpu.memory_space<vmem>>, %arg9: memref<2x1xf32, #tpu.memory_space<vmem>>) attributes {dimension_semantics = [#tpu.dimension_semantics<parallel>], iteration_bounds = array<i64: 1>, scalar_prefetch = 0 : i64, scratch_operands = 0 : i64, tpu.core_type = #tpu.core_type<tc>, window_params = [{transform_indices = @transform_0, window_bounds = array<i64: 2, 4, 224, 224>}, {transform_indices = @transform_1, window_bounds = array<i64: 2, 4, 224, 224>}, {transform_indices = @transform_2, window_bounds = array<i64: 2, 1>}, {pipeline_mode = #tpu.pipeline_mode<synchronous>, transform_indices = @transform_3, window_bounds = array<i64: 8, 32>}, {pipeline_mode = #tpu.pipeline_mode<synchronous>, transform_indices = @transform_4, window_bounds = array<i64: 8, 32>}, {pipeline_mode = #tpu.pipeline_mode<synchronous>, transform_indices = @transform_5, window_bounds = array<i64: 1, 32>}, {pipeline_mode = #tpu.pipeline_mode<synchronous>, transform_indices = @transform_6, window_bounds = array<i64: 2, 32>}, {pipeline_mode = #tpu.pipeline_mode<synchronous>, transform_indices = @transform_7, window_bounds = array<i64: 1, 2>}, {transform_indices = @transform_8, window_bounds = array<i64: 2, 1>}]} {
    %c0 = arith.constant 0 : index
    %c0_0 = arith.constant 0 : index
    %c0_1 = arith.constant 0 : index
    %c0_2 = arith.constant 0 : index
    %0 = vector.load %arg1[%c0, %c0_0, %c0_1, %c0_2] : memref<2x4x224x224xf32, #tpu.memory_space<vmem>>, vector<2x1x224x224xf32>
    %1 = vector.shape_cast %0 : vector<2x1x224x224xf32> to vector<2x224x224xf32>
    %cst = arith.constant dense<0.000000e+00> : vector<2x224xf32>
    %2 = vector.multi_reduction <add>, %1, %cst [2] : vector<2x224x224xf32> to vector<2x224xf32>
    %cst_3 = arith.constant dense<0.000000e+00> : vector<2xf32>
    %3 = vector.multi_reduction <add>, %2, %cst_3 [1] : vector<2x224xf32> to vector<2xf32>
    %4 = vector.shape_cast %3 : vector<2xf32> to vector<2x1xf32>
    %cst_4 = arith.constant 1.99298465E-5 : f32
    %5 = vector.broadcast %cst_4 : f32 to vector<2x1xf32>
    %6 = arith.mulf %4, %5 : vector<2x1xf32>
    %c0_5 = arith.constant 0 : index
    %c1 = arith.constant 1 : index
    %c0_6 = arith.constant 0 : index
    %c0_7 = arith.constant 0 : index
    %7 = vector.load %arg1[%c0_5, %c1, %c0_6, %c0_7] : memref<2x4x224x224xf32, #tpu.memory_space<vmem>>, vector<2x1x224x224xf32>
    %8 = vector.shape_cast %7 : vector<2x1x224x224xf32> to vector<2x224x224xf32>
    %cst_8 = arith.constant dense<0.000000e+00> : vector<2x224xf32>
    %9 = vector.multi_reduction <add>, %8, %cst_8 [2] : vector<2x224x224xf32> to vector<2x224xf32>
    %cst_9 = arith.constant dense<0.000000e+00> : vector<2xf32>
    %10 = vector.multi_reduction <add>, %9, %cst_9 [1] : vector<2x224xf32> to vector<2xf32>
    %11 = vector.shape_cast %10 : vector<2xf32> to vector<2x1xf32>
    %cst_10 = arith.constant 1.99298465E-5 : f32
    %12 = vector.broadcast %cst_10 : f32 to vector<2x1xf32>
    %13 = arith.mulf %11, %12 : vector<2x1xf32>
    %c0_11 = arith.constant 0 : index
    %c2 = arith.constant 2 : index
    %c0_12 = arith.constant 0 : index
    %c0_13 = arith.constant 0 : index
    %14 = vector.load %arg1[%c0_11, %c2, %c0_12, %c0_13] : memref<2x4x224x224xf32, #tpu.memory_space<vmem>>, vector<2x1x224x224xf32>
    %15 = vector.shape_cast %14 : vector<2x1x224x224xf32> to vector<2x224x224xf32>
    %cst_14 = arith.constant dense<0.000000e+00> : vector<2x224xf32>
    %16 = vector.multi_reduction <add>, %15, %cst_14 [2] : vector<2x224x224xf32> to vector<2x224xf32>
    %cst_15 = arith.constant dense<0.000000e+00> : vector<2xf32>
    %17 = vector.multi_reduction <add>, %16, %cst_15 [1] : vector<2x224xf32> to vector<2xf32>
    %18 = vector.shape_cast %17 : vector<2xf32> to vector<2x1xf32>
    %cst_16 = arith.constant 1.99298465E-5 : f32
    %19 = vector.broadcast %cst_16 : f32 to vector<2x1xf32>
    %20 = arith.mulf %18, %19 : vector<2x1xf32>
    %c0_17 = arith.constant 0 : index
    %c3 = arith.constant 3 : index
    %c0_18 = arith.constant 0 : index
    %c0_19 = arith.constant 0 : index
    %21 = vector.load %arg1[%c0_17, %c3, %c0_18, %c0_19] : memref<2x4x224x224xf32, #tpu.memory_space<vmem>>, vector<2x1x224x224xf32>
    %22 = vector.shape_cast %21 : vector<2x1x224x224xf32> to vector<2x224x224xf32>
    %cst_20 = arith.constant dense<0.000000e+00> : vector<2x224xf32>
    %23 = vector.multi_reduction <add>, %22, %cst_20 [2] : vector<2x224x224xf32> to vector<2x224xf32>
    %cst_21 = arith.constant dense<0.000000e+00> : vector<2xf32>
    %24 = vector.multi_reduction <add>, %23, %cst_21 [1] : vector<2x224xf32> to vector<2xf32>
    %25 = vector.shape_cast %24 : vector<2xf32> to vector<2x1xf32>
    %cst_22 = arith.constant 1.99298465E-5 : f32
    %26 = vector.broadcast %cst_22 : f32 to vector<2x1xf32>
    %27 = arith.mulf %25, %26 : vector<2x1xf32>
    %28 = arith.mulf %6, %20 : vector<2x1xf32>
    %29 = arith.mulf %13, %27 : vector<2x1xf32>
    %30 = arith.addf %6, %20 : vector<2x1xf32>
    %31 = arith.addf %13, %27 : vector<2x1xf32>
    %32 = arith.mulf %30, %31 : vector<2x1xf32>
    %33 = arith.mulf %28, %29 : vector<2x1xf32>
    %c0_23 = arith.constant 0 : index
    %c0_24 = arith.constant 0 : index
    %c0_25 = arith.constant 0 : index
    %c0_26 = arith.constant 0 : index
    %34 = vector.load %arg2[%c0_23, %c0_24, %c0_25, %c0_26] : memref<2x4x224x224xf32, #tpu.memory_space<vmem>>, vector<2x1x224x224xf32>
    %35 = vector.shape_cast %34 : vector<2x1x224x224xf32> to vector<2x224x224xf32>
    %cst_27 = arith.constant dense<0.000000e+00> : vector<2x224xf32>
    %36 = vector.multi_reduction <add>, %35, %cst_27 [2] : vector<2x224x224xf32> to vector<2x224xf32>
    %cst_28 = arith.constant dense<0.000000e+00> : vector<2xf32>
    %37 = vector.multi_reduction <add>, %36, %cst_28 [1] : vector<2x224xf32> to vector<2xf32>
    %38 = vector.shape_cast %37 : vector<2xf32> to vector<2x1xf32>
    %cst_29 = arith.constant 1.99298465E-5 : f32
    %39 = vector.broadcast %cst_29 : f32 to vector<2x1xf32>
    %40 = arith.mulf %38, %39 : vector<2x1xf32>
    %c0_30 = arith.constant 0 : index
    %c1_31 = arith.constant 1 : index
    %c0_32 = arith.constant 0 : index
    %c0_33 = arith.constant 0 : index
    %41 = vector.load %arg2[%c0_30, %c1_31, %c0_32, %c0_33] : memref<2x4x224x224xf32, #tpu.memory_space<vmem>>, vector<2x1x224x224xf32>
    %42 = vector.shape_cast %41 : vector<2x1x224x224xf32> to vector<2x224x224xf32>
    %cst_34 = arith.constant dense<0.000000e+00> : vector<2x224xf32>
    %43 = vector.multi_reduction <add>, %42, %cst_34 [2] : vector<2x224x224xf32> to vector<2x224xf32>
    %cst_35 = arith.constant dense<0.000000e+00> : vector<2xf32>
    %44 = vector.multi_reduction <add>, %43, %cst_35 [1] : vector<2x224xf32> to vector<2xf32>
    %45 = vector.shape_cast %44 : vector<2xf32> to vector<2x1xf32>
    %cst_36 = arith.constant 1.99298465E-5 : f32
    %46 = vector.broadcast %cst_36 : f32 to vector<2x1xf32>
    %47 = arith.mulf %45, %46 : vector<2x1xf32>
    %c0_37 = arith.constant 0 : index
    %c2_38 = arith.constant 2 : index
    %c0_39 = arith.constant 0 : index
    %c0_40 = arith.constant 0 : index
    %48 = vector.load %arg2[%c0_37, %c2_38, %c0_39, %c0_40] : memref<2x4x224x224xf32, #tpu.memory_space<vmem>>, vector<2x1x224x224xf32>
    %49 = vector.shape_cast %48 : vector<2x1x224x224xf32> to vector<2x224x224xf32>
    %cst_41 = arith.constant dense<0.000000e+00> : vector<2x224xf32>
    %50 = vector.multi_reduction <add>, %49, %cst_41 [2] : vector<2x224x224xf32> to vector<2x224xf32>
    %cst_42 = arith.constant dense<0.000000e+00> : vector<2xf32>
    %51 = vector.multi_reduction <add>, %50, %cst_42 [1] : vector<2x224xf32> to vector<2xf32>
    %52 = vector.shape_cast %51 : vector<2xf32> to vector<2x1xf32>
    %cst_43 = arith.constant 1.99298465E-5 : f32
    %53 = vector.broadcast %cst_43 : f32 to vector<2x1xf32>
    %54 = arith.mulf %52, %53 : vector<2x1xf32>
    %c0_44 = arith.constant 0 : index
    %c3_45 = arith.constant 3 : index
    %c0_46 = arith.constant 0 : index
    %c0_47 = arith.constant 0 : index
    %55 = vector.load %arg2[%c0_44, %c3_45, %c0_46, %c0_47] : memref<2x4x224x224xf32, #tpu.memory_space<vmem>>, vector<2x1x224x224xf32>
    %56 = vector.shape_cast %55 : vector<2x1x224x224xf32> to vector<2x224x224xf32>
    %cst_48 = arith.constant dense<0.000000e+00> : vector<2x224xf32>
    %57 = vector.multi_reduction <add>, %56, %cst_48 [2] : vector<2x224x224xf32> to vector<2x224xf32>
    %cst_49 = arith.constant dense<0.000000e+00> : vector<2xf32>
    %58 = vector.multi_reduction <add>, %57, %cst_49 [1] : vector<2x224xf32> to vector<2xf32>
    %59 = vector.shape_cast %58 : vector<2xf32> to vector<2x1xf32>
    %cst_50 = arith.constant 1.99298465E-5 : f32
    %60 = vector.broadcast %cst_50 : f32 to vector<2x1xf32>
    %61 = arith.mulf %59, %60 : vector<2x1xf32>
    %62 = arith.mulf %40, %54 : vector<2x1xf32>
    %63 = arith.mulf %47, %61 : vector<2x1xf32>
    %64 = arith.addf %40, %54 : vector<2x1xf32>
    %65 = arith.addf %47, %61 : vector<2x1xf32>
    %66 = arith.mulf %64, %65 : vector<2x1xf32>
    %67 = arith.mulf %62, %63 : vector<2x1xf32>
    %c0_51 = arith.constant 0 : index
    %c0_52 = arith.constant 0 : index
    %68 = vector.load %arg4[%c0_51, %c0_52] : memref<8x32xf32, #tpu.memory_space<vmem>>, vector<8x32xf32>
    %c0_53 = arith.constant 0 : index
    %c0_54 = arith.constant 0 : index
    %69 = vector.load %arg5[%c0_53, %c0_54] : memref<8x32xf32, #tpu.memory_space<vmem>>, vector<8x32xf32>
    %c0_55 = arith.constant 0 : index
    %c0_56 = arith.constant 0 : index
    %70 = vector.load %arg6[%c0_55, %c0_56] : memref<1x32xf32, #tpu.memory_space<vmem>>, vector<1x32xf32>
    %71 = vector.extract_strided_slice %68 {offsets = [0, 0], sizes = [1, 32], strides = [1, 1]} : vector<8x32xf32> to vector<1x32xf32>
    %72 = vector.broadcast %6 : vector<2x1xf32> to vector<2x32xf32>
    %73 = vector.broadcast %71 : vector<1x32xf32> to vector<2x32xf32>
    %74 = arith.mulf %72, %73 : vector<2x32xf32>
    %75 = vector.broadcast %70 : vector<1x32xf32> to vector<2x32xf32>
    %76 = arith.addf %75, %74 : vector<2x32xf32>
    %77 = vector.extract_strided_slice %69 {offsets = [0, 0], sizes = [1, 32], strides = [1, 1]} : vector<8x32xf32> to vector<1x32xf32>
    %78 = vector.broadcast %40 : vector<2x1xf32> to vector<2x32xf32>
    %79 = vector.broadcast %77 : vector<1x32xf32> to vector<2x32xf32>
    %80 = arith.mulf %78, %79 : vector<2x32xf32>
    %81 = arith.addf %76, %80 : vector<2x32xf32>
    %82 = vector.extract_strided_slice %68 {offsets = [1, 0], sizes = [1, 32], strides = [1, 1]} : vector<8x32xf32> to vector<1x32xf32>
    %83 = vector.broadcast %13 : vector<2x1xf32> to vector<2x32xf32>
    %84 = vector.broadcast %82 : vector<1x32xf32> to vector<2x32xf32>
    %85 = arith.mulf %83, %84 : vector<2x32xf32>
    %86 = arith.addf %81, %85 : vector<2x32xf32>
    %87 = vector.extract_strided_slice %69 {offsets = [1, 0], sizes = [1, 32], strides = [1, 1]} : vector<8x32xf32> to vector<1x32xf32>
    %88 = vector.broadcast %47 : vector<2x1xf32> to vector<2x32xf32>
    %89 = vector.broadcast %87 : vector<1x32xf32> to vector<2x32xf32>
    %90 = arith.mulf %88, %89 : vector<2x32xf32>
    %91 = arith.addf %86, %90 : vector<2x32xf32>
    %92 = vector.extract_strided_slice %68 {offsets = [2, 0], sizes = [1, 32], strides = [1, 1]} : vector<8x32xf32> to vector<1x32xf32>
    %93 = vector.broadcast %20 : vector<2x1xf32> to vector<2x32xf32>
    %94 = vector.broadcast %92 : vector<1x32xf32> to vector<2x32xf32>
    %95 = arith.mulf %93, %94 : vector<2x32xf32>
    %96 = arith.addf %91, %95 : vector<2x32xf32>
    %97 = vector.extract_strided_slice %69 {offsets = [2, 0], sizes = [1, 32], strides = [1, 1]} : vector<8x32xf32> to vector<1x32xf32>
    %98 = vector.broadcast %54 : vector<2x1xf32> to vector<2x32xf32>
    %99 = vector.broadcast %97 : vector<1x32xf32> to vector<2x32xf32>
    %100 = arith.mulf %98, %99 : vector<2x32xf32>
    %101 = arith.addf %96, %100 : vector<2x32xf32>
    %102 = vector.extract_strided_slice %68 {offsets = [3, 0], sizes = [1, 32], strides = [1, 1]} : vector<8x32xf32> to vector<1x32xf32>
    %103 = vector.broadcast %27 : vector<2x1xf32> to vector<2x32xf32>
    %104 = vector.broadcast %102 : vector<1x32xf32> to vector<2x32xf32>
    %105 = arith.mulf %103, %104 : vector<2x32xf32>
    %106 = arith.addf %101, %105 : vector<2x32xf32>
    %107 = vector.extract_strided_slice %69 {offsets = [3, 0], sizes = [1, 32], strides = [1, 1]} : vector<8x32xf32> to vector<1x32xf32>
    %108 = vector.broadcast %61 : vector<2x1xf32> to vector<2x32xf32>
    %109 = vector.broadcast %107 : vector<1x32xf32> to vector<2x32xf32>
    %110 = arith.mulf %108, %109 : vector<2x32xf32>
    %111 = arith.addf %106, %110 : vector<2x32xf32>
    %112 = vector.extract_strided_slice %68 {offsets = [4, 0], sizes = [1, 32], strides = [1, 1]} : vector<8x32xf32> to vector<1x32xf32>
    %113 = vector.broadcast %32 : vector<2x1xf32> to vector<2x32xf32>
    %114 = vector.broadcast %112 : vector<1x32xf32> to vector<2x32xf32>
    %115 = arith.mulf %113, %114 : vector<2x32xf32>
    %116 = arith.addf %111, %115 : vector<2x32xf32>
    %117 = vector.extract_strided_slice %69 {offsets = [4, 0], sizes = [1, 32], strides = [1, 1]} : vector<8x32xf32> to vector<1x32xf32>
    %118 = vector.broadcast %66 : vector<2x1xf32> to vector<2x32xf32>
    %119 = vector.broadcast %117 : vector<1x32xf32> to vector<2x32xf32>
    %120 = arith.mulf %118, %119 : vector<2x32xf32>
    %121 = arith.addf %116, %120 : vector<2x32xf32>
    %122 = vector.extract_strided_slice %68 {offsets = [5, 0], sizes = [1, 32], strides = [1, 1]} : vector<8x32xf32> to vector<1x32xf32>
    %123 = vector.broadcast %28 : vector<2x1xf32> to vector<2x32xf32>
    %124 = vector.broadcast %122 : vector<1x32xf32> to vector<2x32xf32>
    %125 = arith.mulf %123, %124 : vector<2x32xf32>
    %126 = arith.addf %121, %125 : vector<2x32xf32>
    %127 = vector.extract_strided_slice %69 {offsets = [5, 0], sizes = [1, 32], strides = [1, 1]} : vector<8x32xf32> to vector<1x32xf32>
    %128 = vector.broadcast %62 : vector<2x1xf32> to vector<2x32xf32>
    %129 = vector.broadcast %127 : vector<1x32xf32> to vector<2x32xf32>
    %130 = arith.mulf %128, %129 : vector<2x32xf32>
    %131 = arith.addf %126, %130 : vector<2x32xf32>
    %132 = vector.extract_strided_slice %68 {offsets = [6, 0], sizes = [1, 32], strides = [1, 1]} : vector<8x32xf32> to vector<1x32xf32>
    %133 = vector.broadcast %29 : vector<2x1xf32> to vector<2x32xf32>
    %134 = vector.broadcast %132 : vector<1x32xf32> to vector<2x32xf32>
    %135 = arith.mulf %133, %134 : vector<2x32xf32>
    %136 = arith.addf %131, %135 : vector<2x32xf32>
    %137 = vector.extract_strided_slice %69 {offsets = [6, 0], sizes = [1, 32], strides = [1, 1]} : vector<8x32xf32> to vector<1x32xf32>
    %138 = vector.broadcast %63 : vector<2x1xf32> to vector<2x32xf32>
    %139 = vector.broadcast %137 : vector<1x32xf32> to vector<2x32xf32>
    %140 = arith.mulf %138, %139 : vector<2x32xf32>
    %141 = arith.addf %136, %140 : vector<2x32xf32>
    %142 = vector.extract_strided_slice %68 {offsets = [7, 0], sizes = [1, 32], strides = [1, 1]} : vector<8x32xf32> to vector<1x32xf32>
    %143 = vector.broadcast %33 : vector<2x1xf32> to vector<2x32xf32>
    %144 = vector.broadcast %142 : vector<1x32xf32> to vector<2x32xf32>
    %145 = arith.mulf %143, %144 : vector<2x32xf32>
    %146 = arith.addf %141, %145 : vector<2x32xf32>
    %147 = vector.extract_strided_slice %69 {offsets = [7, 0], sizes = [1, 32], strides = [1, 1]} : vector<8x32xf32> to vector<1x32xf32>
    %148 = vector.broadcast %67 : vector<2x1xf32> to vector<2x32xf32>
    %149 = vector.broadcast %147 : vector<1x32xf32> to vector<2x32xf32>
    %150 = arith.mulf %148, %149 : vector<2x32xf32>
    %151 = arith.addf %146, %150 : vector<2x32xf32>
    %cst_57 = arith.constant 0.000000e+00 : f32
    %152 = vector.broadcast %cst_57 : f32 to vector<2x32xf32>
    %153 = arith.maximumf %151, %152 : vector<2x32xf32>
    %c0_58 = arith.constant 0 : index
    %c0_59 = arith.constant 0 : index
    %154 = vector.load %arg7[%c0_58, %c0_59] : memref<2x32xf32, #tpu.memory_space<vmem>>, vector<2x32xf32>
    %c0_60 = arith.constant 0 : index
    %c0_61 = arith.constant 0 : index
    %155 = vector.load %arg8[%c0_60, %c0_61] : memref<1x2xf32, #tpu.memory_space<vmem>>, vector<1x2xf32>
    %156 = vector.extract_strided_slice %154 {offsets = [0, 0], sizes = [1, 32], strides = [1, 1]} : vector<2x32xf32> to vector<1x32xf32>
    %157 = vector.broadcast %156 : vector<1x32xf32> to vector<2x32xf32>
    %158 = arith.mulf %153, %157 : vector<2x32xf32>
    %cst_62 = arith.constant dense<0.000000e+00> : vector<2xf32>
    %159 = vector.multi_reduction <add>, %158, %cst_62 [1] : vector<2x32xf32> to vector<2xf32>
    %160 = vector.shape_cast %159 : vector<2xf32> to vector<2x1xf32>
    %161 = vector.extract_strided_slice %155 {offsets = [0, 0], sizes = [1, 1], strides = [1, 1]} : vector<1x2xf32> to vector<1x1xf32>
    %162 = vector.broadcast %161 : vector<1x1xf32> to vector<2x1xf32>
    %163 = arith.addf %160, %162 : vector<2x1xf32>
    %164 = vector.extract_strided_slice %154 {offsets = [1, 0], sizes = [1, 32], strides = [1, 1]} : vector<2x32xf32> to vector<1x32xf32>
    %165 = vector.broadcast %164 : vector<1x32xf32> to vector<2x32xf32>
    %166 = arith.mulf %153, %165 : vector<2x32xf32>
    %cst_63 = arith.constant dense<0.000000e+00> : vector<2xf32>
    %167 = vector.multi_reduction <add>, %166, %cst_63 [1] : vector<2x32xf32> to vector<2xf32>
    %168 = vector.shape_cast %167 : vector<2xf32> to vector<2x1xf32>
    %169 = vector.extract_strided_slice %155 {offsets = [0, 1], sizes = [1, 1], strides = [1, 1]} : vector<1x2xf32> to vector<1x1xf32>
    %170 = vector.broadcast %169 : vector<1x1xf32> to vector<2x1xf32>
    %171 = arith.addf %168, %170 : vector<2x1xf32>
    %c0_64 = arith.constant 0 : index
    %c0_65 = arith.constant 0 : index
    %172 = vector.load %arg3[%c0_64, %c0_65] : memref<2x1xi32, #tpu.memory_space<vmem>>, vector<2x1xi32>
    %c1_i32 = arith.constant 1 : i32
    %173 = vector.broadcast %c1_i32 : i32 to vector<2x1xi32>
    %174 = arith.cmpi eq, %172, %173 : vector<2x1xi32>
    %175 = arith.select %174, %171, %163 : vector<2x1xi1>, vector<2x1xf32>
    %176 = arith.negf %175 : vector<2x1xf32>
    %177 = math.exp %176 : vector<2x1xf32>
    %cst_66 = arith.constant 1.000000e+00 : f32
    %178 = vector.broadcast %cst_66 : f32 to vector<2x1xf32>
    %179 = arith.addf %178, %177 : vector<2x1xf32>
    %180 = arith.divf %178, %179 : vector<2x1xf32>
    %c0_67 = arith.constant 0 : index
    %c0_68 = arith.constant 0 : index
    %181 = vector.load %arg9[%c0_67, %c0_68] : memref<2x1xf32, #tpu.memory_space<vmem>>, vector<2x1xf32>
    tpu.vector_store %arg9[%c0_67, %c0_68], %180 {strides = array<i32>} : memref<2x1xf32, #tpu.memory_space<vmem>>, vector<2x1xf32>,
    return
  }
  func.func @transform_0(%arg0: i32) -> (i32, i32, i32, i32) {
    %c0_i32 = arith.constant 0 : i32
    %c0_i32_0 = arith.constant 0 : i32
    %c0_i32_1 = arith.constant 0 : i32
    %c0_i32_2 = arith.constant 0 : i32
    return %arg0, %c0_i32, %c0_i32_0, %c0_i32_1 : i32, i32, i32, i32
  }
  func.func @transform_1(%arg0: i32) -> (i32, i32, i32, i32) {
    %c0_i32 = arith.constant 0 : i32
    %c0_i32_0 = arith.constant 0 : i32
    %c0_i32_1 = arith.constant 0 : i32
    %c0_i32_2 = arith.constant 0 : i32
    return %arg0, %c0_i32, %c0_i32_0, %c0_i32_1 : i32, i32, i32, i32
  }
  func.func @transform_2(%arg0: i32) -> (i32, i32) {
    %c0_i32 = arith.constant 0 : i32
    %c0_i32_0 = arith.constant 0 : i32
    return %arg0, %c0_i32 : i32, i32
  }
  func.func @transform_3(%arg0: i32) -> (i32, i32) {
    %c0_i32 = arith.constant 0 : i32
    %c0_i32_0 = arith.constant 0 : i32
    %c0_i32_1 = arith.constant 0 : i32
    return %c0_i32, %c0_i32_0 : i32, i32
  }
  func.func @transform_4(%arg0: i32) -> (i32, i32) {
    %c0_i32 = arith.constant 0 : i32
    %c0_i32_0 = arith.constant 0 : i32
    %c0_i32_1 = arith.constant 0 : i32
    return %c0_i32, %c0_i32_0 : i32, i32
  }
  func.func @transform_5(%arg0: i32) -> (i32, i32) {
    %c0_i32 = arith.constant 0 : i32
    %c0_i32_0 = arith.constant 0 : i32
    %c0_i32_1 = arith.constant 0 : i32
    return %c0_i32, %c0_i32_0 : i32, i32
  }
  func.func @transform_6(%arg0: i32) -> (i32, i32) {
    %c0_i32 = arith.constant 0 : i32
    %c0_i32_0 = arith.constant 0 : i32
    %c0_i32_1 = arith.constant 0 : i32
    return %c0_i32, %c0_i32_0 : i32, i32
  }
  func.func @transform_7(%arg0: i32) -> (i32, i32) {
    %c0_i32 = arith.constant 0 : i32
    %c0_i32_0 = arith.constant 0 : i32
    %c0_i32_1 = arith.constant 0 : i32
    return %c0_i32, %c0_i32_0 : i32, i32
  }
  func.func @transform_8(%arg0: i32) -> (i32, i32) {
    %c0_i32 = arith.constant 0 : i32
    %c0_i32_0 = arith.constant 0 : i32
    return %arg0, %c0_i32 : i32, i32
  }
}

</mosaic_0001>

<llo_original>
// kernel: tpu_custom_call.1
$region0: #{tpu_custom_call.1}
  #allocation0 [shape = 'u32[]', space=smem, size = 0x4, offset = 0x4, fixed_abs, tag = 'smem constant byte address 0x4 - core index']
  #allocation1 [shape = 'u32[144,128]{1,0:T(1,128)}', space=vmem, size = 0x12000, scoped, tag = 'internal scratch']
  %s0 = inlined_call_operand.hbm [shape: f32[2,4,224,224], index: 0, kind: input, shape index: {}]
  %s1 = inlined_call_operand.hbm [shape: f32[2,4,224,224], index: 1, kind: input, shape index: {}]
  %s2 = inlined_call_operand.vmem [shape: s32[2,1], index: 2, kind: input, shape index: {}]
  %s3 = inlined_call_operand.hbm [shape: f32[8,32], index: 3, kind: input, shape index: {}]
  %s4 = inlined_call_operand.hbm [shape: f32[8,32], index: 4, kind: input, shape index: {}]
  %s5 = inlined_call_operand.hbm [shape: f32[1,32], index: 5, kind: input, shape index: {}]
  %s6 = inlined_call_operand.hbm [shape: f32[2,32], index: 6, kind: input, shape index: {}]
  %s7 = inlined_call_operand.hbm [shape: f32[1,2], index: 7, kind: input, shape index: {}]
  %s8 = inlined_call_operand.vmem [shape: f32[2,1], index: 8, kind: output, shape index: {}]
  %s9 = sld [smem:[#allocation0]]
  $region70: #{tpu_custom_call.1} parent=0
    _
  %s11 = ssub.s32 1, %s9
  %s12 = scalar_select 0, %s11, %s9
  $region1: #{tpu_custom_call.1} parent=0
    #allocation2 [shape = 'u8[1835008]{0}', space=vmem, size = 0x1c0000, scoped, tag = 'input window, operand 0, single buffered']
    #allocation3 [shape = 's32[1]{0}', space=sflag, size = 0x4, scoped, tag = 'scoped memory for tpu_custom_call.1']
    #allocation4 [shape = 'u8[1835008]{0}', space=vmem, size = 0x1c0000, scoped, tag = 'input window, operand 1, single buffered']
    #allocation5 [shape = 's32[1]{0}', space=sflag, size = 0x4, scoped, tag = 'scoped memory for tpu_custom_call.1']
    #allocation6 [shape = 'u8[4096]{0}', space=vmem, size = 0x1000, scoped, tag = 'input window, operand 3, single buffered']
    #allocation7 [shape = 'u8[4096]{0}', space=vmem, size = 0x1000, scoped, tag = 'input window, operand 4, single buffered']
    #allocation8 [shape = 's32[1]{0}', space=sflag, size = 0x4, scoped, tag = 'scoped memory for tpu_custom_call.1']
    #allocation9 [shape = 'u8[512]{0}', space=vmem, size = 0x400, scoped, tag = 'input window, operand 5, single buffered']
    #allocation10 [shape = 'u8[1024]{0}', space=vmem, size = 0x400, scoped, tag = 'input window, operand 6, single buffered']
    #allocation11 [shape = 's32[1]{0}', space=sflag, size = 0x4, scoped, tag = 'scoped memory for tpu_custom_call.1']
    #allocation12 [shape = 'u8[512]{0}', space=vmem, size = 0x400, scoped, tag = 'input window, operand 7, single buffered']
    %13 = vsyncpa [#allocation3], 0
    %14 = vsyncpa [#allocation5], 0
    %15 = vsyncpa [#allocation8], 0
    %16 = vsyncpa [#allocation11], 0
    // Predicated region
    $region2: #{tpu_custom_call.1} parent=1 // pred_check
      _
    $region3: #{tpu_custom_call.1} parent=1 // pred_check_branch
      %18 = sbr.rel (0) target = $region5
    $region4: #{tpu_custom_call.1} parent=1 // pred_region
      %s20 = ssub.s32 57344, 57344
      %21 = vsyncadd [#allocation3], %s20
      %s22 = sshll.u32 [#allocation2], 4
      %s23 = int_to_ptr.vmem [resolvable:$true] %s22
      %28 = dma.hbm_to_vmem [thread:$0]  %s0, 57344, %s23, [#allocation3], 256, 256, 16
    $region5: #{tpu_custom_call.1} parent=1 // pred_fallthru
      _
    // Predicated region
    $region6: #{tpu_custom_call.1} parent=1 // pred_check
      _
    $region7: #{tpu_custom_call.1} parent=1 // pred_check_branch
      %30 = sbr.rel (0) target = $region9
    $region8: #{tpu_custom_call.1} parent=1 // pred_region
      %s32 = ssub.s32 57344, 57344
      %33 = vsyncadd [#allocation5], %s32
      %s34 = sshll.u32 [#allocation4], 4
      %s35 = int_to_ptr.vmem [resolvable:$true] %s34
      %40 = dma.hbm_to_vmem [thread:$0]  %s1, 57344, %s35, [#allocation5], 256, 256, 16
    $region9: #{tpu_custom_call.1} parent=1 // pred_fallthru
      _
    // Predicated region
    $region10: #{tpu_custom_call.1} parent=1 // pred_check
      _
    $region11: #{tpu_custom_call.1} parent=1 // pred_check_branch
      %42 = sbr.rel (0) target = $region13
    $region12: #{tpu_custom_call.1} parent=1 // pred_region
      _
    $region13: #{tpu_custom_call.1} parent=1 // pred_fallthru
      _
    // Predicated region
    $region14: #{tpu_custom_call.1} parent=1 // pred_check
      _
    $region15: #{tpu_custom_call.1} parent=1 // pred_check_branch
      %44 = sbr.rel (0) target = $region17
    $region16: #{tpu_custom_call.1} parent=1 // pred_region
      %s46 = ssub.s32 128, 128
      %47 = vsyncadd [#allocation5], %s46
      %s49 = sshll.u32 [#allocation6], 4
      %s50 = int_to_ptr.vmem [resolvable:$true] %s49
      %52 = dma.hbm_to_vmem [thread:$0]  %s3, 128, %s50, [#allocation5]
    $region17: #{tpu_custom_call.1} parent=1 // pred_fallthru
      _
    // Predicated region
    $region18: #{tpu_custom_call.1} parent=1 // pred_check
      _
    $region19: #{tpu_custom_call.1} parent=1 // pred_check_branch
      %54 = sbr.rel (0) target = $region21
    $region20: #{tpu_custom_call.1} parent=1 // pred_region
      %s56 = ssub.s32 128, 128
      %57 = vsyncadd [#allocation8], %s56
      %s59 = sshll.u32 [#allocation7], 4
      %s60 = int_to_ptr.vmem [resolvable:$true] %s59
      %62 = dma.hbm_to_vmem [thread:$0]  %s4, 128, %s60, [#allocation8]
    $region21: #{tpu_custom_call.1} parent=1 // pred_fallthru
      _
    // Predicated region
    $region22: #{tpu_custom_call.1} parent=1 // pred_check
      _
    $region23: #{tpu_custom_call.1} parent=1 // pred_check_branch
      %64 = sbr.rel (0) target = $region25
    $region24: #{tpu_custom_call.1} parent=1 // pred_region
      %s66 = ssub.s32 16, 16
      %67 = vsyncadd [#allocation8], %s66
      %s69 = sshll.u32 [#allocation9], 4
      %s70 = int_to_ptr.vmem [resolvable:$true] %s69
      %72 = dma.hbm_to_vmem [thread:$0]  %s5, 16, %s70, [#allocation8]
    $region25: #{tpu_custom_call.1} parent=1 // pred_fallthru
      _
    // Predicated region
    $region26: #{tpu_custom_call.1} parent=1 // pred_check
      _
    $region27: #{tpu_custom_call.1} parent=1 // pred_check_branch
      %74 = sbr.rel (0) target = $region29
    $region28: #{tpu_custom_call.1} parent=1 // pred_region
      %s76 = ssub.s32 32, 32
      %77 = vsyncadd [#allocation11], %s76
      %s79 = sshll.u32 [#allocation10], 4
      %s80 = int_to_ptr.vmem [resolvable:$true] %s79
      %82 = dma.hbm_to_vmem [thread:$0]  %s6, 32, %s80, [#allocation11]
    $region29: #{tpu_custom_call.1} parent=1 // pred_fallthru
      _
    // Predicated region
    $region30: #{tpu_custom_call.1} parent=1 // pred_check
      _
    $region31: #{tpu_custom_call.1} parent=1 // pred_check_branch
      %84 = sbr.rel (0) target = $region33
    $region32: #{tpu_custom_call.1} parent=1 // pred_region
      %s86 = ssub.s32 16, 16
      %87 = vsyncadd [#allocation11], %s86
      %s89 = sshll.u32 [#allocation12], 4
      %s90 = int_to_ptr.vmem [resolvable:$true] %s89
      %92 = dma.hbm_to_vmem [thread:$0]  %s7, 16, %s90, [#allocation11]
    $region33: #{tpu_custom_call.1} parent=1 // pred_fallthru
      _
    // Predicated region
    $region34: #{tpu_custom_call.1} parent=1 // pred_check
      _
    $region35: #{tpu_custom_call.1} parent=1 // pred_check_branch
      %94 = sbr.rel (0) target = $region37
    $region36: #{tpu_custom_call.1} parent=1 // pred_region
      %95 = dma.done [#allocation3], 57344
    $region37: #{tpu_custom_call.1} parent=1 // pred_fallthru
      _
    // Predicated region
    $region38: #{tpu_custom_call.1} parent=1 // pred_check
      _
    $region39: #{tpu_custom_call.1} parent=1 // pred_check_branch
      %97 = sbr.rel (0) target = $region41
    $region40: #{tpu_custom_call.1} parent=1 // pred_region
      %98 = dma.done [#allocation5], 57344
    $region41: #{tpu_custom_call.1} parent=1 // pred_fallthru
      _
    // Predicated region
    $region42: #{tpu_custom_call.1} parent=1 // pred_check
      _
    $region43: #{tpu_custom_call.1} parent=1 // pred_check_branch
      %100 = sbr.rel (0) target = $region45
    $region44: #{tpu_custom_call.1} parent=1 // pred_region
      %101 = dma.done [#allocation5], 128
    $region45: #{tpu_custom_call.1} parent=1 // pred_fallthru
      _
    // Predicated region
    $region46: #{tpu_custom_call.1} parent=1 // pred_check
      _
    $region47: #{tpu_custom_call.1} parent=1 // pred_check_branch
      %103 = sbr.rel (0) target = $region49
    $region48: #{tpu_custom_call.1} parent=1 // pred_region
      %104 = dma.done [#allocation8], 128
    $region49: #{tpu_custom_call.1} parent=1 // pred_fallthru
      _
    // Predicated region
    $region50: #{tpu_custom_call.1} parent=1 // pred_check
      _
    $region51: #{tpu_custom_call.1} parent=1 // pred_check_branch
      %106 = sbr.rel (0) target = $region53
    $region52: #{tpu_custom_call.1} parent=1 // pred_region
      %107 = dma.done [#allocation8], 16
    $region53: #{tpu_custom_call.1} parent=1 // pred_fallthru
      _
    // Predicated region
    $region54: #{tpu_custom_call.1} parent=1 // pred_check
      _
    $region55: #{tpu_custom_call.1} parent=1 // pred_check_branch
      %109 = sbr.rel (0) target = $region57
    $region56: #{tpu_custom_call.1} parent=1 // pred_region
      %110 = dma.done [#allocation11], 32
    $region57: #{tpu_custom_call.1} parent=1 // pred_fallthru
      _
    // Predicated region
    $region58: #{tpu_custom_call.1} parent=1 // pred_check
      _
    $region59: #{tpu_custom_call.1} parent=1 // pred_check_branch
      %112 = sbr.rel (0) target = $region61
    $region60: #{tpu_custom_call.1} parent=1 // pred_region
      %113 = dma.done [#allocation11], 16
    $region61: #{tpu_custom_call.1} parent=1 // pred_fallthru
      _
    %v114 = vld [vmem:[#allocation2] sm:$0xff]
    %v115 = vld [vmem:[#allocation2 + $0x8] sm:$0xff]
    %v116 = vld [vmem:[#allocation2 + $0x10] sm:$0xff]
    %v117 = vld [vmem:[#allocation2 + $0x18] sm:$0xff]
    %v118 = vld [vmem:[#allocation2 + $0x20] sm:$0xff]
    %v119 = vld [vmem:[#allocation2 + $0x28] sm:$0xff]
    %v120 = vld [vmem:[#allocation2 + $0x30] sm:$0xff]
    %v121 = vld [vmem:[#allocation2 + $0x38] sm:$0xff]
    %v122 = vld [vmem:[#allocation2 + $0x40] sm:$0xff]
    %v123 = vld [vmem:[#allocation2 + $0x48] sm:$0xff]
    %v124 = vld [vmem:[#allocation2 + $0x50] sm:$0xff]
    %v125 = vld [vmem:[#allocation2 + $0x58] sm:$0xff]
    %v126 = vld [vmem:[#allocation2 + $0x60] sm:$0xff]
    %v127 = vld [vmem:[#allocation2 + $0x68] sm:$0xff]
    %v128 = vld [vmem:[#allocation2 + $0x70] sm:$0xff]
    %v129 = vld [vmem:[#allocation2 + $0x78] sm:$0xff]
    %v130 = vld [vmem:[#allocation2 + $0x80] sm:$0xff]
    %v131 = vld [vmem:[#allocation2 + $0x88] sm:$0xff]
    %v132 = vld [vmem:[#allocation2 + $0x90] sm:$0xff]
    %v133 = vld [vmem:[#allocation2 + $0x98] sm:$0xff]
    %v134 = vld [vmem:[#allocation2 + $0xa0] sm:$0xff]
    %v135 = vld [vmem:[#allocation2 + $0xa8] sm:$0xff]
    %v136 = vld [vmem:[#allocation2 + $0xb0] sm:$0xff]
    %v137 = vld [vmem:[#allocation2 + $0xb8] sm:$0xff]
    %v138 = vld [vmem:[#allocation2 + $0xc0] sm:$0xff]
    %v139 = vld [vmem:[#allocation2 + $0xc8] sm:$0xff]
    %v140 = vld [vmem:[#allocation2 + $0xd0] sm:$0xff]
    %v141 = vld [vmem:[#allocation2 + $0xd8] sm:$0xff]
    %v142 = vld [vmem:[#allocation2 + $0xe0] sm:$0xff]
    %v143 = vld [vmem:[#allocation2 + $0xe8] sm:$0xff]
    %v144 = vld [vmem:[#allocation2 + $0xf0] sm:$0xff]
    %v145 = vld [vmem:[#allocation2 + $0xf8] sm:$0xff]
    %v146 = vld [vmem:[#allocation2 + $0x100] sm:$0xff]
    %v147 = vld [vmem:[#allocation2 + $0x108] sm:$0xff]
    %v148 = vld [vmem:[#allocation2 + $0x110] sm:$0xff]
    %v149 = vld [vmem:[#allocation2 + $0x118] sm:$0xff]
    %v150 = vld [vmem:[#allocation2 + $0x120] sm:$0xff]
    %v151 = vld [vmem:[#allocation2 + $0x128] sm:$0xff]
    %v152 = vld [vmem:[#allocation2 + $0x130] sm:$0xff]
    %v153 = vld [vmem:[#allocation2 + $0x138] sm:$0xff]
    %v154 = vld [vmem:[#allocation2 + $0x140] sm:$0xff]
    %v155 = vld [vmem:[#allocation2 + $0x148] sm:$0xff]
    %v156 = vld [vmem:[#allocation2 + $0x150] sm:$0xff]
    %v157 = vld [vmem:[#allocation2 + $0x158] sm:$0xff]
    %v158 = vld [vmem:[#allocation2 + $0x160] sm:$0xff]
    %v159 = vld [vmem:[#allocation2 + $0x168] sm:$0xff]
    %v160 = vld [vmem:[#allocation2 + $0x170] sm:$0xff]
    %v161 = vld [vmem:[#allocation2 + $0x178] sm:$0xff]
    %v162 = vld [vmem:[#allocation2 + $0x180] sm:$0xff]
    %v163 = vld [vmem:[#allocation2 + $0x188] sm:$0xff]
    %v164 = vld [vmem:[#allocation2 + $0x190] sm:$0xff]
    %v165 = vld [vmem:[#allocation2 + $0x198] sm:$0xff]
    %v166 = vld [vmem:[#allocation2 + $0x1a0] sm:$0xff]
    %v167 = vld [vmem:[#allocation2 + $0x1a8] sm:$0xff]
    %v168 = vld [vmem:[#allocation2 + $0x1b0] sm:$0xff]
    %v169 = vld [vmem:[#allocation2 + $0x1b8] sm:$0xff]
    %v170 = vld [vmem:[#allocation2 + $0x700] sm:$0xff]
    %v171 = vld [vmem:[#allocation2 + $0x708] sm:$0xff]
    %v172 = vld [vmem:[#allocation2 + $0x710] sm:$0xff]
    %v173 = vld [vmem:[#allocation2 + $0x718] sm:$0xff]
    %v174 = vld [vmem:[#allocation2 + $0x720] sm:$0xff]
    %v175 = vld [vmem:[#allocation2 + $0x728] sm:$0xff]
    %v176 = vld [vmem:[#allocation2 + $0x730] sm:$0xff]
    %v177 = vld [vmem:[#allocation2 + $0x738] sm:$0xff]
    %v178 = vld [vmem:[#allocation2 + $0x740] sm:$0xff]
    %v179 = vld [vmem:[#allocation2 + $0x748] sm:$0xff]
    %v180 = vld [vmem:[#allocation2 + $0x750] sm:$0xff]
    %v181 = vld [vmem:[#allocation2 + $0x758] sm:$0xff]
    %v182 = vld [vmem:[#allocation2 + $0x760] sm:$0xff]
    %v183 = vld [vmem:[#allocation2 + $0x768] sm:$0xff]
    %v184 = vld [vmem:[#allocation2 + $0x770] sm:$0xff]
    %v185 = vld [vmem:[#allocation2 + $0x778] sm:$0xff]
    %v186 = vld [vmem:[#allocation2 + $0x780] sm:$0xff]
    %v187 = vld [vmem:[#allocation2 + $0x788] sm:$0xff]
    %v188 = vld [vmem:[#allocation2 + $0x790] sm:$0xff]
    %v189 = vld [vmem:[#allocation2 + $0x798] sm:$0xff]
    %v190 = vld [vmem:[#allocation2 + $0x7a0] sm:$0xff]
    %v191 = vld [vmem:[#allocation2 + $0x7a8] sm:$0xff]
    %v192 = vld [vmem:[#allocation2 + $0x7b0] sm:$0xff]
    %v193 = vld [vmem:[#allocation2 + $0x7b8] sm:$0xff]
    %v194 = vld [vmem:[#allocation2 + $0x7c0] sm:$0xff]
    %v195 = vld [vmem:[#allocation2 + $0x7c8] sm:$0xff]
    %v196 = vld [vmem:[#allocation2 + $0x7d0] sm:$0xff]
    %v197 = vld [vmem:[#allocation2 + $0x7d8] sm:$0xff]
    %v198 = vld [vmem:[#allocation2 + $0x7e0] sm:$0xff]
    %v199 = vld [vmem:[#allocation2 + $0x7e8] sm:$0xff]
    %v200 = vld [vmem:[#allocation2 + $0x7f0] sm:$0xff]
    %v201 = vld [vmem:[#allocation2 + $0x7f8] sm:$0xff]
    %v202 = vld [vmem:[#allocation2 + $0x800] sm:$0xff]
    %v203 = vld [vmem:[#allocation2 + $0x808] sm:$0xff]
    %v204 = vld [vmem:[#allocation2 + $0x810] sm:$0xff]
    %v205 = vld [vmem:[#allocation2 + $0x818] sm:$0xff]
    %v206 = vld [vmem:[#allocation2 + $0x820] sm:$0xff]
    %v207 = vld [vmem:[#allocation2 + $0x828] sm:$0xff]
    %v208 = vld [vmem:[#allocation2 + $0x830] sm:$0xff]
    %v209 = vld [vmem:[#allocation2 + $0x838] sm:$0xff]
    %v210 = vld [vmem:[#allocation2 + $0x840] sm:$0xff]
    %v211 = vld [vmem:[#allocation2 + $0x848] sm:$0xff]
    %v212 = vld [vmem:[#allocation2 + $0x850] sm:$0xff]
    %v213 = vld [vmem:[#allocation2 + $0x858] sm:$0xff]
    %v214 = vld [vmem:[#allocation2 + $0x860] sm:$0xff]
    %v215 = vld [vmem:[#allocation2 + $0x868] sm:$0xff]
    %v216 = vld [vmem:[#allocation2 + $0x870] sm:$0xff]
    %v217 = vld [vmem:[#allocation2 + $0x878] sm:$0xff]
    %v218 = vld [vmem:[#allocation2 + $0x880] sm:$0xff]
    %v219 = vld [vmem:[#allocation2 + $0x888] sm:$0xff]
    %v220 = vld [vmem:[#allocation2 + $0x890] sm:$0xff]
    %v221 = vld [vmem:[#allocation2 + $0x898] sm:$0xff]
    %v222 = vld [vmem:[#allocation2 + $0x8a0] sm:$0xff]
    %v223 = vld [vmem:[#allocation2 + $0x8a8] sm:$0xff]
    %v224 = vld [vmem:[#allocation2 + $0x8b0] sm:$0xff]
    %v225 = vld [vmem:[#allocation2 + $0x8b8] sm:$0xff]
    %vm226 = vcmask 785408
    %v227 = vsel %vm226, %v115, 0.0
    %v228 = vadd.f32 %v114, %v227
    %229 = vadd.xlane.f32.xlu0 %v228
    %v230 = vpop.xlane.xlu0 %229
    %v231 = vsel %vm226, %v117, 0.0
    %v232 = vadd.f32 %v116, %v231
    %233 = vadd.xlane.f32.xlu0 %v232
    %v234 = vpop.xlane.xlu0 %233
    %v235 = vsel %vm226, %v119, 0.0
    %v236 = vadd.f32 %v118, %v235
    %237 = vadd.xlane.f32.xlu0 %v236
    %v238 = vpop.xlane.xlu0 %237
    %v239 = vsel %vm226, %v121, 0.0
    %v240 = vadd.f32 %v120, %v239
    %241 = vadd.xlane.f32.xlu0 %v240
    %v242 = vpop.xlane.xlu0 %241
    %v243 = vsel %vm226, %v123, 0.0
    %v244 = vadd.f32 %v122, %v243
    %245 = vadd.xlane.f32.xlu0 %v244
    %v246 = vpop.xlane.xlu0 %245
    %v247 = vsel %vm226, %v125, 0.0
    %v248 = vadd.f32 %v124, %v247
    %249 = vadd.xlane.f32.xlu0 %v248
    %v250 = vpop.xlane.xlu0 %249
    %v251 = vsel %vm226, %v127, 0.0
    %v252 = vadd.f32 %v126, %v251
    %253 = vadd.xlane.f32.xlu0 %v252
    %v254 = vpop.xlane.xlu0 %253
    %v255 = vsel %vm226, %v129, 0.0
    %v256 = vadd.f32 %v128, %v255
    %257 = vadd.xlane.f32.xlu0 %v256
    %v258 = vpop.xlane.xlu0 %257
    %v259 = vsel %vm226, %v131, 0.0
    %v260 = vadd.f32 %v130, %v259
    %261 = vadd.xlane.f32.xlu0 %v260
    %v262 = vpop.xlane.xlu0 %261
    %v263 = vsel %vm226, %v133, 0.0
    %v264 = vadd.f32 %v132, %v263
    %265 = vadd.xlane.f32.xlu0 %v264
    %v266 = vpop.xlane.xlu0 %265
    %v267 = vsel %vm226, %v135, 0.0
    %v268 = vadd.f32 %v134, %v267
    %269 = vadd.xlane.f32.xlu0 %v268
    %v270 = vpop.xlane.xlu0 %269
    %v271 = vsel %vm226, %v137, 0.0
    %v272 = vadd.f32 %v136, %v271
    %273 = vadd.xlane.f32.xlu0 %v272
    %v274 = vpop.xlane.xlu0 %273
    %v275 = vsel %vm226, %v139, 0.0
    %v276 = vadd.f32 %v138, %v275
    %277 = vadd.xlane.f32.xlu0 %v276
    %v278 = vpop.xlane.xlu0 %277
    %v279 = vsel %vm226, %v141, 0.0
    %v280 = vadd.f32 %v140, %v279
    %281 = vadd.xlane.f32.xlu0 %v280
    %v282 = vpop.xlane.xlu0 %281
    %v283 = vsel %vm226, %v143, 0.0
    %v284 = vadd.f32 %v142, %v283
    %285 = vadd.xlane.f32.xlu0 %v284
    %v286 = vpop.xlane.xlu0 %285
    %v287 = vsel %vm226, %v145, 0.0
    %v288 = vadd.f32 %v144, %v287
    %289 = vadd.xlane.f32.xlu0 %v288
    %v290 = vpop.xlane.xlu0 %289
    %v291 = vsel %vm226, %v147, 0.0
    %v292 = vadd.f32 %v146, %v291
    %293 = vadd.xlane.f32.xlu0 %v292
    %v294 = vpop.xlane.xlu0 %293
    %v295 = vsel %vm226, %v149, 0.0
    %v296 = vadd.f32 %v148, %v295
    %297 = vadd.xlane.f32.xlu0 %v296
    %v298 = vpop.xlane.xlu0 %297
    %v299 = vsel %vm226, %v151, 0.0
    %v300 = vadd.f32 %v150, %v299
    %301 = vadd.xlane.f32.xlu0 %v300
    %v302 = vpop.xlane.xlu0 %301
    %v303 = vsel %vm226, %v153, 0.0
    %v304 = vadd.f32 %v152, %v303
    %305 = vadd.xlane.f32.xlu0 %v304
    %v306 = vpop.xlane.xlu0 %305
    %v307 = vsel %vm226, %v155, 0.0
    %v308 = vadd.f32 %v154, %v307
    %309 = vadd.xlane.f32.xlu0 %v308
    %v310 = vpop.xlane.xlu0 %309
    %v311 = vsel %vm226, %v157, 0.0
    %v312 = vadd.f32 %v156, %v311
    %313 = vadd.xlane.f32.xlu0 %v312
    %v314 = vpop.xlane.xlu0 %313
    %v315 = vsel %vm226, %v159, 0.0
    %v316 = vadd.f32 %v158, %v315
    %317 = vadd.xlane.f32.xlu0 %v316
    %v318 = vpop.xlane.xlu0 %317
    %v319 = vsel %vm226, %v161, 0.0
    %v320 = vadd.f32 %v160, %v319
    %321 = vadd.xlane.f32.xlu0 %v320
    %v322 = vpop.xlane.xlu0 %321
    %v323 = vsel %vm226, %v163, 0.0
    %v324 = vadd.f32 %v162, %v323
    %325 = vadd.xlane.f32.xlu0 %v324
    %v326 = vpop.xlane.xlu0 %325
    %v327 = vsel %vm226, %v165, 0.0
    %v328 = vadd.f32 %v164, %v327
    %329 = vadd.xlane.f32.xlu0 %v328
    %v330 = vpop.xlane.xlu0 %329
    %v331 = vsel %vm226, %v167, 0.0
    %v332 = vadd.f32 %v166, %v331
    %333 = vadd.xlane.f32.xlu0 %v332
    %v334 = vpop.xlane.xlu0 %333
    %v335 = vsel %vm226, %v169, 0.0
    %v336 = vadd.f32 %v168, %v335
    %337 = vadd.xlane.f32.xlu0 %v336
    %v338 = vpop.xlane.xlu0 %337
    %v339 = vsel %vm226, %v171, 0.0
    %v340 = vadd.f32 %v170, %v339
    %341 = vadd.xlane.f32.xlu0 %v340
    %v342 = vpop.xlane.xlu0 %341
    %v343 = vsel %vm226, %v173, 0.0
    %v344 = vadd.f32 %v172, %v343
    %345 = vadd.xlane.f32.xlu0 %v344
    %v346 = vpop.xlane.xlu0 %345
    %v347 = vsel %vm226, %v175, 0.0
    %v348 = vadd.f32 %v174, %v347
    %349 = vadd.xlane.f32.xlu0 %v348
    %v350 = vpop.xlane.xlu0 %349
    %v351 = vsel %vm226, %v177, 0.0
    %v352 = vadd.f32 %v176, %v351
    %353 = vadd.xlane.f32.xlu0 %v352
    %v354 = vpop.xlane.xlu0 %353
    %v355 = vsel %vm226, %v179, 0.0
    %v356 = vadd.f32 %v178, %v355
    %357 = vadd.xlane.f32.xlu0 %v356
    %v358 = vpop.xlane.xlu0 %357
    %v359 = vsel %vm226, %v181, 0.0
    %v360 = vadd.f32 %v180, %v359
    %361 = vadd.xlane.f32.xlu0 %v360
    %v362 = vpop.xlane.xlu0 %361
    %v363 = vsel %vm226, %v183, 0.0
    %v364 = vadd.f32 %v182, %v363
    %365 = vadd.xlane.f32.xlu0 %v364
    %v366 = vpop.xlane.xlu0 %365
    %v367 = vsel %vm226, %v185, 0.0
    %v368 = vadd.f32 %v184, %v367
    %369 = vadd.xlane.f32.xlu0 %v368
    %v370 = vpop.xlane.xlu0 %369
    %v371 = vsel %vm226, %v187, 0.0
    %v372 = vadd.f32 %v186, %v371
    %373 = vadd.xlane.f32.xlu0 %v372
    %v374 = vpop.xlane.xlu0 %373
    %v375 = vsel %vm226, %v189, 0.0
    %v376 = vadd.f32 %v188, %v375
    %377 = vadd.xlane.f32.xlu0 %v376
    %v378 = vpop.xlane.xlu0 %377
    %v379 = vsel %vm226, %v191, 0.0
    %v380 = vadd.f32 %v190, %v379
    %381 = vadd.xlane.f32.xlu0 %v380
    %v382 = vpop.xlane.xlu0 %381
    %v383 = vsel %vm226, %v193, 0.0
    %v384 = vadd.f32 %v192, %v383
    %385 = vadd.xlane.f32.xlu0 %v384
    %v386 = vpop.xlane.xlu0 %385
    %v387 = vsel %vm226, %v195, 0.0
    %v388 = vadd.f32 %v194, %v387
    %389 = vadd.xlane.f32.xlu0 %v388
    %v390 = vpop.xlane.xlu0 %389
    %v391 = vsel %vm226, %v197, 0.0
    %v392 = vadd.f32 %v196, %v391
    %393 = vadd.xlane.f32.xlu0 %v392
    %v394 = vpop.xlane.xlu0 %393
    %v395 = vsel %vm226, %v199, 0.0
    %v396 = vadd.f32 %v198, %v395
    %397 = vadd.xlane.f32.xlu0 %v396
    %v398 = vpop.xlane.xlu0 %397
    %v399 = vsel %vm226, %v201, 0.0
    %v400 = vadd.f32 %v200, %v399
    %401 = vadd.xlane.f32.xlu0 %v400
    %v402 = vpop.xlane.xlu0 %401
    %v403 = vsel %vm226, %v203, 0.0
    %v404 = vadd.f32 %v202, %v403
    %405 = vadd.xlane.f32.xlu0 %v404
    %v406 = vpop.xlane.xlu0 %405
    %v407 = vsel %vm226, %v205, 0.0
    %v408 = vadd.f32 %v204, %v407
    %409 = vadd.xlane.f32.xlu0 %v408
    %v410 = vpop.xlane.xlu0 %409
    %v411 = vsel %vm226, %v207, 0.0
    %v412 = vadd.f32 %v206, %v411
    %413 = vadd.xlane.f32.xlu0 %v412
    %v414 = vpop.xlane.xlu0 %413
    %v415 = vsel %vm226, %v209, 0.0
    %v416 = vadd.f32 %v208, %v415
    %417 = vadd.xlane.f32.xlu0 %v416
    %v418 = vpop.xlane.xlu0 %417
    %v419 = vsel %vm226, %v211, 0.0
    %v420 = vadd.f32 %v210, %v419
    %421 = vadd.xlane.f32.xlu0 %v420
    %v422 = vpop.xlane.xlu0 %421
    %v423 = vsel %vm226, %v213, 0.0
    %v424 = vadd.f32 %v212, %v423
    %425 = vadd.xlane.f32.xlu0 %v424
    %v426 = vpop.xlane.xlu0 %425
    %v427 = vsel %vm226, %v215, 0.0
    %v428 = vadd.f32 %v214, %v427
    %429 = vadd.xlane.f32.xlu0 %v428
    %v430 = vpop.xlane.xlu0 %429
    %v431 = vsel %vm226, %v217, 0.0
    %v432 = vadd.f32 %v216, %v431
    %433 = vadd.xlane.f32.xlu0 %v432
    %v434 = vpop.xlane.xlu0 %433
    %v435 = vsel %vm226, %v219, 0.0
    %v436 = vadd.f32 %v218, %v435
    %437 = vadd.xlane.f32.xlu0 %v436
    %v438 = vpop.xlane.xlu0 %437
    %v439 = vsel %vm226, %v221, 0.0
    %v440 = vadd.f32 %v220, %v439
    %441 = vadd.xlane.f32.xlu0 %v440
    %v442 = vpop.xlane.xlu0 %441
    %v443 = vsel %vm226, %v223, 0.0
    %v444 = vadd.f32 %v222, %v443
    %445 = vadd.xlane.f32.xlu0 %v444
    %v446 = vpop.xlane.xlu0 %445
    %v447 = vsel %vm226, %v225, 0.0
    %v448 = vadd.f32 %v224, %v447
    %449 = vadd.xlane.f32.xlu0 %v448
    %v450 = vpop.xlane.xlu0 %449
    %v507 = vlaneseq
    %v508 = vand.u32 %v507, 127
    %v509 = vlaneseq
    %v510 = vshrl.u32 %v509, 7
    %v511 = vsub.s32 %v508, %v510
    %v512 = vrot.slane %v230, %v511
    %v513 = vadd.s32 %v508, 4294967288
    %v514 = vlaneseq
    %v515 = vshrl.u32 %v514, 7
    %v516 = vsub.s32 %v513, %v515
    %v517 = vrot.slane %v234, %v516
    %vm518 = vcmask 130112
    %v519 = vsel %vm518, %v517, %v512
    %v520 = vadd.s32 %v508, 4294967280
    %v521 = vlaneseq
    %v522 = vshrl.u32 %v521, 7
    %v523 = vsub.s32 %v520, %v522
    %v524 = vrot.slane %v238, %v523
    %vm525 = vcmask 195712
    %v526 = vsel %vm525, %v524, %v519
    %v527 = vadd.s32 %v508, 4294967272
    %v528 = vlaneseq
    %v529 = vshrl.u32 %v528, 7
    %v530 = vsub.s32 %v527, %v529
    %v531 = vrot.slane %v242, %v530
    %vm532 = vcmask 261312
    %v533 = vsel %vm532, %v531, %v526
    %v534 = vadd.s32 %v508, 4294967264
    %v535 = vlaneseq
    %v536 = vshrl.u32 %v535, 7
    %v537 = vsub.s32 %v534, %v536
    %v538 = vrot.slane %v246, %v537
    %vm539 = vcmask 326912
    %v540 = vsel %vm539, %v538, %v533
    %v541 = vadd.s32 %v508, 4294967256
    %v542 = vlaneseq
    %v543 = vshrl.u32 %v542, 7
    %v544 = vsub.s32 %v541, %v543
    %v545 = vrot.slane %v250, %v544
    %vm546 = vcmask 392512
    %v547 = vsel %vm546, %v545, %v540
    %v548 = vadd.s32 %v508, 4294967248
    %v549 = vlaneseq
    %v550 = vshrl.u32 %v549, 7
    %v551 = vsub.s32 %v548, %v550
    %v552 = vrot.slane %v254, %v551
    %vm553 = vcmask 458112
    %v554 = vsel %vm553, %v552, %v547
    %v555 = vadd.s32 %v508, 4294967240
    %v556 = vlaneseq
    %v557 = vshrl.u32 %v556, 7
    %v558 = vsub.s32 %v555, %v557
    %v559 = vrot.slane %v258, %v558
    %vm560 = vcmask 523712
    %v561 = vsel %vm560, %v559, %v554
    %v562 = vadd.s32 %v508, 4294967232
    %v563 = vlaneseq
    %v564 = vshrl.u32 %v563, 7
    %v565 = vsub.s32 %v562, %v564
    %v566 = vrot.slane %v262, %v565
    %vm567 = vcmask 589312
    %v568 = vsel %vm567, %v566, %v561
    %v569 = vadd.s32 %v508, 4294967224
    %v570 = vlaneseq
    %v571 = vshrl.u32 %v570, 7
    %v572 = vsub.s32 %v569, %v571
    %v573 = vrot.slane %v266, %v572
    %vm574 = vcmask 654912
    %v575 = vsel %vm574, %v573, %v568
    %v576 = vadd.s32 %v508, 4294967216
    %v577 = vlaneseq
    %v578 = vshrl.u32 %v577, 7
    %v579 = vsub.s32 %v576, %v578
    %v580 = vrot.slane %v270, %v579
    %vm581 = vcmask 720512
    %v582 = vsel %vm581, %v580, %v575
    %v583 = vadd.s32 %v508, 4294967208
    %v584 = vlaneseq
    %v585 = vshrl.u32 %v584, 7
    %v586 = vsub.s32 %v583, %v585
    %v587 = vrot.slane %v274, %v586
    %vm588 = vcmask 786112
    %v589 = vsel %vm588, %v587, %v582
    %v590 = vadd.s32 %v508, 4294967200
    %v591 = vlaneseq
    %v592 = vshrl.u32 %v591, 7
    %v593 = vsub.s32 %v590, %v592
    %v594 = vrot.slane %v278, %v593
    %vm595 = vcmask 851712
    %v596 = vsel %vm595, %v594, %v589
    %v597 = vadd.s32 %v508, 4294967192
    %v598 = vlaneseq
    %v599 = vshrl.u32 %v598, 7
    %v600 = vsub.s32 %v597, %v599
    %v601 = vrot.slane %v282, %v600
    %vm602 = vcmask 917312
    %v603 = vsel %vm602, %v601, %v596
    %v604 = vadd.s32 %v508, 4294967184
    %v605 = vlaneseq
    %v606 = vshrl.u32 %v605, 7
    %v607 = vsub.s32 %v604, %v606
    %v608 = vrot.slane %v286, %v607
    %vm609 = vcmask 982912
    %v610 = vsel %vm609, %v608, %v603
    %v611 = vadd.s32 %v508, 4294967176
    %v612 = vlaneseq
    %v613 = vshrl.u32 %v612, 7
    %v614 = vsub.s32 %v611, %v613
    %v615 = vrot.slane %v290, %v614
    %vm616 = vcmask 1048512
    %v617 = vsel %vm616, %v615, %v610
    %v618 = vlaneseq
    %v619 = vshrl.u32 %v618, 7
    %v620 = vsub.s32 %v508, %v619
    %v621 = vrot.slane %v294, %v620
    %v622 = vlaneseq
    %v623 = vshrl.u32 %v622, 7
    %v624 = vsub.s32 %v513, %v623
    %v625 = vrot.slane %v298, %v624
    %v626 = vsel %vm518, %v625, %v621
    %v627 = vlaneseq
    %v628 = vshrl.u32 %v627, 7
    %v629 = vsub.s32 %v520, %v628
    %v630 = vrot.slane %v302, %v629
    %v631 = vsel %vm525, %v630, %v626
    %v632 = vlaneseq
    %v633 = vshrl.u32 %v632, 7
    %v634 = vsub.s32 %v527, %v633
    %v635 = vrot.slane %v306, %v634
    %v636 = vsel %vm532, %v635, %v631
    %v637 = vlaneseq
    %v638 = vshrl.u32 %v637, 7
    %v639 = vsub.s32 %v534, %v638
    %v640 = vrot.slane %v310, %v639
    %v641 = vsel %vm539, %v640, %v636
    %v642 = vlaneseq
    %v643 = vshrl.u32 %v642, 7
    %v644 = vsub.s32 %v541, %v643
    %v645 = vrot.slane %v314, %v644
    %v646 = vsel %vm546, %v645, %v641
    %v647 = vlaneseq
    %v648 = vshrl.u32 %v647, 7
    %v649 = vsub.s32 %v548, %v648
    %v650 = vrot.slane %v318, %v649
    %v651 = vsel %vm553, %v650, %v646
    %v652 = vlaneseq
    %v653 = vshrl.u32 %v652, 7
    %v654 = vsub.s32 %v555, %v653
    %v655 = vrot.slane %v322, %v654
    %v656 = vsel %vm560, %v655, %v651
    %v657 = vlaneseq
    %v658 = vshrl.u32 %v657, 7
    %v659 = vsub.s32 %v562, %v658
    %v660 = vrot.slane %v326, %v659
    %v661 = vsel %vm567, %v660, %v656
    %v662 = vlaneseq
    %v663 = vshrl.u32 %v662, 7
    %v664 = vsub.s32 %v569, %v663
    %v665 = vrot.slane %v330, %v664
    %v666 = vsel %vm574, %v665, %v661
    %v667 = vlaneseq
    %v668 = vshrl.u32 %v667, 7
    %v669 = vsub.s32 %v576, %v668
    %v670 = vrot.slane %v334, %v669
    %v671 = vsel %vm581, %v670, %v666
    %v672 = vlaneseq
    %v673 = vshrl.u32 %v672, 7
    %v674 = vsub.s32 %v583, %v673
    %v675 = vrot.slane %v338, %v674
    %v676 = vsel %vm588, %v675, %v671
    %v677 = vlaneseq
    %v678 = vshrl.u32 %v677, 7
    %v679 = vsub.s32 %v508, %v678
    %v680 = vrot.slane %v342, %v679
    %v681 = vlaneseq
    %v682 = vshrl.u32 %v681, 7
    %v683 = vsub.s32 %v513, %v682
    %v684 = vrot.slane %v346, %v683
    %v685 = vsel %vm518, %v684, %v680
    %v686 = vlaneseq
    %v687 = vshrl.u32 %v686, 7
    %v688 = vsub.s32 %v520, %v687
    %v689 = vrot.slane %v350, %v688
    %v690 = vsel %vm525, %v689, %v685
    %v691 = vlaneseq
    %v692 = vshrl.u32 %v691, 7
    %v693 = vsub.s32 %v527, %v692
    %v694 = vrot.slane %v354, %v693
    %v695 = vsel %vm532, %v694, %v690
    %v696 = vlaneseq
    %v697 = vshrl.u32 %v696, 7
    %v698 = vsub.s32 %v534, %v697
    %v699 = vrot.slane %v358, %v698
    %v700 = vsel %vm539, %v699, %v695
    %v701 = vlaneseq
    %v702 = vshrl.u32 %v701, 7
    %v703 = vsub.s32 %v541, %v702
    %v704 = vrot.slane %v362, %v703
    %v705 = vsel %vm546, %v704, %v700
    %v706 = vlaneseq
    %v707 = vshrl.u32 %v706, 7
    %v708 = vsub.s32 %v548, %v707
    %v709 = vrot.slane %v366, %v708
    %v710 = vsel %vm553, %v709, %v705
    %v711 = vlaneseq
    %v712 = vshrl.u32 %v711, 7
    %v713 = vsub.s32 %v555, %v712
    %v714 = vrot.slane %v370, %v713
    %v715 = vsel %vm560, %v714, %v710
    %v716 = vlaneseq
    %v717 = vshrl.u32 %v716, 7
    %v718 = vsub.s32 %v562, %v717
    %v719 = vrot.slane %v374, %v718
    %v720 = vsel %vm567, %v719, %v715
    %v721 = vlaneseq
    %v722 = vshrl.u32 %v721, 7
    %v723 = vsub.s32 %v569, %v722
    %v724 = vrot.slane %v378, %v723
    %v725 = vsel %vm574, %v724, %v720
    %v726 = vlaneseq
    %v727 = vshrl.u32 %v726, 7
    %v728 = vsub.s32 %v576, %v727
    %v729 = vrot.slane %v382, %v728
    %v730 = vsel %vm581, %v729, %v725
    %v731 = vlaneseq
    %v732 = vshrl.u32 %v731, 7
    %v733 = vsub.s32 %v583, %v732
    %v734 = vrot.slane %v386, %v733
    %v735 = vsel %vm588, %v734, %v730
    %v736 = vlaneseq
    %v737 = vshrl.u32 %v736, 7
    %v738 = vsub.s32 %v590, %v737
    %v739 = vrot.slane %v390, %v738
    %v740 = vsel %vm595, %v739, %v735
    %v741 = vlaneseq
    %v742 = vshrl.u32 %v741, 7
    %v743 = vsub.s32 %v597, %v742
    %v744 = vrot.slane %v394, %v743
    %v745 = vsel %vm602, %v744, %v740
    %v746 = vlaneseq
    %v747 = vshrl.u32 %v746, 7
    %v748 = vsub.s32 %v604, %v747
    %v749 = vrot.slane %v398, %v748
    %v750 = vsel %vm609, %v749, %v745
    %v751 = vlaneseq
    %v752 = vshrl.u32 %v751, 7
    %v753 = vsub.s32 %v611, %v752
    %v754 = vrot.slane %v402, %v753
    %v755 = vsel %vm616, %v754, %v750
    %v756 = vlaneseq
    %v757 = vshrl.u32 %v756, 7
    %v758 = vsub.s32 %v508, %v757
    %v759 = vrot.slane %v406, %v758
    %v760 = vlaneseq
    %v761 = vshrl.u32 %v760, 7
    %v762 = vsub.s32 %v513, %v761
    %v763 = vrot.slane %v410, %v762
    %v764 = vsel %vm518, %v763, %v759
    %v765 = vlaneseq
    %v766 = vshrl.u32 %v765, 7
    %v767 = vsub.s32 %v520, %v766
    %v768 = vrot.slane %v414, %v767
    %v769 = vsel %vm525, %v768, %v764
    %v770 = vlaneseq
    %v771 = vshrl.u32 %v770, 7
    %v772 = vsub.s32 %v527, %v771
    %v773 = vrot.slane %v418, %v772
    %v774 = vsel %vm532, %v773, %v769
    %v775 = vlaneseq
    %v776 = vshrl.u32 %v775, 7
    %v777 = vsub.s32 %v534, %v776
    %v778 = vrot.slane %v422, %v777
    %v779 = vsel %vm539, %v778, %v774
    %v780 = vlaneseq
    %v781 = vshrl.u32 %v780, 7
    %v782 = vsub.s32 %v541, %v781
    %v783 = vrot.slane %v426, %v782
    %v784 = vsel %vm546, %v783, %v779
    %v785 = vlaneseq
    %v786 = vshrl.u32 %v785, 7
    %v787 = vsub.s32 %v548, %v786
    %v788 = vrot.slane %v430, %v787
    %v789 = vsel %vm553, %v788, %v784
    %v790 = vlaneseq
    %v791 = vshrl.u32 %v790, 7
    %v792 = vsub.s32 %v555, %v791
    %v793 = vrot.slane %v434, %v792
    %v794 = vsel %vm560, %v793, %v789
    %v795 = vlaneseq
    %v796 = vshrl.u32 %v795, 7
    %v797 = vsub.s32 %v562, %v796
    %v798 = vrot.slane %v438, %v797
    %v799 = vsel %vm567, %v798, %v794
    %v800 = vlaneseq
    %v801 = vshrl.u32 %v800, 7
    %v802 = vsub.s32 %v569, %v801
    %v803 = vrot.slane %v442, %v802
    %v804 = vsel %vm574, %v803, %v799
    %v805 = vlaneseq
    %v806 = vshrl.u32 %v805, 7
    %v807 = vsub.s32 %v576, %v806
    %v808 = vrot.slane %v446, %v807
    %v809 = vsel %vm581, %v808, %v804
    %v810 = vlaneseq
    %v811 = vshrl.u32 %v810, 7
    %v812 = vsub.s32 %v583, %v811
    %v813 = vrot.slane %v450, %v812
    %v814 = vsel %vm588, %v813, %v809
    %vm815 = vcmask 1041409
    %v816 = vsel %vm815, %v755, %v617
    %v817 = vsel %vm815, %v814, %v676
    %vm820 = vcmask 1041408
    %v821 = vsel %vm820, %v816, 0.0
    %vm822 = vcmask 779264
    %v823 = vsel %vm822, %v817, 0.0
    %v824 = vadd.f32 %v821, %v823
    %825 = vadd.xlane.f32.xlu0 %v824
    %v826 = vpop.xlane.xlu0 %825
    %v827 = vmul.f32 %v826, 1.9929847e-05
    %s828 = scalar_lea.vmem [#allocation2], 448
    %v829 = vld [vmem:[%s828] sm:$0xff]
    %v830 = vld [vmem:[%s828 + $0x8] sm:$0xff]
    %v831 = vld [vmem:[%s828 + $0x10] sm:$0xff]
    %v832 = vld [vmem:[%s828 + $0x18] sm:$0xff]
    %v833 = vld [vmem:[%s828 + $0x20] sm:$0xff]
    %v834 = vld [vmem:[%s828 + $0x28] sm:$0xff]
    %v835 = vld [vmem:[%s828 + $0x30] sm:$0xff]
    %v836 = vld [vmem:[%s828 + $0x38] sm:$0xff]
    %v837 = vld [vmem:[%s828 + $0x40] sm:$0xff]
    %v838 = vld [vmem:[%s828 + $0x48] sm:$0xff]
    %v839 = vld [vmem:[%s828 + $0x50] sm:$0xff]
    %v840 = vld [vmem:[%s828 + $0x58] sm:$0xff]
    %v841 = vld [vmem:[%s828 + $0x60] sm:$0xff]
    %v842 = vld [vmem:[%s828 + $0x68] sm:$0xff]
    %v843 = vld [vmem:[%s828 + $0x70] sm:$0xff]
    %v844 = vld [vmem:[%s828 + $0x78] sm:$0xff]
    %v845 = vld [vmem:[%s828 + $0x80] sm:$0xff]
    %v846 = vld [vmem:[%s828 + $0x88] sm:$0xff]
    %v847 = vld [vmem:[%s828 + $0x90] sm:$0xff]
    %v848 = vld [vmem:[%s828 + $0x98] sm:$0xff]
    %v849 = vld [vmem:[%s828 + $0xa0] sm:$0xff]
    %v850 = vld [vmem:[%s828 + $0xa8] sm:$0xff]
    %v851 = vld [vmem:[%s828 + $0xb0] sm:$0xff]
    %v852 = vld [vmem:[%s828 + $0xb8] sm:$0xff]
    %v853 = vld [vmem:[%s828 + $0xc0] sm:$0xff]
    %v854 = vld [vmem:[%s828 + $0xc8] sm:$0xff]
    %v855 = vld [vmem:[%s828 + $0xd0] sm:$0xff]
    %v856 = vld [vmem:[%s828 + $0xd8] sm:$0xff]
    %v857 = vld [vmem:[%s828 + $0xe0] sm:$0xff]
    %v858 = vld [vmem:[%s828 + $0xe8] sm:$0xff]
    %v859 = vld [vmem:[%s828 + $0xf0] sm:$0xff]
    %v860 = vld [vmem:[%s828 + $0xf8] sm:$0xff]
    %v861 = vld [vmem:[%s828 + $0x100] sm:$0xff]
    %v862 = vld [vmem:[%s828 + $0x108] sm:$0xff]
    %v863 = vld [vmem:[%s828 + $0x110] sm:$0xff]
    %v864 = vld [vmem:[%s828 + $0x118] sm:$0xff]
    %v865 = vld [vmem:[%s828 + $0x120] sm:$0xff]
    %v866 = vld [vmem:[%s828 + $0x128] sm:$0xff]
    %v867 = vld [vmem:[%s828 + $0x130] sm:$0xff]
    %v868 = vld [vmem:[%s828 + $0x138] sm:$0xff]
    %v869 = vld [vmem:[%s828 + $0x140] sm:$0xff]
    %v870 = vld [vmem:[%s828 + $0x148] sm:$0xff]
    %v871 = vld [vmem:[%s828 + $0x150] sm:$0xff]
    %v872 = vld [vmem:[%s828 + $0x158] sm:$0xff]
    %v873 = vld [vmem:[%s828 + $0x160] sm:$0xff]
    %v874 = vld [vmem:[%s828 + $0x168] sm:$0xff]
    %v875 = vld [vmem:[%s828 + $0x170] sm:$0xff]
    %v876 = vld [vmem:[%s828 + $0x178] sm:$0xff]
    %v877 = vld [vmem:[%s828 + $0x180] sm:$0xff]
    %v878 = vld [vmem:[%s828 + $0x188] sm:$0xff]
    %v879 = vld [vmem:[%s828 + $0x190] sm:$0xff]
    %v880 = vld [vmem:[%s828 + $0x198] sm:$0xff]
    %v881 = vld [vmem:[%s828 + $0x1a0] sm:$0xff]
    %v882 = vld [vmem:[%s828 + $0x1a8] sm:$0xff]
    %v883 = vld [vmem:[%s828 + $0x1b0] sm:$0xff]
    %v884 = vld [vmem:[%s828 + $0x1b8] sm:$0xff]
    %v885 = vld [vmem:[%s828 + $0x700] sm:$0xff]
    %v886 = vld [vmem:[%s828 + $0x708] sm:$0xff]
    %v887 = vld [vmem:[%s828 + $0x710] sm:$0xff]
    %v888 = vld [vmem:[%s828 + $0x718] sm:$0xff]
    %v889 = vld [vmem:[%s828 + $0x720] sm:$0xff]
    %v890 = vld [vmem:[%s828 + $0x728] sm:$0xff]
    %v891 = vld [vmem:[%s828 + $0x730] sm:$0xff]
    %v892 = vld [vmem:[%s828 + $0x738] sm:$0xff]
    %v893 = vld [vmem:[%s828 + $0x740] sm:$0xff]
    %v894 = vld [vmem:[%s828 + $0x748] sm:$0xff]
    %v895 = vld [vmem:[%s828 + $0x750] sm:$0xff]
    %v896 = vld [vmem:[%s828 + $0x758] sm:$0xff]
    %v897 = vld [vmem:[%s828 + $0x760] sm:$0xff]
    %v898 = vld [vmem:[%s828 + $0x768] sm:$0xff]
    %v899 = vld [vmem:[%s828 + $0x770] sm:$0xff]
    %v900 = vld [vmem:[%s828 + $0x778] sm:$0xff]
    %v901 = vld [vmem:[%s828 + $0x780] sm:$0xff]
    %v902 = vld [vmem:[%s828 + $0x788] sm:$0xff]
    %v903 = vld [vmem:[%s828 + $0x790] sm:$0xff]
    %v904 = vld [vmem:[%s828 + $0x798] sm:$0xff]
    %v905 = vld [vmem:[%s828 + $0x7a0] sm:$0xff]
    %v906 = vld [vmem:[%s828 + $0x7a8] sm:$0xff]
    %v907 = vld [vmem:[%s828 + $0x7b0] sm:$0xff]
    %v908 = vld [vmem:[%s828 + $0x7b8] sm:$0xff]
    %v909 = vld [vmem:[%s828 + $0x7c0] sm:$0xff]
    %v910 = vld [vmem:[%s828 + $0x7c8] sm:$0xff]
    %v911 = vld [vmem:[%s828 + $0x7d0] sm:$0xff]
    %v912 = vld [vmem:[%s828 + $0x7d8] sm:$0xff]
    %v913 = vld [vmem:[%s828 + $0x7e0] sm:$0xff]
    %v914 = vld [vmem:[%s828 + $0x7e8] sm:$0xff]
    %v915 = vld [vmem:[%s828 + $0x7f0] sm:$0xff]
    %v916 = vld [vmem:[%s828 + $0x7f8] sm:$0xff]
    %v917 = vld [vmem:[%s828 + $0x800] sm:$0xff]
    %v918 = vld [vmem:[%s828 + $0x808] sm:$0xff]
    %v919 = vld [vmem:[%s828 + $0x810] sm:$0xff]
    %v920 = vld [vmem:[%s828 + $0x818] sm:$0xff]
    %v921 = vld [vmem:[%s828 + $0x820] sm:$0xff]
    %v922 = vld [vmem:[%s828 + $0x828] sm:$0xff]
    %v923 = vld [vmem:[%s828 + $0x830] sm:$0xff]
    %v924 = vld [vmem:[%s828 + $0x838] sm:$0xff]
    %v925 = vld [vmem:[%s828 + $0x840] sm:$0xff]
    %v926 = vld [vmem:[%s828 + $0x848] sm:$0xff]
    %v927 = vld [vmem:[%s828 + $0x850] sm:$0xff]
    %v928 = vld [vmem:[%s828 + $0x858] sm:$0xff]
    %v929 = vld [vmem:[%s828 + $0x860] sm:$0xff]
    %v930 = vld [vmem:[%s828 + $0x868] sm:$0xff]
    %v931 = vld [vmem:[%s828 + $0x870] sm:$0xff]
    %v932 = vld [vmem:[%s828 + $0x878] sm:$0xff]
    %v933 = vld [vmem:[%s828 + $0x880] sm:$0xff]
    %v934 = vld [vmem:[%s828 + $0x888] sm:$0xff]
    %v935 = vld [vmem:[%s828 + $0x890] sm:$0xff]
    %v936 = vld [vmem:[%s828 + $0x898] sm:$0xff]
    %v937 = vld [vmem:[%s828 + $0x8a0] sm:$0xff]
    %v938 = vld [vmem:[%s828 + $0x8a8] sm:$0xff]
    %v939 = vld [vmem:[%s828 + $0x8b0] sm:$0xff]
    %v940 = vld [vmem:[%s828 + $0x8b8] sm:$0xff]
    %v941 = vsel %vm226, %v830, 0.0
    %v942 = vadd.f32 %v829, %v941
    %943 = vadd.xlane.f32.xlu0 %v942
    %v944 = vpop.xlane.xlu0 %943
    %v945 = vsel %vm226, %v832, 0.0
    %v946 = vadd.f32 %v831, %v945
    %947 = vadd.xlane.f32.xlu0 %v946
    %v948 = vpop.xlane.xlu0 %947
    %v949 = vsel %vm226, %v834, 0.0
    %v950 = vadd.f32 %v833, %v949
    %951 = vadd.xlane.f32.xlu0 %v950
    %v952 = vpop.xlane.xlu0 %951
    %v953 = vsel %vm226, %v836, 0.0
    %v954 = vadd.f32 %v835, %v953
    %955 = vadd.xlane.f32.xlu0 %v954
    %v956 = vpop.xlane.xlu0 %955
    %v957 = vsel %vm226, %v838, 0.0
    %v958 = vadd.f32 %v837, %v957
    %959 = vadd.xlane.f32.xlu0 %v958
    %v960 = vpop.xlane.xlu0 %959
    %v961 = vsel %vm226, %v840, 0.0
    %v962 = vadd.f32 %v839, %v961
    %963 = vadd.xlane.f32.xlu0 %v962
    %v964 = vpop.xlane.xlu0 %963
    %v965 = vsel %vm226, %v842, 0.0
    %v966 = vadd.f32 %v841, %v965
    %967 = vadd.xlane.f32.xlu0 %v966
    %v968 = vpop.xlane.xlu0 %967
    %v969 = vsel %vm226, %v844, 0.0
    %v970 = vadd.f32 %v843, %v969
    %971 = vadd.xlane.f32.xlu0 %v970
    %v972 = vpop.xlane.xlu0 %971
    %v973 = vsel %vm226, %v846, 0.0
    %v974 = vadd.f32 %v845, %v973
    %975 = vadd.xlane.f32.xlu0 %v974
    %v976 = vpop.xlane.xlu0 %975
    %v977 = vsel %vm226, %v848, 0.0
    %v978 = vadd.f32 %v847, %v977
    %979 = vadd.xlane.f32.xlu0 %v978
    %v980 = vpop.xlane.xlu0 %979
    %v981 = vsel %vm226, %v850, 0.0
    %v982 = vadd.f32 %v849, %v981
    %983 = vadd.xlane.f32.xlu0 %v982
    %v984 = vpop.xlane.xlu0 %983
    %v985 = vsel %vm226, %v852, 0.0
    %v986 = vadd.f32 %v851, %v985
    %987 = vadd.xlane.f32.xlu0 %v986
    %v988 = vpop.xlane.xlu0 %987
    %v989 = vsel %vm226, %v854, 0.0
    %v990 = vadd.f32 %v853, %v989
    %991 = vadd.xlane.f32.xlu0 %v990
    %v992 = vpop.xlane.xlu0 %991
    %v993 = vsel %vm226, %v856, 0.0
    %v994 = vadd.f32 %v855, %v993
    %995 = vadd.xlane.f32.xlu0 %v994
    %v996 = vpop.xlane.xlu0 %995
    %v997 = vsel %vm226, %v858, 0.0
    %v998 = vadd.f32 %v857, %v997
    %999 = vadd.xlane.f32.xlu0 %v998
    %v1000 = vpop.xlane.xlu0 %999
    %v1001 = vsel %vm226, %v860, 0.0
    %v1002 = vadd.f32 %v859, %v1001
    %1003 = vadd.xlane.f32.xlu0 %v1002
    %v1004 = vpop.xlane.xlu0 %1003
    %v1005 = vsel %vm226, %v862, 0.0
    %v1006 = vadd.f32 %v861, %v1005
    %1007 = vadd.xlane.f32.xlu0 %v1006
    %v1008 = vpop.xlane.xlu0 %1007
    %v1009 = vsel %vm226, %v864, 0.0
    %v1010 = vadd.f32 %v863, %v1009
    %1011 = vadd.xlane.f32.xlu0 %v1010
    %v1012 = vpop.xlane.xlu0 %1011
    %v1013 = vsel %vm226, %v866, 0.0
    %v1014 = vadd.f32 %v865, %v1013
    %1015 = vadd.xlane.f32.xlu0 %v1014
    %v1016 = vpop.xlane.xlu0 %1015
    %v1017 = vsel %vm226, %v868, 0.0
    %v1018 = vadd.f32 %v867, %v1017
    %1019 = vadd.xlane.f32.xlu0 %v1018
    %v1020 = vpop.xlane.xlu0 %1019
    %v1021 = vsel %vm226, %v870, 0.0
    %v1022 = vadd.f32 %v869, %v1021
    %1023 = vadd.xlane.f32.xlu0 %v1022
    %v1024 = vpop.xlane.xlu0 %1023
    %v1025 = vsel %vm226, %v872, 0.0
    %v1026 = vadd.f32 %v871, %v1025
    %1027 = vadd.xlane.f32.xlu0 %v1026
    %v1028 = vpop.xlane.xlu0 %1027
    %v1029 = vsel %vm226, %v874, 0.0
    %v1030 = vadd.f32 %v873, %v1029
    %1031 = vadd.xlane.f32.xlu0 %v1030
    %v1032 = vpop.xlane.xlu0 %1031
    %v1033 = vsel %vm226, %v876, 0.0
    %v1034 = vadd.f32 %v875, %v1033
    %1035 = vadd.xlane.f32.xlu0 %v1034
    %v1036 = vpop.xlane.xlu0 %1035
    %v1037 = vsel %vm226, %v878, 0.0
    %v1038 = vadd.f32 %v877, %v1037
    %1039 = vadd.xlane.f32.xlu0 %v1038
    %v1040 = vpop.xlane.xlu0 %1039
    %v1041 = vsel %vm226, %v880, 0.0
    %v1042 = vadd.f32 %v879, %v1041
    %1043 = vadd.xlane.f32.xlu0 %v1042
    %v1044 = vpop.xlane.xlu0 %1043
    %v1045 = vsel %vm226, %v882, 0.0
    %v1046 = vadd.f32 %v881, %v1045
    %1047 = vadd.xlane.f32.xlu0 %v1046
    %v1048 = vpop.xlane.xlu0 %1047
    %v1049 = vsel %vm226, %v884, 0.0
    %v1050 = vadd.f32 %v883, %v1049
    %1051 = vadd.xlane.f32.xlu0 %v1050
    %v1052 = vpop.xlane.xlu0 %1051
    %v1053 = vsel %vm226, %v886, 0.0
    %v1054 = vadd.f32 %v885, %v1053
    %1055 = vadd.xlane.f32.xlu0 %v1054
    %v1056 = vpop.xlane.xlu0 %1055
    %v1057 = vsel %vm226, %v888, 0.0
    %v1058 = vadd.f32 %v887, %v1057
    %1059 = vadd.xlane.f32.xlu0 %v1058
    %v1060 = vpop.xlane.xlu0 %1059
    %v1061 = vsel %vm226, %v890, 0.0
    %v1062 = vadd.f32 %v889, %v1061
    %1063 = vadd.xlane.f32.xlu0 %v1062
    %v1064 = vpop.xlane.xlu0 %1063
    %v1065 = vsel %vm226, %v892, 0.0
    %v1066 = vadd.f32 %v891, %v1065
    %1067 = vadd.xlane.f32.xlu0 %v1066
    %v1068 = vpop.xlane.xlu0 %1067
    %v1069 = vsel %vm226, %v894, 0.0
    %v1070 = vadd.f32 %v893, %v1069
    %1071 = vadd.xlane.f32.xlu0 %v1070
    %v1072 = vpop.xlane.xlu0 %1071
    %v1073 = vsel %vm226, %v896, 0.0
    %v1074 = vadd.f32 %v895, %v1073
    %1075 = vadd.xlane.f32.xlu0 %v1074
    %v1076 = vpop.xlane.xlu0 %1075
    %v1077 = vsel %vm226, %v898, 0.0
    %v1078 = vadd.f32 %v897, %v1077
    %1079 = vadd.xlane.f32.xlu0 %v1078
    %v1080 = vpop.xlane.xlu0 %1079
    %v1081 = vsel %vm226, %v900, 0.0
    %v1082 = vadd.f32 %v899, %v1081
    %1083 = vadd.xlane.f32.xlu0 %v1082
    %v1084 = vpop.xlane.xlu0 %1083
    %v1085 = vsel %vm226, %v902, 0.0
    %v1086 = vadd.f32 %v901, %v1085
    %1087 = vadd.xlane.f32.xlu0 %v1086
    %v1088 = vpop.xlane.xlu0 %1087
    %v1089 = vsel %vm226, %v904, 0.0
    %v1090 = vadd.f32 %v903, %v1089
    %1091 = vadd.xlane.f32.xlu0 %v1090
    %v1092 = vpop.xlane.xlu0 %1091
    %v1093 = vsel %vm226, %v906, 0.0
    %v1094 = vadd.f32 %v905, %v1093
    %1095 = vadd.xlane.f32.xlu0 %v1094
    %v1096 = vpop.xlane.xlu0 %1095
    %v1097 = vsel %vm226, %v908, 0.0
    %v1098 = vadd.f32 %v907, %v1097
    %1099 = vadd.xlane.f32.xlu0 %v1098
    %v1100 = vpop.xlane.xlu0 %1099
    %v1101 = vsel %vm226, %v910, 0.0
    %v1102 = vadd.f32 %v909, %v1101
    %1103 = vadd.xlane.f32.xlu0 %v1102
    %v1104 = vpop.xlane.xlu0 %1103
    %v1105 = vsel %vm226, %v912, 0.0
    %v1106 = vadd.f32 %v911, %v1105
    %1107 = vadd.xlane.f32.xlu0 %v1106
    %v1108 = vpop.xlane.xlu0 %1107
    %v1109 = vsel %vm226, %v914, 0.0
    %v1110 = vadd.f32 %v913, %v1109
    %1111 = vadd.xlane.f32.xlu0 %v1110
    %v1112 = vpop.xlane.xlu0 %1111
    %v1113 = vsel %vm226, %v916, 0.0
    %v1114 = vadd.f32 %v915, %v1113
    %1115 = vadd.xlane.f32.xlu0 %v1114
    %v1116 = vpop.xlane.xlu0 %1115
    %v1117 = vsel %vm226, %v918, 0.0
    %v1118 = vadd.f32 %v917, %v1117
    %1119 = vadd.xlane.f32.xlu0 %v1118
    %v1120 = vpop.xlane.xlu0 %1119
    %v1121 = vsel %vm226, %v920, 0.0
    %v1122 = vadd.f32 %v919, %v1121
    %1123 = vadd.xlane.f32.xlu0 %v1122
    %v1124 = vpop.xlane.xlu0 %1123
    %v1125 = vsel %vm226, %v922, 0.0
    %v1126 = vadd.f32 %v921, %v1125
    %1127 = vadd.xlane.f32.xlu0 %v1126
    %v1128 = vpop.xlane.xlu0 %1127
    %v1129 = vsel %vm226, %v924, 0.0
    %v1130 = vadd.f32 %v923, %v1129
    %1131 = vadd.xlane.f32.xlu0 %v1130
    %v1132 = vpop.xlane.xlu0 %1131
    %v1133 = vsel %vm226, %v926, 0.0
    %v1134 = vadd.f32 %v925, %v1133
    %1135 = vadd.xlane.f32.xlu0 %v1134
    %v1136 = vpop.xlane.xlu0 %1135
    %v1137 = vsel %vm226, %v928, 0.0
    %v1138 = vadd.f32 %v927, %v1137
    %1139 = vadd.xlane.f32.xlu0 %v1138
    %v1140 = vpop.xlane.xlu0 %1139
    %v1141 = vsel %vm226, %v930, 0.0
    %v1142 = vadd.f32 %v929, %v1141
    %1143 = vadd.xlane.f32.xlu0 %v1142
    %v1144 = vpop.xlane.xlu0 %1143
    %v1145 = vsel %vm226, %v932, 0.0
    %v1146 = vadd.f32 %v931, %v1145
    %1147 = vadd.xlane.f32.xlu0 %v1146
    %v1148 = vpop.xlane.xlu0 %1147
    %v1149 = vsel %vm226, %v934, 0.0
    %v1150 = vadd.f32 %v933, %v1149
    %1151 = vadd.xlane.f32.xlu0 %v1150
    %v1152 = vpop.xlane.xlu0 %1151
    %v1153 = vsel %vm226, %v936, 0.0
    %v1154 = vadd.f32 %v935, %v1153
    %1155 = vadd.xlane.f32.xlu0 %v1154
    %v1156 = vpop.xlane.xlu0 %1155
    %v1157 = vsel %vm226, %v938, 0.0
    %v1158 = vadd.f32 %v937, %v1157
    %1159 = vadd.xlane.f32.xlu0 %v1158
    %v1160 = vpop.xlane.xlu0 %1159
    %v1161 = vsel %vm226, %v940, 0.0
    %v1162 = vadd.f32 %v939, %v1161
    %1163 = vadd.xlane.f32.xlu0 %v1162
    %v1164 = vpop.xlane.xlu0 %1163
    %v1221 = vlaneseq
    %v1222 = vshrl.u32 %v1221, 7
    %v1223 = vsub.s32 %v508, %v1222
    %v1224 = vrot.slane %v944, %v1223
    %v1225 = vlaneseq
    %v1226 = vshrl.u32 %v1225, 7
    %v1227 = vsub.s32 %v513, %v1226
    %v1228 = vrot.slane %v948, %v1227
    %v1229 = vsel %vm518, %v1228, %v1224
    %v1230 = vlaneseq
    %v1231 = vshrl.u32 %v1230, 7
    %v1232 = vsub.s32 %v520, %v1231
    %v1233 = vrot.slane %v952, %v1232
    %v1234 = vsel %vm525, %v1233, %v1229
    %v1235 = vlaneseq
    %v1236 = vshrl.u32 %v1235, 7
    %v1237 = vsub.s32 %v527, %v1236
    %v1238 = vrot.slane %v956, %v1237
    %v1239 = vsel %vm532, %v1238, %v1234
    %v1240 = vlaneseq
    %v1241 = vshrl.u32 %v1240, 7
    %v1242 = vsub.s32 %v534, %v1241
    %v1243 = vrot.slane %v960, %v1242
    %v1244 = vsel %vm539, %v1243, %v1239
    %v1245 = vlaneseq
    %v1246 = vshrl.u32 %v1245, 7
    %v1247 = vsub.s32 %v541, %v1246
    %v1248 = vrot.slane %v964, %v1247
    %v1249 = vsel %vm546, %v1248, %v1244
    %v1250 = vlaneseq
    %v1251 = vshrl.u32 %v1250, 7
    %v1252 = vsub.s32 %v548, %v1251
    %v1253 = vrot.slane %v968, %v1252
    %v1254 = vsel %vm553, %v1253, %v1249
    %v1255 = vlaneseq
    %v1256 = vshrl.u32 %v1255, 7
    %v1257 = vsub.s32 %v555, %v1256
    %v1258 = vrot.slane %v972, %v1257
    %v1259 = vsel %vm560, %v1258, %v1254
    %v1260 = vlaneseq
    %v1261 = vshrl.u32 %v1260, 7
    %v1262 = vsub.s32 %v562, %v1261
    %v1263 = vrot.slane %v976, %v1262
    %v1264 = vsel %vm567, %v1263, %v1259
    %v1265 = vlaneseq
    %v1266 = vshrl.u32 %v1265, 7
    %v1267 = vsub.s32 %v569, %v1266
    %v1268 = vrot.slane %v980, %v1267
    %v1269 = vsel %vm574, %v1268, %v1264
    %v1270 = vlaneseq
    %v1271 = vshrl.u32 %v1270, 7
    %v1272 = vsub.s32 %v576, %v1271
    %v1273 = vrot.slane %v984, %v1272
    %v1274 = vsel %vm581, %v1273, %v1269
    %v1275 = vlaneseq
    %v1276 = vshrl.u32 %v1275, 7
    %v1277 = vsub.s32 %v583, %v1276
    %v1278 = vrot.slane %v988, %v1277
    %v1279 = vsel %vm588, %v1278, %v1274
    %v1280 = vlaneseq
    %v1281 = vshrl.u32 %v1280, 7
    %v1282 = vsub.s32 %v590, %v1281
    %v1283 = vrot.slane %v992, %v1282
    %v1284 = vsel %vm595, %v1283, %v1279
    %v1285 = vlaneseq
    %v1286 = vshrl.u32 %v1285, 7
    %v1287 = vsub.s32 %v597, %v1286
    %v1288 = vrot.slane %v996, %v1287
    %v1289 = vsel %vm602, %v1288, %v1284
    %v1290 = vlaneseq
    %v1291 = vshrl.u32 %v1290, 7
    %v1292 = vsub.s32 %v604, %v1291
    %v1293 = vrot.slane %v1000, %v1292
    %v1294 = vsel %vm609, %v1293, %v1289
    %v1295 = vlaneseq
    %v1296 = vshrl.u32 %v1295, 7
    %v1297 = vsub.s32 %v611, %v1296
    %v1298 = vrot.slane %v1004, %v1297
    %v1299 = vsel %vm616, %v1298, %v1294
    %v1300 = vlaneseq
    %v1301 = vshrl.u32 %v1300, 7
    %v1302 = vsub.s32 %v508, %v1301
    %v1303 = vrot.slane %v1008, %v1302
    %v1304 = vlaneseq
    %v1305 = vshrl.u32 %v1304, 7
    %v1306 = vsub.s32 %v513, %v1305
    %v1307 = vrot.slane %v1012, %v1306
    %v1308 = vsel %vm518, %v1307, %v1303
    %v1309 = vlaneseq
    %v1310 = vshrl.u32 %v1309, 7
    %v1311 = vsub.s32 %v520, %v1310
    %v1312 = vrot.slane %v1016, %v1311
    %v1313 = vsel %vm525, %v1312, %v1308
    %v1314 = vlaneseq
    %v1315 = vshrl.u32 %v1314, 7
    %v1316 = vsub.s32 %v527, %v1315
    %v1317 = vrot.slane %v1020, %v1316
    %v1318 = vsel %vm532, %v1317, %v1313
    %v1319 = vlaneseq
    %v1320 = vshrl.u32 %v1319, 7
    %v1321 = vsub.s32 %v534, %v1320
    %v1322 = vrot.slane %v1024, %v1321
    %v1323 = vsel %vm539, %v1322, %v1318
    %v1324 = vlaneseq
    %v1325 = vshrl.u32 %v1324, 7
    %v1326 = vsub.s32 %v541, %v1325
    %v1327 = vrot.slane %v1028, %v1326
    %v1328 = vsel %vm546, %v1327, %v1323
    %v1329 = vlaneseq
    %v1330 = vshrl.u32 %v1329, 7
    %v1331 = vsub.s32 %v548, %v1330
    %v1332 = vrot.slane %v1032, %v1331
    %v1333 = vsel %vm553, %v1332, %v1328
    %v1334 = vlaneseq
    %v1335 = vshrl.u32 %v1334, 7
    %v1336 = vsub.s32 %v555, %v1335
    %v1337 = vrot.slane %v1036, %v1336
    %v1338 = vsel %vm560, %v1337, %v1333
    %v1339 = vlaneseq
    %v1340 = vshrl.u32 %v1339, 7
    %v1341 = vsub.s32 %v562, %v1340
    %v1342 = vrot.slane %v1040, %v1341
    %v1343 = vsel %vm567, %v1342, %v1338
    %v1344 = vlaneseq
    %v1345 = vshrl.u32 %v1344, 7
    %v1346 = vsub.s32 %v569, %v1345
    %v1347 = vrot.slane %v1044, %v1346
    %v1348 = vsel %vm574, %v1347, %v1343
    %v1349 = vlaneseq
    %v1350 = vshrl.u32 %v1349, 7
    %v1351 = vsub.s32 %v576, %v1350
    %v1352 = vrot.slane %v1048, %v1351
    %v1353 = vsel %vm581, %v1352, %v1348
    %v1354 = vlaneseq
    %v1355 = vshrl.u32 %v1354, 7
    %v1356 = vsub.s32 %v583, %v1355
    %v1357 = vrot.slane %v1052, %v1356
    %v1358 = vsel %vm588, %v1357, %v1353
    %v1359 = vlaneseq
    %v1360 = vshrl.u32 %v1359, 7
    %v1361 = vsub.s32 %v508, %v1360
    %v1362 = vrot.slane %v1056, %v1361
    %v1363 = vlaneseq
    %v1364 = vshrl.u32 %v1363, 7
    %v1365 = vsub.s32 %v513, %v1364
    %v1366 = vrot.slane %v1060, %v1365
    %v1367 = vsel %vm518, %v1366, %v1362
    %v1368 = vlaneseq
    %v1369 = vshrl.u32 %v1368, 7
    %v1370 = vsub.s32 %v520, %v1369
    %v1371 = vrot.slane %v1064, %v1370
    %v1372 = vsel %vm525, %v1371, %v1367
    %v1373 = vlaneseq
    %v1374 = vshrl.u32 %v1373, 7
    %v1375 = vsub.s32 %v527, %v1374
    %v1376 = vrot.slane %v1068, %v1375
    %v1377 = vsel %vm532, %v1376, %v1372
    %v1378 = vlaneseq
    %v1379 = vshrl.u32 %v1378, 7
    %v1380 = vsub.s32 %v534, %v1379
    %v1381 = vrot.slane %v1072, %v1380
    %v1382 = vsel %vm539, %v1381, %v1377
    %v1383 = vlaneseq
    %v1384 = vshrl.u32 %v1383, 7
    %v1385 = vsub.s32 %v541, %v1384
    %v1386 = vrot.slane %v1076, %v1385
    %v1387 = vsel %vm546, %v1386, %v1382
    %v1388 = vlaneseq
    %v1389 = vshrl.u32 %v1388, 7
    %v1390 = vsub.s32 %v548, %v1389
    %v1391 = vrot.slane %v1080, %v1390
    %v1392 = vsel %vm553, %v1391, %v1387
    %v1393 = vlaneseq
    %v1394 = vshrl.u32 %v1393, 7
    %v1395 = vsub.s32 %v555, %v1394
    %v1396 = vrot.slane %v1084, %v1395
    %v1397 = vsel %vm560, %v1396, %v1392
    %v1398 = vlaneseq
    %v1399 = vshrl.u32 %v1398, 7
    %v1400 = vsub.s32 %v562, %v1399
    %v1401 = vrot.slane %v1088, %v1400
    %v1402 = vsel %vm567, %v1401, %v1397
    %v1403 = vlaneseq
    %v1404 = vshrl.u32 %v1403, 7
    %v1405 = vsub.s32 %v569, %v1404
    %v1406 = vrot.slane %v1092, %v1405
    %v1407 = vsel %vm574, %v1406, %v1402
    %v1408 = vlaneseq
    %v1409 = vshrl.u32 %v1408, 7
    %v1410 = vsub.s32 %v576, %v1409
    %v1411 = vrot.slane %v1096, %v1410
    %v1412 = vsel %vm581, %v1411, %v1407
    %v1413 = vlaneseq
    %v1414 = vshrl.u32 %v1413, 7
    %v1415 = vsub.s32 %v583, %v1414
    %v1416 = vrot.slane %v1100, %v1415
    %v1417 = vsel %vm588, %v1416, %v1412
    %v1418 = vlaneseq
    %v1419 = vshrl.u32 %v1418, 7
    %v1420 = vsub.s32 %v590, %v1419
    %v1421 = vrot.slane %v1104, %v1420
    %v1422 = vsel %vm595, %v1421, %v1417
    %v1423 = vlaneseq
    %v1424 = vshrl.u32 %v1423, 7
    %v1425 = vsub.s32 %v597, %v1424
    %v1426 = vrot.slane %v1108, %v1425
    %v1427 = vsel %vm602, %v1426, %v1422
    %v1428 = vlaneseq
    %v1429 = vshrl.u32 %v1428, 7
    %v1430 = vsub.s32 %v604, %v1429
    %v1431 = vrot.slane %v1112, %v1430
    %v1432 = vsel %vm609, %v1431, %v1427
    %v1433 = vlaneseq
    %v1434 = vshrl.u32 %v1433, 7
    %v1435 = vsub.s32 %v611, %v1434
    %v1436 = vrot.slane %v1116, %v1435
    %v1437 = vsel %vm616, %v1436, %v1432
    %v1438 = vlaneseq
    %v1439 = vshrl.u32 %v1438, 7
    %v1440 = vsub.s32 %v508, %v1439
    %v1441 = vrot.slane %v1120, %v1440
    %v1442 = vlaneseq
    %v1443 = vshrl.u32 %v1442, 7
    %v1444 = vsub.s32 %v513, %v1443
    %v1445 = vrot.slane %v1124, %v1444
    %v1446 = vsel %vm518, %v1445, %v1441
    %v1447 = vlaneseq
    %v1448 = vshrl.u32 %v1447, 7
    %v1449 = vsub.s32 %v520, %v1448
    %v1450 = vrot.slane %v1128, %v1449
    %v1451 = vsel %vm525, %v1450, %v1446
    %v1452 = vlaneseq
    %v1453 = vshrl.u32 %v1452, 7
    %v1454 = vsub.s32 %v527, %v1453
    %v1455 = vrot.slane %v1132, %v1454
    %v1456 = vsel %vm532, %v1455, %v1451
    %v1457 = vlaneseq
    %v1458 = vshrl.u32 %v1457, 7
    %v1459 = vsub.s32 %v534, %v1458
    %v1460 = vrot.slane %v1136, %v1459
    %v1461 = vsel %vm539, %v1460, %v1456
    %v1462 = vlaneseq
    %v1463 = vshrl.u32 %v1462, 7
    %v1464 = vsub.s32 %v541, %v1463
    %v1465 = vrot.slane %v1140, %v1464
    %v1466 = vsel %vm546, %v1465, %v1461
    %v1467 = vlaneseq
    %v1468 = vshrl.u32 %v1467, 7
    %v1469 = vsub.s32 %v548, %v1468
    %v1470 = vrot.slane %v1144, %v1469
    %v1471 = vsel %vm553, %v1470, %v1466
    %v1472 = vlaneseq
    %v1473 = vshrl.u32 %v1472, 7
    %v1474 = vsub.s32 %v555, %v1473
    %v1475 = vrot.slane %v1148, %v1474
    %v1476 = vsel %vm560, %v1475, %v1471
    %v1477 = vlaneseq
    %v1478 = vshrl.u32 %v1477, 7
    %v1479 = vsub.s32 %v562, %v1478
    %v1480 = vrot.slane %v1152, %v1479
    %v1481 = vsel %vm567, %v1480, %v1476
    %v1482 = vlaneseq
    %v1483 = vshrl.u32 %v1482, 7
    %v1484 = vsub.s32 %v569, %v1483
    %v1485 = vrot.slane %v1156, %v1484
    %v1486 = vsel %vm574, %v1485, %v1481
    %v1487 = vlaneseq
    %v1488 = vshrl.u32 %v1487, 7
    %v1489 = vsub.s32 %v576, %v1488
    %v1490 = vrot.slane %v1160, %v1489
    %v1491 = vsel %vm581, %v1490, %v1486
    %v1492 = vlaneseq
    %v1493 = vshrl.u32 %v1492, 7
    %v1494 = vsub.s32 %v583, %v1493
    %v1495 = vrot.slane %v1164, %v1494
    %v1496 = vsel %vm588, %v1495, %v1491
    %v1497 = vsel %vm815, %v1437, %v1299
    %v1498 = vsel %vm815, %v1496, %v1358
    %v1501 = vsel %vm820, %v1497, 0.0
    %v1502 = vsel %vm822, %v1498, 0.0
    %v1503 = vadd.f32 %v1501, %v1502
    %1504 = vadd.xlane.f32.xlu0 %v1503
    %v1505 = vpop.xlane.xlu0 %1504
    %v1506 = vmul.f32 %v1505, 1.9929847e-05
    %s1507 = scalar_lea.vmem [#allocation2], 896
    %v1508 = vld [vmem:[%s1507] sm:$0xff]
    %v1509 = vld [vmem:[%s1507 + $0x8] sm:$0xff]
    %v1510 = vld [vmem:[%s1507 + $0x10] sm:$0xff]
    %v1511 = vld [vmem:[%s1507 + $0x18] sm:$0xff]
    %v1512 = vld [vmem:[%s1507 + $0x20] sm:$0xff]
    %v1513 = vld [vmem:[%s1507 + $0x28] sm:$0xff]
    %v1514 = vld [vmem:[%s1507 + $0x30] sm:$0xff]
    %v1515 = vld [vmem:[%s1507 + $0x38] sm:$0xff]
    %v1516 = vld [vmem:[%s1507 + $0x40] sm:$0xff]
    %v1517 = vld [vmem:[%s1507 + $0x48] sm:$0xff]
    %v1518 = vld [vmem:[%s1507 + $0x50] sm:$0xff]
    %v1519 = vld [vmem:[%s1507 + $0x58] sm:$0xff]
    %v1520 = vld [vmem:[%s1507 + $0x60] sm:$0xff]
    %v1521 = vld [vmem:[%s1507 + $0x68] sm:$0xff]
    %v1522 = vld [vmem:[%s1507 + $0x70] sm:$0xff]
    %v1523 = vld [vmem:[%s1507 + $0x78] sm:$0xff]
    %v1524 = vld [vmem:[%s1507 + $0x80] sm:$0xff]
    %v1525 = vld [vmem:[%s1507 + $0x88] sm:$0xff]
    %v1526 = vld [vmem:[%s1507 + $0x90] sm:$0xff]
    %v1527 = vld [vmem:[%s1507 + $0x98] sm:$0xff]
    %v1528 = vld [vmem:[%s1507 + $0xa0] sm:$0xff]
    %v1529 = vld [vmem:[%s1507 + $0xa8] sm:$0xff]
    %v1530 = vld [vmem:[%s1507 + $0xb0] sm:$0xff]
    %v1531 = vld [vmem:[%s1507 + $0xb8] sm:$0xff]
    %v1532 = vld [vmem:[%s1507 + $0xc0] sm:$0xff]
    %v1533 = vld [vmem:[%s1507 + $0xc8] sm:$0xff]
    %v1534 = vld [vmem:[%s1507 + $0xd0] sm:$0xff]
    %v1535 = vld [vmem:[%s1507 + $0xd8] sm:$0xff]
    %v1536 = vld [vmem:[%s1507 + $0xe0] sm:$0xff]
    %v1537 = vld [vmem:[%s1507 + $0xe8] sm:$0xff]
    %v1538 = vld [vmem:[%s1507 + $0xf0] sm:$0xff]
    %v1539 = vld [vmem:[%s1507 + $0xf8] sm:$0xff]
    %v1540 = vld [vmem:[%s1507 + $0x100] sm:$0xff]
    %v1541 = vld [vmem:[%s1507 + $0x108] sm:$0xff]
    %v1542 = vld [vmem:[%s1507 + $0x110] sm:$0xff]
    %v1543 = vld [vmem:[%s1507 + $0x118] sm:$0xff]
    %v1544 = vld [vmem:[%s1507 + $0x120] sm:$0xff]
    %v1545 = vld [vmem:[%s1507 + $0x128] sm:$0xff]
    %v1546 = vld [vmem:[%s1507 + $0x130] sm:$0xff]
    %v1547 = vld [vmem:[%s1507 + $0x138] sm:$0xff]
    %v1548 = vld [vmem:[%s1507 + $0x140] sm:$0xff]
    %v1549 = vld [vmem:[%s1507 + $0x148] sm:$0xff]
    %v1550 = vld [vmem:[%s1507 + $0x150] sm:$0xff]
    %v1551 = vld [vmem:[%s1507 + $0x158] sm:$0xff]
    %v1552 = vld [vmem:[%s1507 + $0x160] sm:$0xff]
    %v1553 = vld [vmem:[%s1507 + $0x168] sm:$0xff]
    %v1554 = vld [vmem:[%s1507 + $0x170] sm:$0xff]
    %v1555 = vld [vmem:[%s1507 + $0x178] sm:$0xff]
    %v1556 = vld [vmem:[%s1507 + $0x180] sm:$0xff]
    %v1557 = vld [vmem:[%s1507 + $0x188] sm:$0xff]
    %v1558 = vld [vmem:[%s1507 + $0x190] sm:$0xff]
    %v1559 = vld [vmem:[%s1507 + $0x198] sm:$0xff]
    %v1560 = vld [vmem:[%s1507 + $0x1a0] sm:$0xff]
    %v1561 = vld [vmem:[%s1507 + $0x1a8] sm:$0xff]
    %v1562 = vld [vmem:[%s1507 + $0x1b0] sm:$0xff]
    %v1563 = vld [vmem:[%s1507 + $0x1b8] sm:$0xff]
    %v1564 = vld [vmem:[%s1507 + $0x700] sm:$0xff]
    %v1565 = vld [vmem:[%s1507 + $0x708] sm:$0xff]
    %v1566 = vld [vmem:[%s1507 + $0x710] sm:$0xff]
    %v1567 = vld [vmem:[%s1507 + $0x718] sm:$0xff]
    %v1568 = vld [vmem:[%s1507 + $0x720] sm:$0xff]
    %v1569 = vld [vmem:[%s1507 + $0x728] sm:$0xff]
    %v1570 = vld [vmem:[%s1507 + $0x730] sm:$0xff]
    %v1571 = vld [vmem:[%s1507 + $0x738] sm:$0xff]
    %v1572 = vld [vmem:[%s1507 + $0x740] sm:$0xff]
    %v1573 = vld [vmem:[%s1507 + $0x748] sm:$0xff]
    %v1574 = vld [vmem:[%s1507 + $0x750] sm:$0xff]
    %v1575 = vld [vmem:[%s1507 + $0x758] sm:$0xff]
    %v1576 = vld [vmem:[%s1507 + $0x760] sm:$0xff]
    %v1577 = vld [vmem:[%s1507 + $0x768] sm:$0xff]
    %v1578 = vld [vmem:[%s1507 + $0x770] sm:$0xff]
    %v1579 = vld [vmem:[%s1507 + $0x778] sm:$0xff]
    %v1580 = vld [vmem:[%s1507 + $0x780] sm:$0xff]
    %v1581 = vld [vmem:[%s1507 + $0x788] sm:$0xff]
    %v1582 = vld [vmem:[%s1507 + $0x790] sm:$0xff]
    %v1583 = vld [vmem:[%s1507 + $0x798] sm:$0xff]
    %v1584 = vld [vmem:[%s1507 + $0x7a0] sm:$0xff]
    %v1585 = vld [vmem:[%s1507 + $0x7a8] sm:$0xff]
    %v1586 = vld [vmem:[%s1507 + $0x7b0] sm:$0xff]
    %v1587 = vld [vmem:[%s1507 + $0x7b8] sm:$0xff]
    %v1588 = vld [vmem:[%s1507 + $0x7c0] sm:$0xff]
    %v1589 = vld [vmem:[%s1507 + $0x7c8] sm:$0xff]
    %v1590 = vld [vmem:[%s1507 + $0x7d0] sm:$0xff]
    %v1591 = vld [vmem:[%s1507 + $0x7d8] sm:$0xff]
    %v1592 = vld [vmem:[%s1507 + $0x7e0] sm:$0xff]
    %v1593 = vld [vmem:[%s1507 + $0x7e8] sm:$0xff]
    %v1594 = vld [vmem:[%s1507 + $0x7f0] sm:$0xff]
    %v1595 = vld [vmem:[%s1507 + $0x7f8] sm:$0xff]
    %v1596 = vld [vmem:[%s1507 + $0x800] sm:$0xff]
    %v1597 = vld [vmem:[%s1507 + $0x808] sm:$0xff]
    %v1598 = vld [vmem:[%s1507 + $0x810] sm:$0xff]
    %v1599 = vld [vmem:[%s1507 + $0x818] sm:$0xff]
    %v1600 = vld [vmem:[%s1507 + $0x820] sm:$0xff]
    %v1601 = vld [vmem:[%s1507 + $0x828] sm:$0xff]
    %v1602 = vld [vmem:[%s1507 + $0x830] sm:$0xff]
    %v1603 = vld [vmem:[%s1507 + $0x838] sm:$0xff]
    %v1604 = vld [vmem:[%s1507 + $0x840] sm:$0xff]
    %v1605 = vld [vmem:[%s1507 + $0x848] sm:$0xff]
    %v1606 = vld [vmem:[%s1507 + $0x850] sm:$0xff]
    %v1607 = vld [vmem:[%s1507 + $0x858] sm:$0xff]
    %v1608 = vld [vmem:[%s1507 + $0x860] sm:$0xff]
    %v1609 = vld [vmem:[%s1507 + $0x868] sm:$0xff]
    %v1610 = vld [vmem:[%s1507 + $0x870] sm:$0xff]
    %v1611 = vld [vmem:[%s1507 + $0x878] sm:$0xff]
    %v1612 = vld [vmem:[%s1507 + $0x880] sm:$0xff]
    %v1613 = vld [vmem:[%s1507 + $0x888] sm:$0xff]
    %v1614 = vld [vmem:[%s1507 + $0x890] sm:$0xff]
    %v1615 = vld [vmem:[%s1507 + $0x898] sm:$0xff]
    %v1616 = vld [vmem:[%s1507 + $0x8a0] sm:$0xff]
    %v1617 = vld [vmem:[%s1507 + $0x8a8] sm:$0xff]
    %v1618 = vld [vmem:[%s1507 + $0x8b0] sm:$0xff]
    %v1619 = vld [vmem:[%s1507 + $0x8b8] sm:$0xff]
    %v1620 = vsel %vm226, %v1509, 0.0
    %v1621 = vadd.f32 %v1508, %v1620
    %1622 = vadd.xlane.f32.xlu0 %v1621
    %v1623 = vpop.xlane.xlu0 %1622
    %v1624 = vsel %vm226, %v1511, 0.0
    %v1625 = vadd.f32 %v1510, %v1624
    %1626 = vadd.xlane.f32.xlu0 %v1625
    %v1627 = vpop.xlane.xlu0 %1626
    %v1628 = vsel %vm226, %v1513, 0.0
    %v1629 = vadd.f32 %v1512, %v1628
    %1630 = vadd.xlane.f32.xlu0 %v1629
    %v1631 = vpop.xlane.xlu0 %1630
    %v1632 = vsel %vm226, %v1515, 0.0
    %v1633 = vadd.f32 %v1514, %v1632
    %1634 = vadd.xlane.f32.xlu0 %v1633
    %v1635 = vpop.xlane.xlu0 %1634
    %v1636 = vsel %vm226, %v1517, 0.0
    %v1637 = vadd.f32 %v1516, %v1636
    %1638 = vadd.xlane.f32.xlu0 %v1637
    %v1639 = vpop.xlane.xlu0 %1638
    %v1640 = vsel %vm226, %v1519, 0.0
    %v1641 = vadd.f32 %v1518, %v1640
    %1642 = vadd.xlane.f32.xlu0 %v1641
    %v1643 = vpop.xlane.xlu0 %1642
    %v1644 = vsel %vm226, %v1521, 0.0
    %v1645 = vadd.f32 %v1520, %v1644
    %1646 = vadd.xlane.f32.xlu0 %v1645
    %v1647 = vpop.xlane.xlu0 %1646
    %v1648 = vsel %vm226, %v1523, 0.0
    %v1649 = vadd.f32 %v1522, %v1648
    %1650 = vadd.xlane.f32.xlu0 %v1649
    %v1651 = vpop.xlane.xlu0 %1650
    %v1652 = vsel %vm226, %v1525, 0.0
    %v1653 = vadd.f32 %v1524, %v1652
    %1654 = vadd.xlane.f32.xlu0 %v1653
    %v1655 = vpop.xlane.xlu0 %1654
    %v1656 = vsel %vm226, %v1527, 0.0
    %v1657 = vadd.f32 %v1526, %v1656
    %1658 = vadd.xlane.f32.xlu0 %v1657
    %v1659 = vpop.xlane.xlu0 %1658
    %v1660 = vsel %vm226, %v1529, 0.0
    %v1661 = vadd.f32 %v1528, %v1660
    %1662 = vadd.xlane.f32.xlu0 %v1661
    %v1663 = vpop.xlane.xlu0 %1662
    %v1664 = vsel %vm226, %v1531, 0.0
    %v1665 = vadd.f32 %v1530, %v1664
    %1666 = vadd.xlane.f32.xlu0 %v1665
    %v1667 = vpop.xlane.xlu0 %1666
    %v1668 = vsel %vm226, %v1533, 0.0
    %v1669 = vadd.f32 %v1532, %v1668
    %1670 = vadd.xlane.f32.xlu0 %v1669
    %v1671 = vpop.xlane.xlu0 %1670
    %v1672 = vsel %vm226, %v1535, 0.0
    %v1673 = vadd.f32 %v1534, %v1672
    %1674 = vadd.xlane.f32.xlu0 %v1673
    %v1675 = vpop.xlane.xlu0 %1674
    %v1676 = vsel %vm226, %v1537, 0.0
    %v1677 = vadd.f32 %v1536, %v1676
    %1678 = vadd.xlane.f32.xlu0 %v1677
    %v1679 = vpop.xlane.xlu0 %1678
    %v1680 = vsel %vm226, %v1539, 0.0
    %v1681 = vadd.f32 %v1538, %v1680
    %1682 = vadd.xlane.f32.xlu0 %v1681
    %v1683 = vpop.xlane.xlu0 %1682
    %v1684 = vsel %vm226, %v1541, 0.0
    %v1685 = vadd.f32 %v1540, %v1684
    %1686 = vadd.xlane.f32.xlu0 %v1685
    %v1687 = vpop.xlane.xlu0 %1686
    %v1688 = vsel %vm226, %v1543, 0.0
    %v1689 = vadd.f32 %v1542, %v1688
    %1690 = vadd.xlane.f32.xlu0 %v1689
    %v1691 = vpop.xlane.xlu0 %1690
    %v1692 = vsel %vm226, %v1545, 0.0
    %v1693 = vadd.f32 %v1544, %v1692
    %1694 = vadd.xlane.f32.xlu0 %v1693
    %v1695 = vpop.xlane.xlu0 %1694
    %v1696 = vsel %vm226, %v1547, 0.0
    %v1697 = vadd.f32 %v1546, %v1696
    %1698 = vadd.xlane.f32.xlu0 %v1697
    %v1699 = vpop.xlane.xlu0 %1698
    %v1700 = vsel %vm226, %v1549, 0.0
    %v1701 = vadd.f32 %v1548, %v1700
    %1702 = vadd.xlane.f32.xlu0 %v1701
    %v1703 = vpop.xlane.xlu0 %1702
    %v1704 = vsel %vm226, %v1551, 0.0
    %v1705 = vadd.f32 %v1550, %v1704
    %1706 = vadd.xlane.f32.xlu0 %v1705
    %v1707 = vpop.xlane.xlu0 %1706
    %v1708 = vsel %vm226, %v1553, 0.0
    %v1709 = vadd.f32 %v1552, %v1708
    %1710 = vadd.xlane.f32.xlu0 %v1709
    %v1711 = vpop.xlane.xlu0 %1710
    %v1712 = vsel %vm226, %v1555, 0.0
    %v1713 = vadd.f32 %v1554, %v1712
    %1714 = vadd.xlane.f32.xlu0 %v1713
    %v1715 = vpop.xlane.xlu0 %1714
    %v1716 = vsel %vm226, %v1557, 0.0
    %v1717 = vadd.f32 %v1556, %v1716
    %1718 = vadd.xlane.f32.xlu0 %v1717
    %v1719 = vpop.xlane.xlu0 %1718
    %v1720 = vsel %vm226, %v1559, 0.0
    %v1721 = vadd.f32 %v1558, %v1720
    %1722 = vadd.xlane.f32.xlu0 %v1721
    %v1723 = vpop.xlane.xlu0 %1722
    %v1724 = vsel %vm226, %v1561, 0.0
    %v1725 = vadd.f32 %v1560, %v1724
    %1726 = vadd.xlane.f32.xlu0 %v1725
    %v1727 = vpop.xlane.xlu0 %1726
    %v1728 = vsel %vm226, %v1563, 0.0
    %v1729 = vadd.f32 %v1562, %v1728
    %1730 = vadd.xlane.f32.xlu0 %v1729
    %v1731 = vpop.xlane.xlu0 %1730
    %v1732 = vsel %vm226, %v1565, 0.0
    %v1733 = vadd.f32 %v1564, %v1732
    %1734 = vadd.xlane.f32.xlu0 %v1733
    %v1735 = vpop.xlane.xlu0 %1734
    %v1736 = vsel %vm226, %v1567, 0.0
    %v1737 = vadd.f32 %v1566, %v1736
    %1738 = vadd.xlane.f32.xlu0 %v1737
    %v1739 = vpop.xlane.xlu0 %1738
    %v1740 = vsel %vm226, %v1569, 0.0
    %v1741 = vadd.f32 %v1568, %v1740
    %1742 = vadd.xlane.f32.xlu0 %v1741
    %v1743 = vpop.xlane.xlu0 %1742
    %v1744 = vsel %vm226, %v1571, 0.0
    %v1745 = vadd.f32 %v1570, %v1744
    %1746 = vadd.xlane.f32.xlu0 %v1745
    %v1747 = vpop.xlane.xlu0 %1746
    %v1748 = vsel %vm226, %v1573, 0.0
    %v1749 = vadd.f32 %v1572, %v1748
    %1750 = vadd.xlane.f32.xlu0 %v1749
    %v1751 = vpop.xlane.xlu0 %1750
    %v1752 = vsel %vm226, %v1575, 0.0
    %v1753 = vadd.f32 %v1574, %v1752
    %1754 = vadd.xlane.f32.xlu0 %v1753
    %v1755 = vpop.xlane.xlu0 %1754
    %v1756 = vsel %vm226, %v1577, 0.0
    %v1757 = vadd.f32 %v1576, %v1756
    %1758 = vadd.xlane.f32.xlu0 %v1757
    %v1759 = vpop.xlane.xlu0 %1758
    %v1760 = vsel %vm226, %v1579, 0.0
    %v1761 = vadd.f32 %v1578, %v1760
    %1762 = vadd.xlane.f32.xlu0 %v1761
    %v1763 = vpop.xlane.xlu0 %1762
    %v1764 = vsel %vm226, %v1581, 0.0
    %v1765 = vadd.f32 %v1580, %v1764
    %1766 = vadd.xlane.f32.xlu0 %v1765
    %v1767 = vpop.xlane.xlu0 %1766
    %v1768 = vsel %vm226, %v1583, 0.0
    %v1769 = vadd.f32 %v1582, %v1768
    %1770 = vadd.xlane.f32.xlu0 %v1769
    %v1771 = vpop.xlane.xlu0 %1770
    %v1772 = vsel %vm226, %v1585, 0.0
    %v1773 = vadd.f32 %v1584, %v1772
    %1774 = vadd.xlane.f32.xlu0 %v1773
    %v1775 = vpop.xlane.xlu0 %1774
    %v1776 = vsel %vm226, %v1587, 0.0
    %v1777 = vadd.f32 %v1586, %v1776
    %1778 = vadd.xlane.f32.xlu0 %v1777
    %v1779 = vpop.xlane.xlu0 %1778
    %v1780 = vsel %vm226, %v1589, 0.0
    %v1781 = vadd.f32 %v1588, %v1780
    %1782 = vadd.xlane.f32.xlu0 %v1781
    %v1783 = vpop.xlane.xlu0 %1782
    %v1784 = vsel %vm226, %v1591, 0.0
    %v1785 = vadd.f32 %v1590, %v1784
    %1786 = vadd.xlane.f32.xlu0 %v1785
    %v1787 = vpop.xlane.xlu0 %1786
    %v1788 = vsel %vm226, %v1593, 0.0
    %v1789 = vadd.f32 %v1592, %v1788
    %1790 = vadd.xlane.f32.xlu0 %v1789
    %v1791 = vpop.xlane.xlu0 %1790
    %v1792 = vsel %vm226, %v1595, 0.0
    %v1793 = vadd.f32 %v1594, %v1792
    %1794 = vadd.xlane.f32.xlu0 %v1793
    %v1795 = vpop.xlane.xlu0 %1794
    %v1796 = vsel %vm226, %v1597, 0.0
    %v1797 = vadd.f32 %v1596, %v1796
    %1798 = vadd.xlane.f32.xlu0 %v1797
    %v1799 = vpop.xlane.xlu0 %1798
    %v1800 = vsel %vm226, %v1599, 0.0
    %v1801 = vadd.f32 %v1598, %v1800
    %1802 = vadd.xlane.f32.xlu0 %v1801
    %v1803 = vpop.xlane.xlu0 %1802
    %v1804 = vsel %vm226, %v1601, 0.0
    %v1805 = vadd.f32 %v1600, %v1804
    %1806 = vadd.xlane.f32.xlu0 %v1805
    %v1807 = vpop.xlane.xlu0 %1806
    %v1808 = vsel %vm226, %v1603, 0.0
    %v1809 = vadd.f32 %v1602, %v1808
    %1810 = vadd.xlane.f32.xlu0 %v1809
    %v1811 = vpop.xlane.xlu0 %1810
    %v1812 = vsel %vm226, %v1605, 0.0
    %v1813 = vadd.f32 %v1604, %v1812
    %1814 = vadd.xlane.f32.xlu0 %v1813
    %v1815 = vpop.xlane.xlu0 %1814
    %v1816 = vsel %vm226, %v1607, 0.0
    %v1817 = vadd.f32 %v1606, %v1816
    %1818 = vadd.xlane.f32.xlu0 %v1817
    %v1819 = vpop.xlane.xlu0 %1818
    %v1820 = vsel %vm226, %v1609, 0.0
    %v1821 = vadd.f32 %v1608, %v1820
    %1822 = vadd.xlane.f32.xlu0 %v1821
    %v1823 = vpop.xlane.xlu0 %1822
    %v1824 = vsel %vm226, %v1611, 0.0
    %v1825 = vadd.f32 %v1610, %v1824
    %1826 = vadd.xlane.f32.xlu0 %v1825
    %v1827 = vpop.xlane.xlu0 %1826
    %v1828 = vsel %vm226, %v1613, 0.0
    %v1829 = vadd.f32 %v1612, %v1828
    %1830 = vadd.xlane.f32.xlu0 %v1829
    %v1831 = vpop.xlane.xlu0 %1830
    %v1832 = vsel %vm226, %v1615, 0.0
    %v1833 = vadd.f32 %v1614, %v1832
    %1834 = vadd.xlane.f32.xlu0 %v1833
    %v1835 = vpop.xlane.xlu0 %1834
    %v1836 = vsel %vm226, %v1617, 0.0
    %v1837 = vadd.f32 %v1616, %v1836
    %1838 = vadd.xlane.f32.xlu0 %v1837
    %v1839 = vpop.xlane.xlu0 %1838
    %v1840 = vsel %vm226, %v1619, 0.0
    %v1841 = vadd.f32 %v1618, %v1840
    %1842 = vadd.xlane.f32.xlu0 %v1841
    %v1843 = vpop.xlane.xlu0 %1842
    %v1900 = vlaneseq
    %v1901 = vshrl.u32 %v1900, 7
    %v1902 = vsub.s32 %v508, %v1901
    %v1903 = vrot.slane %v1623, %v1902
    %v1904 = vlaneseq
    %v1905 = vshrl.u32 %v1904, 7
    %v1906 = vsub.s32 %v513, %v1905
    %v1907 = vrot.slane %v1627, %v1906
    %v1908 = vsel %vm518, %v1907, %v1903
    %v1909 = vlaneseq
    %v1910 = vshrl.u32 %v1909, 7
    %v1911 = vsub.s32 %v520, %v1910
    %v1912 = vrot.slane %v1631, %v1911
    %v1913 = vsel %vm525, %v1912, %v1908
    %v1914 = vlaneseq
    %v1915 = vshrl.u32 %v1914, 7
    %v1916 = vsub.s32 %v527, %v1915
    %v1917 = vrot.slane %v1635, %v1916
    %v1918 = vsel %vm532, %v1917, %v1913
    %v1919 = vlaneseq
    %v1920 = vshrl.u32 %v1919, 7
    %v1921 = vsub.s32 %v534, %v1920
    %v1922 = vrot.slane %v1639, %v1921
    %v1923 = vsel %vm539, %v1922, %v1918
    %v1924 = vlaneseq
    %v1925 = vshrl.u32 %v1924, 7
    %v1926 = vsub.s32 %v541, %v1925
    %v1927 = vrot.slane %v1643, %v1926
    %v1928 = vsel %vm546, %v1927, %v1923
    %v1929 = vlaneseq
    %v1930 = vshrl.u32 %v1929, 7
    %v1931 = vsub.s32 %v548, %v1930
    %v1932 = vrot.slane %v1647, %v1931
    %v1933 = vsel %vm553, %v1932, %v1928
    %v1934 = vlaneseq
    %v1935 = vshrl.u32 %v1934, 7
    %v1936 = vsub.s32 %v555, %v1935
    %v1937 = vrot.slane %v1651, %v1936
    %v1938 = vsel %vm560, %v1937, %v1933
    %v1939 = vlaneseq
    %v1940 = vshrl.u32 %v1939, 7
    %v1941 = vsub.s32 %v562, %v1940
    %v1942 = vrot.slane %v1655, %v1941
    %v1943 = vsel %vm567, %v1942, %v1938
    %v1944 = vlaneseq
    %v1945 = vshrl.u32 %v1944, 7
    %v1946 = vsub.s32 %v569, %v1945
    %v1947 = vrot.slane %v1659, %v1946
    %v1948 = vsel %vm574, %v1947, %v1943
    %v1949 = vlaneseq
    %v1950 = vshrl.u32 %v1949, 7
    %v1951 = vsub.s32 %v576, %v1950
    %v1952 = vrot.slane %v1663, %v1951
    %v1953 = vsel %vm581, %v1952, %v1948
    %v1954 = vlaneseq
    %v1955 = vshrl.u32 %v1954, 7
    %v1956 = vsub.s32 %v583, %v1955
    %v1957 = vrot.slane %v1667, %v1956
    %v1958 = vsel %vm588, %v1957, %v1953
    %v1959 = vlaneseq
    %v1960 = vshrl.u32 %v1959, 7
    %v1961 = vsub.s32 %v590, %v1960
    %v1962 = vrot.slane %v1671, %v1961
    %v1963 = vsel %vm595, %v1962, %v1958
    %v1964 = vlaneseq
    %v1965 = vshrl.u32 %v1964, 7
    %v1966 = vsub.s32 %v597, %v1965
    %v1967 = vrot.slane %v1675, %v1966
    %v1968 = vsel %vm602, %v1967, %v1963
    %v1969 = vlaneseq
    %v1970 = vshrl.u32 %v1969, 7
    %v1971 = vsub.s32 %v604, %v1970
    %v1972 = vrot.slane %v1679, %v1971
    %v1973 = vsel %vm609, %v1972, %v1968
    %v1974 = vlaneseq
    %v1975 = vshrl.u32 %v1974, 7
    %v1976 = vsub.s32 %v611, %v1975
    %v1977 = vrot.slane %v1683, %v1976
    %v1978 = vsel %vm616, %v1977, %v1973
    %v1979 = vlaneseq
    %v1980 = vshrl.u32 %v1979, 7
    %v1981 = vsub.s32 %v508, %v1980
    %v1982 = vrot.slane %v1687, %v1981
    %v1983 = vlaneseq
    %v1984 = vshrl.u32 %v1983, 7
    %v1985 = vsub.s32 %v513, %v1984
    %v1986 = vrot.slane %v1691, %v1985
    %v1987 = vsel %vm518, %v1986, %v1982
    %v1988 = vlaneseq
    %v1989 = vshrl.u32 %v1988, 7
    %v1990 = vsub.s32 %v520, %v1989
    %v1991 = vrot.slane %v1695, %v1990
    %v1992 = vsel %vm525, %v1991, %v1987
    %v1993 = vlaneseq
    %v1994 = vshrl.u32 %v1993, 7
    %v1995 = vsub.s32 %v527, %v1994
    %v1996 = vrot.slane %v1699, %v1995
    %v1997 = vsel %vm532, %v1996, %v1992
    %v1998 = vlaneseq
    %v1999 = vshrl.u32 %v1998, 7
    %v2000 = vsub.s32 %v534, %v1999
    %v2001 = vrot.slane %v1703, %v2000
    %v2002 = vsel %vm539, %v2001, %v1997
    %v2003 = vlaneseq
    %v2004 = vshrl.u32 %v2003, 7
    %v2005 = vsub.s32 %v541, %v2004
    %v2006 = vrot.slane %v1707, %v2005
    %v2007 = vsel %vm546, %v2006, %v2002
    %v2008 = vlaneseq
    %v2009 = vshrl.u32 %v2008, 7
    %v2010 = vsub.s32 %v548, %v2009
    %v2011 = vrot.slane %v1711, %v2010
    %v2012 = vsel %vm553, %v2011, %v2007
    %v2013 = vlaneseq
    %v2014 = vshrl.u32 %v2013, 7
    %v2015 = vsub.s32 %v555, %v2014
    %v2016 = vrot.slane %v1715, %v2015
    %v2017 = vsel %vm560, %v2016, %v2012
    %v2018 = vlaneseq
    %v2019 = vshrl.u32 %v2018, 7
    %v2020 = vsub.s32 %v562, %v2019
    %v2021 = vrot.slane %v1719, %v2020
    %v2022 = vsel %vm567, %v2021, %v2017
    %v2023 = vlaneseq
    %v2024 = vshrl.u32 %v2023, 7
    %v2025 = vsub.s32 %v569, %v2024
    %v2026 = vrot.slane %v1723, %v2025
    %v2027 = vsel %vm574, %v2026, %v2022
    %v2028 = vlaneseq
    %v2029 = vshrl.u32 %v2028, 7
    %v2030 = vsub.s32 %v576, %v2029
    %v2031 = vrot.slane %v1727, %v2030
    %v2032 = vsel %vm581, %v2031, %v2027
    %v2033 = vlaneseq
    %v2034 = vshrl.u32 %v2033, 7
    %v2035 = vsub.s32 %v583, %v2034
    %v2036 = vrot.slane %v1731, %v2035
    %v2037 = vsel %vm588, %v2036, %v2032
    %v2038 = vlaneseq
    %v2039 = vshrl.u32 %v2038, 7
    %v2040 = vsub.s32 %v508, %v2039
    %v2041 = vrot.slane %v1735, %v2040
    %v2042 = vlaneseq
    %v2043 = vshrl.u32 %v2042, 7
    %v2044 = vsub.s32 %v513, %v2043
    %v2045 = vrot.slane %v1739, %v2044
    %v2046 = vsel %vm518, %v2045, %v2041
    %v2047 = vlaneseq
    %v2048 = vshrl.u32 %v2047, 7
    %v2049 = vsub.s32 %v520, %v2048
    %v2050 = vrot.slane %v1743, %v2049
    %v2051 = vsel %vm525, %v2050, %v2046
    %v2052 = vlaneseq
    %v2053 = vshrl.u32 %v2052, 7
    %v2054 = vsub.s32 %v527, %v2053
    %v2055 = vrot.slane %v1747, %v2054
    %v2056 = vsel %vm532, %v2055, %v2051
    %v2057 = vlaneseq
    %v2058 = vshrl.u32 %v2057, 7
    %v2059 = vsub.s32 %v534, %v2058
    %v2060 = vrot.slane %v1751, %v2059
    %v2061 = vsel %vm539, %v2060, %v2056
    %v2062 = vlaneseq
    %v2063 = vshrl.u32 %v2062, 7
    %v2064 = vsub.s32 %v541, %v2063
    %v2065 = vrot.slane %v1755, %v2064
    %v2066 = vsel %vm546, %v2065, %v2061
    %v2067 = vlaneseq
    %v2068 = vshrl.u32 %v2067, 7
    %v2069 = vsub.s32 %v548, %v2068
    %v2070 = vrot.slane %v1759, %v2069
    %v2071 = vsel %vm553, %v2070, %v2066
    %v2072 = vlaneseq
    %v2073 = vshrl.u32 %v2072, 7
    %v2074 = vsub.s32 %v555, %v2073
    %v2075 = vrot.slane %v1763, %v2074
    %v2076 = vsel %vm560, %v2075, %v2071
    %v2077 = vlaneseq
    %v2078 = vshrl.u32 %v2077, 7
    %v2079 = vsub.s32 %v562, %v2078
    %v2080 = vrot.slane %v1767, %v2079
    %v2081 = vsel %vm567, %v2080, %v2076
    %v2082 = vlaneseq
    %v2083 = vshrl.u32 %v2082, 7
    %v2084 = vsub.s32 %v569, %v2083
    %v2085 = vrot.slane %v1771, %v2084
    %v2086 = vsel %vm574, %v2085, %v2081
    %v2087 = vlaneseq
    %v2088 = vshrl.u32 %v2087, 7
    %v2089 = vsub.s32 %v576, %v2088
    %v2090 = vrot.slane %v1775, %v2089
    %v2091 = vsel %vm581, %v2090, %v2086
    %v2092 = vlaneseq
    %v2093 = vshrl.u32 %v2092, 7
    %v2094 = vsub.s32 %v583, %v2093
    %v2095 = vrot.slane %v1779, %v2094
    %v2096 = vsel %vm588, %v2095, %v2091
    %v2097 = vlaneseq
    %v2098 = vshrl.u32 %v2097, 7
    %v2099 = vsub.s32 %v590, %v2098
    %v2100 = vrot.slane %v1783, %v2099
    %v2101 = vsel %vm595, %v2100, %v2096
    %v2102 = vlaneseq
    %v2103 = vshrl.u32 %v2102, 7
    %v2104 = vsub.s32 %v597, %v2103
    %v2105 = vrot.slane %v1787, %v2104
    %v2106 = vsel %vm602, %v2105, %v2101
    %v2107 = vlaneseq
    %v2108 = vshrl.u32 %v2107, 7
    %v2109 = vsub.s32 %v604, %v2108
    %v2110 = vrot.slane %v1791, %v2109
    %v2111 = vsel %vm609, %v2110, %v2106
    %v2112 = vlaneseq
    %v2113 = vshrl.u32 %v2112, 7
    %v2114 = vsub.s32 %v611, %v2113
    %v2115 = vrot.slane %v1795, %v2114
    %v2116 = vsel %vm616, %v2115, %v2111
    %v2117 = vlaneseq
    %v2118 = vshrl.u32 %v2117, 7
    %v2119 = vsub.s32 %v508, %v2118
    %v2120 = vrot.slane %v1799, %v2119
    %v2121 = vlaneseq
    %v2122 = vshrl.u32 %v2121, 7
    %v2123 = vsub.s32 %v513, %v2122
    %v2124 = vrot.slane %v1803, %v2123
    %v2125 = vsel %vm518, %v2124, %v2120
    %v2126 = vlaneseq
    %v2127 = vshrl.u32 %v2126, 7
    %v2128 = vsub.s32 %v520, %v2127
    %v2129 = vrot.slane %v1807, %v2128
    %v2130 = vsel %vm525, %v2129, %v2125
    %v2131 = vlaneseq
    %v2132 = vshrl.u32 %v2131, 7
    %v2133 = vsub.s32 %v527, %v2132
    %v2134 = vrot.slane %v1811, %v2133
    %v2135 = vsel %vm532, %v2134, %v2130
    %v2136 = vlaneseq
    %v2137 = vshrl.u32 %v2136, 7
    %v2138 = vsub.s32 %v534, %v2137
    %v2139 = vrot.slane %v1815, %v2138
    %v2140 = vsel %vm539, %v2139, %v2135
    %v2141 = vlaneseq
    %v2142 = vshrl.u32 %v2141, 7
    %v2143 = vsub.s32 %v541, %v2142
    %v2144 = vrot.slane %v1819, %v2143
    %v2145 = vsel %vm546, %v2144, %v2140
    %v2146 = vlaneseq
    %v2147 = vshrl.u32 %v2146, 7
    %v2148 = vsub.s32 %v548, %v2147
    %v2149 = vrot.slane %v1823, %v2148
    %v2150 = vsel %vm553, %v2149, %v2145
    %v2151 = vlaneseq
    %v2152 = vshrl.u32 %v2151, 7
    %v2153 = vsub.s32 %v555, %v2152
    %v2154 = vrot.slane %v1827, %v2153
    %v2155 = vsel %vm560, %v2154, %v2150
    %v2156 = vlaneseq
    %v2157 = vshrl.u32 %v2156, 7
    %v2158 = vsub.s32 %v562, %v2157
    %v2159 = vrot.slane %v1831, %v2158
    %v2160 = vsel %vm567, %v2159, %v2155
    %v2161 = vlaneseq
    %v2162 = vshrl.u32 %v2161, 7
    %v2163 = vsub.s32 %v569, %v2162
    %v2164 = vrot.slane %v1835, %v2163
    %v2165 = vsel %vm574, %v2164, %v2160
    %v2166 = vlaneseq
    %v2167 = vshrl.u32 %v2166, 7
    %v2168 = vsub.s32 %v576, %v2167
    %v2169 = vrot.slane %v1839, %v2168
    %v2170 = vsel %vm581, %v2169, %v2165
    %v2171 = vlaneseq
    %v2172 = vshrl.u32 %v2171, 7
    %v2173 = vsub.s32 %v583, %v2172
    %v2174 = vrot.slane %v1843, %v2173
    %v2175 = vsel %vm588, %v2174, %v2170
    %v2176 = vsel %vm815, %v2116, %v1978
    %v2177 = vsel %vm815, %v2175, %v2037
    %v2180 = vsel %vm820, %v2176, 0.0
    %v2181 = vsel %vm822, %v2177, 0.0
    %v2182 = vadd.f32 %v2180, %v2181
    %2183 = vadd.xlane.f32.xlu0 %v2182
    %v2184 = vpop.xlane.xlu0 %2183
    %v2185 = vmul.f32 %v2184, 1.9929847e-05
    %s2186 = scalar_lea.vmem [#allocation2], 1344
    %v2187 = vld [vmem:[%s2186] sm:$0xff]
    %v2188 = vld [vmem:[%s2186 + $0x8] sm:$0xff]
    %v2189 = vld [vmem:[%s2186 + $0x10] sm:$0xff]
    %v2190 = vld [vmem:[%s2186 + $0x18] sm:$0xff]
    %v2191 = vld [vmem:[%s2186 + $0x20] sm:$0xff]
    %v2192 = vld [vmem:[%s2186 + $0x28] sm:$0xff]
    %v2193 = vld [vmem:[%s2186 + $0x30] sm:$0xff]
    %v2194 = vld [vmem:[%s2186 + $0x38] sm:$0xff]
    %v2195 = vld [vmem:[%s2186 + $0x40] sm:$0xff]
    %v2196 = vld [vmem:[%s2186 + $0x48] sm:$0xff]
    %v2197 = vld [vmem:[%s2186 + $0x50] sm:$0xff]
    %v2198 = vld [vmem:[%s2186 + $0x58] sm:$0xff]
    %v2199 = vld [vmem:[%s2186 + $0x60] sm:$0xff]
    %v2200 = vld [vmem:[%s2186 + $0x68] sm:$0xff]
    %v2201 = vld [vmem:[%s2186 + $0x70] sm:$0xff]
    %v2202 = vld [vmem:[%s2186 + $0x78] sm:$0xff]
    %v2203 = vld [vmem:[%s2186 + $0x80] sm:$0xff]
    %v2204 = vld [vmem:[%s2186 + $0x88] sm:$0xff]
    %v2205 = vld [vmem:[%s2186 + $0x90] sm:$0xff]
    %v2206 = vld [vmem:[%s2186 + $0x98] sm:$0xff]
    %v2207 = vld [vmem:[%s2186 + $0xa0] sm:$0xff]
    %v2208 = vld [vmem:[%s2186 + $0xa8] sm:$0xff]
    %v2209 = vld [vmem:[%s2186 + $0xb0] sm:$0xff]
    %v2210 = vld [vmem:[%s2186 + $0xb8] sm:$0xff]
    %v2211 = vld [vmem:[%s2186 + $0xc0] sm:$0xff]
    %v2212 = vld [vmem:[%s2186 + $0xc8] sm:$0xff]
    %v2213 = vld [vmem:[%s2186 + $0xd0] sm:$0xff]
    %v2214 = vld [vmem:[%s2186 + $0xd8] sm:$0xff]
    %v2215 = vld [vmem:[%s2186 + $0xe0] sm:$0xff]
    %v2216 = vld [vmem:[%s2186 + $0xe8] sm:$0xff]
    %v2217 = vld [vmem:[%s2186 + $0xf0] sm:$0xff]
    %v2218 = vld [vmem:[%s2186 + $0xf8] sm:$0xff]
    %v2219 = vld [vmem:[%s2186 + $0x100] sm:$0xff]
    %v2220 = vld [vmem:[%s2186 + $0x108] sm:$0xff]
    %v2221 = vld [vmem:[%s2186 + $0x110] sm:$0xff]
    %v2222 = vld [vmem:[%s2186 + $0x118] sm:$0xff]
    %v2223 = vld [vmem:[%s2186 + $0x120] sm:$0xff]
    %v2224 = vld [vmem:[%s2186 + $0x128] sm:$0xff]
    %v2225 = vld [vmem:[%s2186 + $0x130] sm:$0xff]
    %v2226 = vld [vmem:[%s2186 + $0x138] sm:$0xff]
    %v2227 = vld [vmem:[%s2186 + $0x140] sm:$0xff]
    %v2228 = vld [vmem:[%s2186 + $0x148] sm:$0xff]
    %v2229 = vld [vmem:[%s2186 + $0x150] sm:$0xff]
    %v2230 = vld [vmem:[%s2186 + $0x158] sm:$0xff]
    %v2231 = vld [vmem:[%s2186 + $0x160] sm:$0xff]
    %v2232 = vld [vmem:[%s2186 + $0x168] sm:$0xff]
    %v2233 = vld [vmem:[%s2186 + $0x170] sm:$0xff]
    %v2234 = vld [vmem:[%s2186 + $0x178] sm:$0xff]
    %v2235 = vld [vmem:[%s2186 + $0x180] sm:$0xff]
    %v2236 = vld [vmem:[%s2186 + $0x188] sm:$0xff]
    %v2237 = vld [vmem:[%s2186 + $0x190] sm:$0xff]
    %v2238 = vld [vmem:[%s2186 + $0x198] sm:$0xff]
    %v2239 = vld [vmem:[%s2186 + $0x1a0] sm:$0xff]
    %v2240 = vld [vmem:[%s2186 + $0x1a8] sm:$0xff]
    %v2241 = vld [vmem:[%s2186 + $0x1b0] sm:$0xff]
    %v2242 = vld [vmem:[%s2186 + $0x1b8] sm:$0xff]
    %v2243 = vld [vmem:[%s2186 + $0x700] sm:$0xff]
    %v2244 = vld [vmem:[%s2186 + $0x708] sm:$0xff]
    %v2245 = vld [vmem:[%s2186 + $0x710] sm:$0xff]
    %v2246 = vld [vmem:[%s2186 + $0x718] sm:$0xff]
    %v2247 = vld [vmem:[%s2186 + $0x720] sm:$0xff]
    %v2248 = vld [vmem:[%s2186 + $0x728] sm:$0xff]
    %v2249 = vld [vmem:[%s2186 + $0x730] sm:$0xff]
    %v2250 = vld [vmem:[%s2186 + $0x738] sm:$0xff]
    %v2251 = vld [vmem:[%s2186 + $0x740] sm:$0xff]
    %v2252 = vld [vmem:[%s2186 + $0x748] sm:$0xff]
    %v2253 = vld [vmem:[%s2186 + $0x750] sm:$0xff]
    %v2254 = vld [vmem:[%s2186 + $0x758] sm:$0xff]
    %v2255 = vld [vmem:[%s2186 + $0x760] sm:$0xff]
    %v2256 = vld [vmem:[%s2186 + $0x768] sm:$0xff]
    %v2257 = vld [vmem:[%s2186 + $0x770] sm:$0xff]
    %v2258 = vld [vmem:[%s2186 + $0x778] sm:$0xff]
    %v2259 = vld [vmem:[%s2186 + $0x780] sm:$0xff]
    %v2260 = vld [vmem:[%s2186 + $0x788] sm:$0xff]
    %v2261 = vld [vmem:[%s2186 + $0x790] sm:$0xff]
    %v2262 = vld [vmem:[%s2186 + $0x798] sm:$0xff]
    %v2263 = vld [vmem:[%s2186 + $0x7a0] sm:$0xff]
    %v2264 = vld [vmem:[%s2186 + $0x7a8] sm:$0xff]
    %v2265 = vld [vmem:[%s2186 + $0x7b0] sm:$0xff]
    %v2266 = vld [vmem:[%s2186 + $0x7b8] sm:$0xff]
    %v2267 = vld [vmem:[%s2186 + $0x7c0] sm:$0xff]
    %v2268 = vld [vmem:[%s2186 + $0x7c8] sm:$0xff]
    %v2269 = vld [vmem:[%s2186 + $0x7d0] sm:$0xff]
    %v2270 = vld [vmem:[%s2186 + $0x7d8] sm:$0xff]
    %v2271 = vld [vmem:[%s2186 + $0x7e0] sm:$0xff]
    %v2272 = vld [vmem:[%s2186 + $0x7e8] sm:$0xff]
    %v2273 = vld [vmem:[%s2186 + $0x7f0] sm:$0xff]
    %v2274 = vld [vmem:[%s2186 + $0x7f8] sm:$0xff]
    %v2275 = vld [vmem:[%s2186 + $0x800] sm:$0xff]
    %v2276 = vld [vmem:[%s2186 + $0x808] sm:$0xff]
    %v2277 = vld [vmem:[%s2186 + $0x810] sm:$0xff]
    %v2278 = vld [vmem:[%s2186 + $0x818] sm:$0xff]
    %v2279 = vld [vmem:[%s2186 + $0x820] sm:$0xff]
    %v2280 = vld [vmem:[%s2186 + $0x828] sm:$0xff]
    %v2281 = vld [vmem:[%s2186 + $0x830] sm:$0xff]
    %v2282 = vld [vmem:[%s2186 + $0x838] sm:$0xff]
    %v2283 = vld [vmem:[%s2186 + $0x840] sm:$0xff]
    %v2284 = vld [vmem:[%s2186 + $0x848] sm:$0xff]
    %v2285 = vld [vmem:[%s2186 + $0x850] sm:$0xff]
    %v2286 = vld [vmem:[%s2186 + $0x858] sm:$0xff]
    %v2287 = vld [vmem:[%s2186 + $0x860] sm:$0xff]
    %v2288 = vld [vmem:[%s2186 + $0x868] sm:$0xff]
    %v2289 = vld [vmem:[%s2186 + $0x870] sm:$0xff]
    %v2290 = vld [vmem:[%s2186 + $0x878] sm:$0xff]
    %v2291 = vld [vmem:[%s2186 + $0x880] sm:$0xff]
    %v2292 = vld [vmem:[%s2186 + $0x888] sm:$0xff]
    %v2293 = vld [vmem:[%s2186 + $0x890] sm:$0xff]
    %v2294 = vld [vmem:[%s2186 + $0x898] sm:$0xff]
    %v2295 = vld [vmem:[%s2186 + $0x8a0] sm:$0xff]
    %v2296 = vld [vmem:[%s2186 + $0x8a8] sm:$0xff]
    %v2297 = vld [vmem:[%s2186 + $0x8b0] sm:$0xff]
    %v2298 = vld [vmem:[%s2186 + $0x8b8] sm:$0xff]
    %v2299 = vsel %vm226, %v2188, 0.0
    %v2300 = vadd.f32 %v2187, %v2299
    %2301 = vadd.xlane.f32.xlu0 %v2300
    %v2302 = vpop.xlane.xlu0 %2301
    %v2303 = vsel %vm226, %v2190, 0.0
    %v2304 = vadd.f32 %v2189, %v2303
    %2305 = vadd.xlane.f32.xlu0 %v2304
    %v2306 = vpop.xlane.xlu0 %2305
    %v2307 = vsel %vm226, %v2192, 0.0
    %v2308 = vadd.f32 %v2191, %v2307
    %2309 = vadd.xlane.f32.xlu0 %v2308
    %v2310 = vpop.xlane.xlu0 %2309
    %v2311 = vsel %vm226, %v2194, 0.0
    %v2312 = vadd.f32 %v2193, %v2311
    %2313 = vadd.xlane.f32.xlu0 %v2312
    %v2314 = vpop.xlane.xlu0 %2313
    %v2315 = vsel %vm226, %v2196, 0.0
    %v2316 = vadd.f32 %v2195, %v2315
    %2317 = vadd.xlane.f32.xlu0 %v2316
    %v2318 = vpop.xlane.xlu0 %2317
    %v2319 = vsel %vm226, %v2198, 0.0
    %v2320 = vadd.f32 %v2197, %v2319
    %2321 = vadd.xlane.f32.xlu0 %v2320
    %v2322 = vpop.xlane.xlu0 %2321
    %v2323 = vsel %vm226, %v2200, 0.0
    %v2324 = vadd.f32 %v2199, %v2323
    %2325 = vadd.xlane.f32.xlu0 %v2324
    %v2326 = vpop.xlane.xlu0 %2325
    %v2327 = vsel %vm226, %v2202, 0.0
    %v2328 = vadd.f32 %v2201, %v2327
    %2329 = vadd.xlane.f32.xlu0 %v2328
    %v2330 = vpop.xlane.xlu0 %2329
    %v2331 = vsel %vm226, %v2204, 0.0
    %v2332 = vadd.f32 %v2203, %v2331
    %2333 = vadd.xlane.f32.xlu0 %v2332
    %v2334 = vpop.xlane.xlu0 %2333
    %v2335 = vsel %vm226, %v2206, 0.0
    %v2336 = vadd.f32 %v2205, %v2335
    %2337 = vadd.xlane.f32.xlu0 %v2336
    %v2338 = vpop.xlane.xlu0 %2337
    %v2339 = vsel %vm226, %v2208, 0.0
    %v2340 = vadd.f32 %v2207, %v2339
    %2341 = vadd.xlane.f32.xlu0 %v2340
    %v2342 = vpop.xlane.xlu0 %2341
    %v2343 = vsel %vm226, %v2210, 0.0
    %v2344 = vadd.f32 %v2209, %v2343
    %2345 = vadd.xlane.f32.xlu0 %v2344
    %v2346 = vpop.xlane.xlu0 %2345
    %v2347 = vsel %vm226, %v2212, 0.0
    %v2348 = vadd.f32 %v2211, %v2347
    %2349 = vadd.xlane.f32.xlu0 %v2348
    %v2350 = vpop.xlane.xlu0 %2349
    %v2351 = vsel %vm226, %v2214, 0.0
    %v2352 = vadd.f32 %v2213, %v2351
    %2353 = vadd.xlane.f32.xlu0 %v2352
    %v2354 = vpop.xlane.xlu0 %2353
    %v2355 = vsel %vm226, %v2216, 0.0
    %v2356 = vadd.f32 %v2215, %v2355
    %2357 = vadd.xlane.f32.xlu0 %v2356
    %v2358 = vpop.xlane.xlu0 %2357
    %v2359 = vsel %vm226, %v2218, 0.0
    %v2360 = vadd.f32 %v2217, %v2359
    %2361 = vadd.xlane.f32.xlu0 %v2360
    %v2362 = vpop.xlane.xlu0 %2361
    %v2363 = vsel %vm226, %v2220, 0.0
    %v2364 = vadd.f32 %v2219, %v2363
    %2365 = vadd.xlane.f32.xlu0 %v2364
    %v2366 = vpop.xlane.xlu0 %2365
    %v2367 = vsel %vm226, %v2222, 0.0
    %v2368 = vadd.f32 %v2221, %v2367
    %2369 = vadd.xlane.f32.xlu0 %v2368
    %v2370 = vpop.xlane.xlu0 %2369
    %v2371 = vsel %vm226, %v2224, 0.0
    %v2372 = vadd.f32 %v2223, %v2371
    %2373 = vadd.xlane.f32.xlu0 %v2372
    %v2374 = vpop.xlane.xlu0 %2373
    %v2375 = vsel %vm226, %v2226, 0.0
    %v2376 = vadd.f32 %v2225, %v2375
    %2377 = vadd.xlane.f32.xlu0 %v2376
    %v2378 = vpop.xlane.xlu0 %2377
    %v2379 = vsel %vm226, %v2228, 0.0
    %v2380 = vadd.f32 %v2227, %v2379
    %2381 = vadd.xlane.f32.xlu0 %v2380
    %v2382 = vpop.xlane.xlu0 %2381
    %v2383 = vsel %vm226, %v2230, 0.0
    %v2384 = vadd.f32 %v2229, %v2383
    %2385 = vadd.xlane.f32.xlu0 %v2384
    %v2386 = vpop.xlane.xlu0 %2385
    %v2387 = vsel %vm226, %v2232, 0.0
    %v2388 = vadd.f32 %v2231, %v2387
    %2389 = vadd.xlane.f32.xlu0 %v2388
    %v2390 = vpop.xlane.xlu0 %2389
    %v2391 = vsel %vm226, %v2234, 0.0
    %v2392 = vadd.f32 %v2233, %v2391
    %2393 = vadd.xlane.f32.xlu0 %v2392
    %v2394 = vpop.xlane.xlu0 %2393
    %v2395 = vsel %vm226, %v2236, 0.0
    %v2396 = vadd.f32 %v2235, %v2395
    %2397 = vadd.xlane.f32.xlu0 %v2396
    %v2398 = vpop.xlane.xlu0 %2397
    %v2399 = vsel %vm226, %v2238, 0.0
    %v2400 = vadd.f32 %v2237, %v2399
    %2401 = vadd.xlane.f32.xlu0 %v2400
    %v2402 = vpop.xlane.xlu0 %2401
    %v2403 = vsel %vm226, %v2240, 0.0
    %v2404 = vadd.f32 %v2239, %v2403
    %2405 = vadd.xlane.f32.xlu0 %v2404
    %v2406 = vpop.xlane.xlu0 %2405
    %v2407 = vsel %vm226, %v2242, 0.0
    %v2408 = vadd.f32 %v2241, %v2407
    %2409 = vadd.xlane.f32.xlu0 %v2408
    %v2410 = vpop.xlane.xlu0 %2409
    %v2411 = vsel %vm226, %v2244, 0.0
    %v2412 = vadd.f32 %v2243, %v2411
    %2413 = vadd.xlane.f32.xlu0 %v2412
    %v2414 = vpop.xlane.xlu0 %2413
    %v2415 = vsel %vm226, %v2246, 0.0
    %v2416 = vadd.f32 %v2245, %v2415
    %2417 = vadd.xlane.f32.xlu0 %v2416
    %v2418 = vpop.xlane.xlu0 %2417
    %v2419 = vsel %vm226, %v2248, 0.0
    %v2420 = vadd.f32 %v2247, %v2419
    %2421 = vadd.xlane.f32.xlu0 %v2420
    %v2422 = vpop.xlane.xlu0 %2421
    %v2423 = vsel %vm226, %v2250, 0.0
    %v2424 = vadd.f32 %v2249, %v2423
    %2425 = vadd.xlane.f32.xlu0 %v2424
    %v2426 = vpop.xlane.xlu0 %2425
    %v2427 = vsel %vm226, %v2252, 0.0
    %v2428 = vadd.f32 %v2251, %v2427
    %2429 = vadd.xlane.f32.xlu0 %v2428
    %v2430 = vpop.xlane.xlu0 %2429
    %v2431 = vsel %vm226, %v2254, 0.0
    %v2432 = vadd.f32 %v2253, %v2431
    %2433 = vadd.xlane.f32.xlu0 %v2432
    %v2434 = vpop.xlane.xlu0 %2433
    %v2435 = vsel %vm226, %v2256, 0.0
    %v2436 = vadd.f32 %v2255, %v2435
    %2437 = vadd.xlane.f32.xlu0 %v2436
    %v2438 = vpop.xlane.xlu0 %2437
    %v2439 = vsel %vm226, %v2258, 0.0
    %v2440 = vadd.f32 %v2257, %v2439
    %2441 = vadd.xlane.f32.xlu0 %v2440
    %v2442 = vpop.xlane.xlu0 %2441
    %v2443 = vsel %vm226, %v2260, 0.0
    %v2444 = vadd.f32 %v2259, %v2443
    %2445 = vadd.xlane.f32.xlu0 %v2444
    %v2446 = vpop.xlane.xlu0 %2445
    %v2447 = vsel %vm226, %v2262, 0.0
    %v2448 = vadd.f32 %v2261, %v2447
    %2449 = vadd.xlane.f32.xlu0 %v2448
    %v2450 = vpop.xlane.xlu0 %2449
    %v2451 = vsel %vm226, %v2264, 0.0
    %v2452 = vadd.f32 %v2263, %v2451
    %2453 = vadd.xlane.f32.xlu0 %v2452
    %v2454 = vpop.xlane.xlu0 %2453
    %v2455 = vsel %vm226, %v2266, 0.0
    %v2456 = vadd.f32 %v2265, %v2455
    %2457 = vadd.xlane.f32.xlu0 %v2456
    %v2458 = vpop.xlane.xlu0 %2457
    %v2459 = vsel %vm226, %v2268, 0.0
    %v2460 = vadd.f32 %v2267, %v2459
    %2461 = vadd.xlane.f32.xlu0 %v2460
    %v2462 = vpop.xlane.xlu0 %2461
    %v2463 = vsel %vm226, %v2270, 0.0
    %v2464 = vadd.f32 %v2269, %v2463
    %2465 = vadd.xlane.f32.xlu0 %v2464
    %v2466 = vpop.xlane.xlu0 %2465
    %v2467 = vsel %vm226, %v2272, 0.0
    %v2468 = vadd.f32 %v2271, %v2467
    %2469 = vadd.xlane.f32.xlu0 %v2468
    %v2470 = vpop.xlane.xlu0 %2469
    %v2471 = vsel %vm226, %v2274, 0.0
    %v2472 = vadd.f32 %v2273, %v2471
    %2473 = vadd.xlane.f32.xlu0 %v2472
    %v2474 = vpop.xlane.xlu0 %2473
    %v2475 = vsel %vm226, %v2276, 0.0
    %v2476 = vadd.f32 %v2275, %v2475
    %2477 = vadd.xlane.f32.xlu0 %v2476
    %v2478 = vpop.xlane.xlu0 %2477
    %v2479 = vsel %vm226, %v2278, 0.0
    %v2480 = vadd.f32 %v2277, %v2479
    %2481 = vadd.xlane.f32.xlu0 %v2480
    %v2482 = vpop.xlane.xlu0 %2481
    %v2483 = vsel %vm226, %v2280, 0.0
    %v2484 = vadd.f32 %v2279, %v2483
    %2485 = vadd.xlane.f32.xlu0 %v2484
    %v2486 = vpop.xlane.xlu0 %2485
    %v2487 = vsel %vm226, %v2282, 0.0
    %v2488 = vadd.f32 %v2281, %v2487
    %2489 = vadd.xlane.f32.xlu0 %v2488
    %v2490 = vpop.xlane.xlu0 %2489
    %v2491 = vsel %vm226, %v2284, 0.0
    %v2492 = vadd.f32 %v2283, %v2491
    %2493 = vadd.xlane.f32.xlu0 %v2492
    %v2494 = vpop.xlane.xlu0 %2493
    %v2495 = vsel %vm226, %v2286, 0.0
    %v2496 = vadd.f32 %v2285, %v2495
    %2497 = vadd.xlane.f32.xlu0 %v2496
    %v2498 = vpop.xlane.xlu0 %2497
    %v2499 = vsel %vm226, %v2288, 0.0
    %v2500 = vadd.f32 %v2287, %v2499
    %2501 = vadd.xlane.f32.xlu0 %v2500
    %v2502 = vpop.xlane.xlu0 %2501
    %v2503 = vsel %vm226, %v2290, 0.0
    %v2504 = vadd.f32 %v2289, %v2503
    %2505 = vadd.xlane.f32.xlu0 %v2504
    %v2506 = vpop.xlane.xlu0 %2505
    %v2507 = vsel %vm226, %v2292, 0.0
    %v2508 = vadd.f32 %v2291, %v2507
    %2509 = vadd.xlane.f32.xlu0 %v2508
    %v2510 = vpop.xlane.xlu0 %2509
    %v2511 = vsel %vm226, %v2294, 0.0
    %v2512 = vadd.f32 %v2293, %v2511
    %2513 = vadd.xlane.f32.xlu0 %v2512
    %v2514 = vpop.xlane.xlu0 %2513
    %v2515 = vsel %vm226, %v2296, 0.0
    %v2516 = vadd.f32 %v2295, %v2515
    %2517 = vadd.xlane.f32.xlu0 %v2516
    %v2518 = vpop.xlane.xlu0 %2517
    %v2519 = vsel %vm226, %v2298, 0.0
    %v2520 = vadd.f32 %v2297, %v2519
    %2521 = vadd.xlane.f32.xlu0 %v2520
    %v2522 = vpop.xlane.xlu0 %2521
    %v2579 = vlaneseq
    %v2580 = vshrl.u32 %v2579, 7
    %v2581 = vsub.s32 %v508, %v2580
    %v2582 = vrot.slane %v2302, %v2581
    %v2583 = vlaneseq
    %v2584 = vshrl.u32 %v2583, 7
    %v2585 = vsub.s32 %v513, %v2584
    %v2586 = vrot.slane %v2306, %v2585
    %v2587 = vsel %vm518, %v2586, %v2582
    %v2588 = vlaneseq
    %v2589 = vshrl.u32 %v2588, 7
    %v2590 = vsub.s32 %v520, %v2589
    %v2591 = vrot.slane %v2310, %v2590
    %v2592 = vsel %vm525, %v2591, %v2587
    %v2593 = vlaneseq
    %v2594 = vshrl.u32 %v2593, 7
    %v2595 = vsub.s32 %v527, %v2594
    %v2596 = vrot.slane %v2314, %v2595
    %v2597 = vsel %vm532, %v2596, %v2592
    %v2598 = vlaneseq
    %v2599 = vshrl.u32 %v2598, 7
    %v2600 = vsub.s32 %v534, %v2599
    %v2601 = vrot.slane %v2318, %v2600
    %v2602 = vsel %vm539, %v2601, %v2597
    %v2603 = vlaneseq
    %v2604 = vshrl.u32 %v2603, 7
    %v2605 = vsub.s32 %v541, %v2604
    %v2606 = vrot.slane %v2322, %v2605
    %v2607 = vsel %vm546, %v2606, %v2602
    %v2608 = vlaneseq
    %v2609 = vshrl.u32 %v2608, 7
    %v2610 = vsub.s32 %v548, %v2609
    %v2611 = vrot.slane %v2326, %v2610
    %v2612 = vsel %vm553, %v2611, %v2607
    %v2613 = vlaneseq
    %v2614 = vshrl.u32 %v2613, 7
    %v2615 = vsub.s32 %v555, %v2614
    %v2616 = vrot.slane %v2330, %v2615
    %v2617 = vsel %vm560, %v2616, %v2612
    %v2618 = vlaneseq
    %v2619 = vshrl.u32 %v2618, 7
    %v2620 = vsub.s32 %v562, %v2619
    %v2621 = vrot.slane %v2334, %v2620
    %v2622 = vsel %vm567, %v2621, %v2617
    %v2623 = vlaneseq
    %v2624 = vshrl.u32 %v2623, 7
    %v2625 = vsub.s32 %v569, %v2624
    %v2626 = vrot.slane %v2338, %v2625
    %v2627 = vsel %vm574, %v2626, %v2622
    %v2628 = vlaneseq
    %v2629 = vshrl.u32 %v2628, 7
    %v2630 = vsub.s32 %v576, %v2629
    %v2631 = vrot.slane %v2342, %v2630
    %v2632 = vsel %vm581, %v2631, %v2627
    %v2633 = vlaneseq
    %v2634 = vshrl.u32 %v2633, 7
    %v2635 = vsub.s32 %v583, %v2634
    %v2636 = vrot.slane %v2346, %v2635
    %v2637 = vsel %vm588, %v2636, %v2632
    %v2638 = vlaneseq
    %v2639 = vshrl.u32 %v2638, 7
    %v2640 = vsub.s32 %v590, %v2639
    %v2641 = vrot.slane %v2350, %v2640
    %v2642 = vsel %vm595, %v2641, %v2637
    %v2643 = vlaneseq
    %v2644 = vshrl.u32 %v2643, 7
    %v2645 = vsub.s32 %v597, %v2644
    %v2646 = vrot.slane %v2354, %v2645
    %v2647 = vsel %vm602, %v2646, %v2642
    %v2648 = vlaneseq
    %v2649 = vshrl.u32 %v2648, 7
    %v2650 = vsub.s32 %v604, %v2649
    %v2651 = vrot.slane %v2358, %v2650
    %v2652 = vsel %vm609, %v2651, %v2647
    %v2653 = vlaneseq
    %v2654 = vshrl.u32 %v2653, 7
    %v2655 = vsub.s32 %v611, %v2654
    %v2656 = vrot.slane %v2362, %v2655
    %v2657 = vsel %vm616, %v2656, %v2652
    %v2658 = vlaneseq
    %v2659 = vshrl.u32 %v2658, 7
    %v2660 = vsub.s32 %v508, %v2659
    %v2661 = vrot.slane %v2366, %v2660
    %v2662 = vlaneseq
    %v2663 = vshrl.u32 %v2662, 7
    %v2664 = vsub.s32 %v513, %v2663
    %v2665 = vrot.slane %v2370, %v2664
    %v2666 = vsel %vm518, %v2665, %v2661
    %v2667 = vlaneseq
    %v2668 = vshrl.u32 %v2667, 7
    %v2669 = vsub.s32 %v520, %v2668
    %v2670 = vrot.slane %v2374, %v2669
    %v2671 = vsel %vm525, %v2670, %v2666
    %v2672 = vlaneseq
    %v2673 = vshrl.u32 %v2672, 7
    %v2674 = vsub.s32 %v527, %v2673
    %v2675 = vrot.slane %v2378, %v2674
    %v2676 = vsel %vm532, %v2675, %v2671
    %v2677 = vlaneseq
    %v2678 = vshrl.u32 %v2677, 7
    %v2679 = vsub.s32 %v534, %v2678
    %v2680 = vrot.slane %v2382, %v2679
    %v2681 = vsel %vm539, %v2680, %v2676
    %v2682 = vlaneseq
    %v2683 = vshrl.u32 %v2682, 7
    %v2684 = vsub.s32 %v541, %v2683
    %v2685 = vrot.slane %v2386, %v2684
    %v2686 = vsel %vm546, %v2685, %v2681
    %v2687 = vlaneseq
    %v2688 = vshrl.u32 %v2687, 7
    %v2689 = vsub.s32 %v548, %v2688
    %v2690 = vrot.slane %v2390, %v2689
    %v2691 = vsel %vm553, %v2690, %v2686
    %v2692 = vlaneseq
    %v2693 = vshrl.u32 %v2692, 7
    %v2694 = vsub.s32 %v555, %v2693
    %v2695 = vrot.slane %v2394, %v2694
    %v2696 = vsel %vm560, %v2695, %v2691
    %v2697 = vlaneseq
    %v2698 = vshrl.u32 %v2697, 7
    %v2699 = vsub.s32 %v562, %v2698
    %v2700 = vrot.slane %v2398, %v2699
    %v2701 = vsel %vm567, %v2700, %v2696
    %v2702 = vlaneseq
    %v2703 = vshrl.u32 %v2702, 7
    %v2704 = vsub.s32 %v569, %v2703
    %v2705 = vrot.slane %v2402, %v2704
    %v2706 = vsel %vm574, %v2705, %v2701
    %v2707 = vlaneseq
    %v2708 = vshrl.u32 %v2707, 7
    %v2709 = vsub.s32 %v576, %v2708
    %v2710 = vrot.slane %v2406, %v2709
    %v2711 = vsel %vm581, %v2710, %v2706
    %v2712 = vlaneseq
    %v2713 = vshrl.u32 %v2712, 7
    %v2714 = vsub.s32 %v583, %v2713
    %v2715 = vrot.slane %v2410, %v2714
    %v2716 = vsel %vm588, %v2715, %v2711
    %v2717 = vlaneseq
    %v2718 = vshrl.u32 %v2717, 7
    %v2719 = vsub.s32 %v508, %v2718
    %v2720 = vrot.slane %v2414, %v2719
    %v2721 = vlaneseq
    %v2722 = vshrl.u32 %v2721, 7
    %v2723 = vsub.s32 %v513, %v2722
    %v2724 = vrot.slane %v2418, %v2723
    %v2725 = vsel %vm518, %v2724, %v2720
    %v2726 = vlaneseq
    %v2727 = vshrl.u32 %v2726, 7
    %v2728 = vsub.s32 %v520, %v2727
    %v2729 = vrot.slane %v2422, %v2728
    %v2730 = vsel %vm525, %v2729, %v2725
    %v2731 = vlaneseq
    %v2732 = vshrl.u32 %v2731, 7
    %v2733 = vsub.s32 %v527, %v2732
    %v2734 = vrot.slane %v2426, %v2733
    %v2735 = vsel %vm532, %v2734, %v2730
    %v2736 = vlaneseq
    %v2737 = vshrl.u32 %v2736, 7
    %v2738 = vsub.s32 %v534, %v2737
    %v2739 = vrot.slane %v2430, %v2738
    %v2740 = vsel %vm539, %v2739, %v2735
    %v2741 = vlaneseq
    %v2742 = vshrl.u32 %v2741, 7
    %v2743 = vsub.s32 %v541, %v2742
    %v2744 = vrot.slane %v2434, %v2743
    %v2745 = vsel %vm546, %v2744, %v2740
    %v2746 = vlaneseq
    %v2747 = vshrl.u32 %v2746, 7
    %v2748 = vsub.s32 %v548, %v2747
    %v2749 = vrot.slane %v2438, %v2748
    %v2750 = vsel %vm553, %v2749, %v2745
    %v2751 = vlaneseq
    %v2752 = vshrl.u32 %v2751, 7
    %v2753 = vsub.s32 %v555, %v2752
    %v2754 = vrot.slane %v2442, %v2753
    %v2755 = vsel %vm560, %v2754, %v2750
    %v2756 = vlaneseq
    %v2757 = vshrl.u32 %v2756, 7
    %v2758 = vsub.s32 %v562, %v2757
    %v2759 = vrot.slane %v2446, %v2758
    %v2760 = vsel %vm567, %v2759, %v2755
    %v2761 = vlaneseq
    %v2762 = vshrl.u32 %v2761, 7
    %v2763 = vsub.s32 %v569, %v2762
    %v2764 = vrot.slane %v2450, %v2763
    %v2765 = vsel %vm574, %v2764, %v2760
    %v2766 = vlaneseq
    %v2767 = vshrl.u32 %v2766, 7
    %v2768 = vsub.s32 %v576, %v2767
    %v2769 = vrot.slane %v2454, %v2768
    %v2770 = vsel %vm581, %v2769, %v2765
    %v2771 = vlaneseq
    %v2772 = vshrl.u32 %v2771, 7
    %v2773 = vsub.s32 %v583, %v2772
    %v2774 = vrot.slane %v2458, %v2773
    %v2775 = vsel %vm588, %v2774, %v2770
    %v2776 = vlaneseq
    %v2777 = vshrl.u32 %v2776, 7
    %v2778 = vsub.s32 %v590, %v2777
    %v2779 = vrot.slane %v2462, %v2778
    %v2780 = vsel %vm595, %v2779, %v2775
    %v2781 = vlaneseq
    %v2782 = vshrl.u32 %v2781, 7
    %v2783 = vsub.s32 %v597, %v2782
    %v2784 = vrot.slane %v2466, %v2783
    %v2785 = vsel %vm602, %v2784, %v2780
    %v2786 = vlaneseq
    %v2787 = vshrl.u32 %v2786, 7
    %v2788 = vsub.s32 %v604, %v2787
    %v2789 = vrot.slane %v2470, %v2788
    %v2790 = vsel %vm609, %v2789, %v2785
    %v2791 = vlaneseq
    %v2792 = vshrl.u32 %v2791, 7
    %v2793 = vsub.s32 %v611, %v2792
    %v2794 = vrot.slane %v2474, %v2793
    %v2795 = vsel %vm616, %v2794, %v2790
    %v2796 = vlaneseq
    %v2797 = vshrl.u32 %v2796, 7
    %v2798 = vsub.s32 %v508, %v2797
    %v2799 = vrot.slane %v2478, %v2798
    %v2800 = vlaneseq
    %v2801 = vshrl.u32 %v2800, 7
    %v2802 = vsub.s32 %v513, %v2801
    %v2803 = vrot.slane %v2482, %v2802
    %v2804 = vsel %vm518, %v2803, %v2799
    %v2805 = vlaneseq
    %v2806 = vshrl.u32 %v2805, 7
    %v2807 = vsub.s32 %v520, %v2806
    %v2808 = vrot.slane %v2486, %v2807
    %v2809 = vsel %vm525, %v2808, %v2804
    %v2810 = vlaneseq
    %v2811 = vshrl.u32 %v2810, 7
    %v2812 = vsub.s32 %v527, %v2811
    %v2813 = vrot.slane %v2490, %v2812
    %v2814 = vsel %vm532, %v2813, %v2809
    %v2815 = vlaneseq
    %v2816 = vshrl.u32 %v2815, 7
    %v2817 = vsub.s32 %v534, %v2816
    %v2818 = vrot.slane %v2494, %v2817
    %v2819 = vsel %vm539, %v2818, %v2814
    %v2820 = vlaneseq
    %v2821 = vshrl.u32 %v2820, 7
    %v2822 = vsub.s32 %v541, %v2821
    %v2823 = vrot.slane %v2498, %v2822
    %v2824 = vsel %vm546, %v2823, %v2819
    %v2825 = vlaneseq
    %v2826 = vshrl.u32 %v2825, 7
    %v2827 = vsub.s32 %v548, %v2826
    %v2828 = vrot.slane %v2502, %v2827
    %v2829 = vsel %vm553, %v2828, %v2824
    %v2830 = vlaneseq
    %v2831 = vshrl.u32 %v2830, 7
    %v2832 = vsub.s32 %v555, %v2831
    %v2833 = vrot.slane %v2506, %v2832
    %v2834 = vsel %vm560, %v2833, %v2829
    %v2835 = vlaneseq
    %v2836 = vshrl.u32 %v2835, 7
    %v2837 = vsub.s32 %v562, %v2836
    %v2838 = vrot.slane %v2510, %v2837
    %v2839 = vsel %vm567, %v2838, %v2834
    %v2840 = vlaneseq
    %v2841 = vshrl.u32 %v2840, 7
    %v2842 = vsub.s32 %v569, %v2841
    %v2843 = vrot.slane %v2514, %v2842
    %v2844 = vsel %vm574, %v2843, %v2839
    %v2845 = vlaneseq
    %v2846 = vshrl.u32 %v2845, 7
    %v2847 = vsub.s32 %v576, %v2846
    %v2848 = vrot.slane %v2518, %v2847
    %v2849 = vsel %vm581, %v2848, %v2844
    %v2850 = vlaneseq
    %v2851 = vshrl.u32 %v2850, 7
    %v2852 = vsub.s32 %v583, %v2851
    %v2853 = vrot.slane %v2522, %v2852
    %v2854 = vsel %vm588, %v2853, %v2849
    %v2855 = vsel %vm815, %v2795, %v2657
    %v2856 = vsel %vm815, %v2854, %v2716
    %v2859 = vsel %vm820, %v2855, 0.0
    %v2860 = vsel %vm822, %v2856, 0.0
    %v2861 = vadd.f32 %v2859, %v2860
    %2862 = vadd.xlane.f32.xlu0 %v2861
    %v2863 = vpop.xlane.xlu0 %2862
    %v2864 = vmul.f32 %v2863, 1.9929847e-05
    %v2865 = vmul.f32 %v827, %v2185
    %v2866 = vmul.f32 %v1506, %v2864
    %v2867 = vadd.f32 %v827, %v2185
    %v2868 = vadd.f32 %v1506, %v2864
    %v2869 = vmul.f32 %v2867, %v2868
    %v2870 = vmul.f32 %v2865, %v2866
    %v2871 = vld [vmem:[#allocation4] sm:$0xff]
    %v2872 = vld [vmem:[#allocation4 + $0x8] sm:$0xff]
    %v2873 = vld [vmem:[#allocation4 + $0x10] sm:$0xff]
    %v2874 = vld [vmem:[#allocation4 + $0x18] sm:$0xff]
    %v2875 = vld [vmem:[#allocation4 + $0x20] sm:$0xff]
    %v2876 = vld [vmem:[#allocation4 + $0x28] sm:$0xff]
    %v2877 = vld [vmem:[#allocation4 + $0x30] sm:$0xff]
    %v2878 = vld [vmem:[#allocation4 + $0x38] sm:$0xff]
    %v2879 = vld [vmem:[#allocation4 + $0x40] sm:$0xff]
    %v2880 = vld [vmem:[#allocation4 + $0x48] sm:$0xff]
    %v2881 = vld [vmem:[#allocation4 + $0x50] sm:$0xff]
    %v2882 = vld [vmem:[#allocation4 + $0x58] sm:$0xff]
    %v2883 = vld [vmem:[#allocation4 + $0x60] sm:$0xff]
    %v2884 = vld [vmem:[#allocation4 + $0x68] sm:$0xff]
    %v2885 = vld [vmem:[#allocation4 + $0x70] sm:$0xff]
    %v2886 = vld [vmem:[#allocation4 + $0x78] sm:$0xff]
    %v2887 = vld [vmem:[#allocation4 + $0x80] sm:$0xff]
    %v2888 = vld [vmem:[#allocation4 + $0x88] sm:$0xff]
    %v2889 = vld [vmem:[#allocation4 + $0x90] sm:$0xff]
    %v2890 = vld [vmem:[#allocation4 + $0x98] sm:$0xff]
    %v2891 = vld [vmem:[#allocation4 + $0xa0] sm:$0xff]
    %v2892 = vld [vmem:[#allocation4 + $0xa8] sm:$0xff]
    %v2893 = vld [vmem:[#allocation4 + $0xb0] sm:$0xff]
    %v2894 = vld [vmem:[#allocation4 + $0xb8] sm:$0xff]
    %v2895 = vld [vmem:[#allocation4 + $0xc0] sm:$0xff]
    %v2896 = vld [vmem:[#allocation4 + $0xc8] sm:$0xff]
    %v2897 = vld [vmem:[#allocation4 + $0xd0] sm:$0xff]
    %v2898 = vld [vmem:[#allocation4 + $0xd8] sm:$0xff]
    %v2899 = vld [vmem:[#allocation4 + $0xe0] sm:$0xff]
    %v2900 = vld [vmem:[#allocation4 + $0xe8] sm:$0xff]
    %v2901 = vld [vmem:[#allocation4 + $0xf0] sm:$0xff]
    %v2902 = vld [vmem:[#allocation4 + $0xf8] sm:$0xff]
    %v2903 = vld [vmem:[#allocation4 + $0x100] sm:$0xff]
    %v2904 = vld [vmem:[#allocation4 + $0x108] sm:$0xff]
    %v2905 = vld [vmem:[#allocation4 + $0x110] sm:$0xff]
    %v2906 = vld [vmem:[#allocation4 + $0x118] sm:$0xff]
    %v2907 = vld [vmem:[#allocation4 + $0x120] sm:$0xff]
    %v2908 = vld [vmem:[#allocation4 + $0x128] sm:$0xff]
    %v2909 = vld [vmem:[#allocation4 + $0x130] sm:$0xff]
    %v2910 = vld [vmem:[#allocation4 + $0x138] sm:$0xff]
    %v2911 = vld [vmem:[#allocation4 + $0x140] sm:$0xff]
    %v2912 = vld [vmem:[#allocation4 + $0x148] sm:$0xff]
    %v2913 = vld [vmem:[#allocation4 + $0x150] sm:$0xff]
    %v2914 = vld [vmem:[#allocation4 + $0x158] sm:$0xff]
    %v2915 = vld [vmem:[#allocation4 + $0x160] sm:$0xff]
    %v2916 = vld [vmem:[#allocation4 + $0x168] sm:$0xff]
    %v2917 = vld [vmem:[#allocation4 + $0x170] sm:$0xff]
    %v2918 = vld [vmem:[#allocation4 + $0x178] sm:$0xff]
    %v2919 = vld [vmem:[#allocation4 + $0x180] sm:$0xff]
    %v2920 = vld [vmem:[#allocation4 + $0x188] sm:$0xff]
    %v2921 = vld [vmem:[#allocation4 + $0x190] sm:$0xff]
    %v2922 = vld [vmem:[#allocation4 + $0x198] sm:$0xff]
    %v2923 = vld [vmem:[#allocation4 + $0x1a0] sm:$0xff]
    %v2924 = vld [vmem:[#allocation4 + $0x1a8] sm:$0xff]
    %v2925 = vld [vmem:[#allocation4 + $0x1b0] sm:$0xff]
    %v2926 = vld [vmem:[#allocation4 + $0x1b8] sm:$0xff]
    %v2927 = vld [vmem:[#allocation4 + $0x700] sm:$0xff]
    %v2928 = vld [vmem:[#allocation4 + $0x708] sm:$0xff]
    %v2929 = vld [vmem:[#allocation4 + $0x710] sm:$0xff]
    %v2930 = vld [vmem:[#allocation4 + $0x718] sm:$0xff]
    %v2931 = vld [vmem:[#allocation4 + $0x720] sm:$0xff]
    %v2932 = vld [vmem:[#allocation4 + $0x728] sm:$0xff]
    %v2933 = vld [vmem:[#allocation4 + $0x730] sm:$0xff]
    %v2934 = vld [vmem:[#allocation4 + $0x738] sm:$0xff]
    %v2935 = vld [vmem:[#allocation4 + $0x740] sm:$0xff]
    %v2936 = vld [vmem:[#allocation4 + $0x748] sm:$0xff]
    %v2937 = vld [vmem:[#allocation4 + $0x750] sm:$0xff]
    %v2938 = vld [vmem:[#allocation4 + $0x758] sm:$0xff]
    %v2939 = vld [vmem:[#allocation4 + $0x760] sm:$0xff]
    %v2940 = vld [vmem:[#allocation4 + $0x768] sm:$0xff]
    %v2941 = vld [vmem:[#allocation4 + $0x770] sm:$0xff]
    %v2942 = vld [vmem:[#allocation4 + $0x778] sm:$0xff]
    %v2943 = vld [vmem:[#allocation4 + $0x780] sm:$0xff]
    %v2944 = vld [vmem:[#allocation4 + $0x788] sm:$0xff]
    %v2945 = vld [vmem:[#allocation4 + $0x790] sm:$0xff]
    %v2946 = vld [vmem:[#allocation4 + $0x798] sm:$0xff]
    %v2947 = vld [vmem:[#allocation4 + $0x7a0] sm:$0xff]
    %v2948 = vld [vmem:[#allocation4 + $0x7a8] sm:$0xff]
    %v2949 = vld [vmem:[#allocation4 + $0x7b0] sm:$0xff]
    %v2950 = vld [vmem:[#allocation4 + $0x7b8] sm:$0xff]
    %v2951 = vld [vmem:[#allocation4 + $0x7c0] sm:$0xff]
    %v2952 = vld [vmem:[#allocation4 + $0x7c8] sm:$0xff]
    %v2953 = vld [vmem:[#allocation4 + $0x7d0] sm:$0xff]
    %v2954 = vld [vmem:[#allocation4 + $0x7d8] sm:$0xff]
    %v2955 = vld [vmem:[#allocation4 + $0x7e0] sm:$0xff]
    %v2956 = vld [vmem:[#allocation4 + $0x7e8] sm:$0xff]
    %v2957 = vld [vmem:[#allocation4 + $0x7f0] sm:$0xff]
    %v2958 = vld [vmem:[#allocation4 + $0x7f8] sm:$0xff]
    %v2959 = vld [vmem:[#allocation4 + $0x800] sm:$0xff]
    %v2960 = vld [vmem:[#allocation4 + $0x808] sm:$0xff]
    %v2961 = vld [vmem:[#allocation4 + $0x810] sm:$0xff]
    %v2962 = vld [vmem:[#allocation4 + $0x818] sm:$0xff]
    %v2963 = vld [vmem:[#allocation4 + $0x820] sm:$0xff]
    %v2964 = vld [vmem:[#allocation4 + $0x828] sm:$0xff]
    %v2965 = vld [vmem:[#allocation4 + $0x830] sm:$0xff]
    %v2966 = vld [vmem:[#allocation4 + $0x838] sm:$0xff]
    %v2967 = vld [vmem:[#allocation4 + $0x840] sm:$0xff]
    %v2968 = vld [vmem:[#allocation4 + $0x848] sm:$0xff]
    %v2969 = vld [vmem:[#allocation4 + $0x850] sm:$0xff]
    %v2970 = vld [vmem:[#allocation4 + $0x858] sm:$0xff]
    %v2971 = vld [vmem:[#allocation4 + $0x860] sm:$0xff]
    %v2972 = vld [vmem:[#allocation4 + $0x868] sm:$0xff]
    %v2973 = vld [vmem:[#allocation4 + $0x870] sm:$0xff]
    %v2974 = vld [vmem:[#allocation4 + $0x878] sm:$0xff]
    %v2975 = vld [vmem:[#allocation4 + $0x880] sm:$0xff]
    %v2976 = vld [vmem:[#allocation4 + $0x888] sm:$0xff]
    %v2977 = vld [vmem:[#allocation4 + $0x890] sm:$0xff]
    %v2978 = vld [vmem:[#allocation4 + $0x898] sm:$0xff]
    %v2979 = vld [vmem:[#allocation4 + $0x8a0] sm:$0xff]
    %v2980 = vld [vmem:[#allocation4 + $0x8a8] sm:$0xff]
    %v2981 = vld [vmem:[#allocation4 + $0x8b0] sm:$0xff]
    %v2982 = vld [vmem:[#allocation4 + $0x8b8] sm:$0xff]
    %v2983 = vsel %vm226, %v2872, 0.0
    %v2984 = vadd.f32 %v2871, %v2983
    %2985 = vadd.xlane.f32.xlu0 %v2984
    %v2986 = vpop.xlane.xlu0 %2985
    %v2987 = vsel %vm226, %v2874, 0.0
    %v2988 = vadd.f32 %v2873, %v2987
    %2989 = vadd.xlane.f32.xlu0 %v2988
    %v2990 = vpop.xlane.xlu0 %2989
    %v2991 = vsel %vm226, %v2876, 0.0
    %v2992 = vadd.f32 %v2875, %v2991
    %2993 = vadd.xlane.f32.xlu0 %v2992
    %v2994 = vpop.xlane.xlu0 %2993
    %v2995 = vsel %vm226, %v2878, 0.0
    %v2996 = vadd.f32 %v2877, %v2995
    %2997 = vadd.xlane.f32.xlu0 %v2996
    %v2998 = vpop.xlane.xlu0 %2997
    %v2999 = vsel %vm226, %v2880, 0.0
    %v3000 = vadd.f32 %v2879, %v2999
    %3001 = vadd.xlane.f32.xlu0 %v3000
    %v3002 = vpop.xlane.xlu0 %3001
    %v3003 = vsel %vm226, %v2882, 0.0
    %v3004 = vadd.f32 %v2881, %v3003
    %3005 = vadd.xlane.f32.xlu0 %v3004
    %v3006 = vpop.xlane.xlu0 %3005
    %v3007 = vsel %vm226, %v2884, 0.0
    %v3008 = vadd.f32 %v2883, %v3007
    %3009 = vadd.xlane.f32.xlu0 %v3008
    %v3010 = vpop.xlane.xlu0 %3009
    %v3011 = vsel %vm226, %v2886, 0.0
    %v3012 = vadd.f32 %v2885, %v3011
    %3013 = vadd.xlane.f32.xlu0 %v3012
    %v3014 = vpop.xlane.xlu0 %3013
    %v3015 = vsel %vm226, %v2888, 0.0
    %v3016 = vadd.f32 %v2887, %v3015
    %3017 = vadd.xlane.f32.xlu0 %v3016
    %v3018 = vpop.xlane.xlu0 %3017
    %v3019 = vsel %vm226, %v2890, 0.0
    %v3020 = vadd.f32 %v2889, %v3019
    %3021 = vadd.xlane.f32.xlu0 %v3020
    %v3022 = vpop.xlane.xlu0 %3021
    %v3023 = vsel %vm226, %v2892, 0.0
    %v3024 = vadd.f32 %v2891, %v3023
    %3025 = vadd.xlane.f32.xlu0 %v3024
    %v3026 = vpop.xlane.xlu0 %3025
    %v3027 = vsel %vm226, %v2894, 0.0
    %v3028 = vadd.f32 %v2893, %v3027
    %3029 = vadd.xlane.f32.xlu0 %v3028
    %v3030 = vpop.xlane.xlu0 %3029
    %v3031 = vsel %vm226, %v2896, 0.0
    %v3032 = vadd.f32 %v2895, %v3031
    %3033 = vadd.xlane.f32.xlu0 %v3032
    %v3034 = vpop.xlane.xlu0 %3033
    %v3035 = vsel %vm226, %v2898, 0.0
    %v3036 = vadd.f32 %v2897, %v3035
    %3037 = vadd.xlane.f32.xlu0 %v3036
    %v3038 = vpop.xlane.xlu0 %3037
    %v3039 = vsel %vm226, %v2900, 0.0
    %v3040 = vadd.f32 %v2899, %v3039
    %3041 = vadd.xlane.f32.xlu0 %v3040
    %v3042 = vpop.xlane.xlu0 %3041
    %v3043 = vsel %vm226, %v2902, 0.0
    %v3044 = vadd.f32 %v2901, %v3043
    %3045 = vadd.xlane.f32.xlu0 %v3044
    %v3046 = vpop.xlane.xlu0 %3045
    %v3047 = vsel %vm226, %v2904, 0.0
    %v3048 = vadd.f32 %v2903, %v3047
    %3049 = vadd.xlane.f32.xlu0 %v3048
    %v3050 = vpop.xlane.xlu0 %3049
    %v3051 = vsel %vm226, %v2906, 0.0
    %v3052 = vadd.f32 %v2905, %v3051
    %3053 = vadd.xlane.f32.xlu0 %v3052
    %v3054 = vpop.xlane.xlu0 %3053
    %v3055 = vsel %vm226, %v2908, 0.0
    %v3056 = vadd.f32 %v2907, %v3055
    %3057 = vadd.xlane.f32.xlu0 %v3056
    %v3058 = vpop.xlane.xlu0 %3057
    %v3059 = vsel %vm226, %v2910, 0.0
    %v3060 = vadd.f32 %v2909, %v3059
    %3061 = vadd.xlane.f32.xlu0 %v3060
    %v3062 = vpop.xlane.xlu0 %3061
    %v3063 = vsel %vm226, %v2912, 0.0
    %v3064 = vadd.f32 %v2911, %v3063
    %3065 = vadd.xlane.f32.xlu0 %v3064
    %v3066 = vpop.xlane.xlu0 %3065
    %v3067 = vsel %vm226, %v2914, 0.0
    %v3068 = vadd.f32 %v2913, %v3067
    %3069 = vadd.xlane.f32.xlu0 %v3068
    %v3070 = vpop.xlane.xlu0 %3069
    %v3071 = vsel %vm226, %v2916, 0.0
    %v3072 = vadd.f32 %v2915, %v3071
    %3073 = vadd.xlane.f32.xlu0 %v3072
    %v3074 = vpop.xlane.xlu0 %3073
    %v3075 = vsel %vm226, %v2918, 0.0
    %v3076 = vadd.f32 %v2917, %v3075
    %3077 = vadd.xlane.f32.xlu0 %v3076
    %v3078 = vpop.xlane.xlu0 %3077
    %v3079 = vsel %vm226, %v2920, 0.0
    %v3080 = vadd.f32 %v2919, %v3079
    %3081 = vadd.xlane.f32.xlu0 %v3080
    %v3082 = vpop.xlane.xlu0 %3081
    %v3083 = vsel %vm226, %v2922, 0.0
    %v3084 = vadd.f32 %v2921, %v3083
    %3085 = vadd.xlane.f32.xlu0 %v3084
    %v3086 = vpop.xlane.xlu0 %3085
    %v3087 = vsel %vm226, %v2924, 0.0
    %v3088 = vadd.f32 %v2923, %v3087
    %3089 = vadd.xlane.f32.xlu0 %v3088
    %v3090 = vpop.xlane.xlu0 %3089
    %v3091 = vsel %vm226, %v2926, 0.0
    %v3092 = vadd.f32 %v2925, %v3091
    %3093 = vadd.xlane.f32.xlu0 %v3092
    %v3094 = vpop.xlane.xlu0 %3093
    %v3095 = vsel %vm226, %v2928, 0.0
    %v3096 = vadd.f32 %v2927, %v3095
    %3097 = vadd.xlane.f32.xlu0 %v3096
    %v3098 = vpop.xlane.xlu0 %3097
    %v3099 = vsel %vm226, %v2930, 0.0
    %v3100 = vadd.f32 %v2929, %v3099
    %3101 = vadd.xlane.f32.xlu0 %v3100
    %v3102 = vpop.xlane.xlu0 %3101
    %v3103 = vsel %vm226, %v2932, 0.0
    %v3104 = vadd.f32 %v2931, %v3103
    %3105 = vadd.xlane.f32.xlu0 %v3104
    %v3106 = vpop.xlane.xlu0 %3105
    %v3107 = vsel %vm226, %v2934, 0.0
    %v3108 = vadd.f32 %v2933, %v3107
    %3109 = vadd.xlane.f32.xlu0 %v3108
    %v3110 = vpop.xlane.xlu0 %3109
    %v3111 = vsel %vm226, %v2936, 0.0
    %v3112 = vadd.f32 %v2935, %v3111
    %3113 = vadd.xlane.f32.xlu0 %v3112
    %v3114 = vpop.xlane.xlu0 %3113
    %v3115 = vsel %vm226, %v2938, 0.0
    %v3116 = vadd.f32 %v2937, %v3115
    %3117 = vadd.xlane.f32.xlu0 %v3116
    %v3118 = vpop.xlane.xlu0 %3117
    %v3119 = vsel %vm226, %v2940, 0.0
    %v3120 = vadd.f32 %v2939, %v3119
    %3121 = vadd.xlane.f32.xlu0 %v3120
    %v3122 = vpop.xlane.xlu0 %3121
    %v3123 = vsel %vm226, %v2942, 0.0
    %v3124 = vadd.f32 %v2941, %v3123
    %3125 = vadd.xlane.f32.xlu0 %v3124
    %v3126 = vpop.xlane.xlu0 %3125
    %v3127 = vsel %vm226, %v2944, 0.0
    %v3128 = vadd.f32 %v2943, %v3127
    %3129 = vadd.xlane.f32.xlu0 %v3128
    %v3130 = vpop.xlane.xlu0 %3129
    %v3131 = vsel %vm226, %v2946, 0.0
    %v3132 = vadd.f32 %v2945, %v3131
    %3133 = vadd.xlane.f32.xlu0 %v3132
    %v3134 = vpop.xlane.xlu0 %3133
    %v3135 = vsel %vm226, %v2948, 0.0
    %v3136 = vadd.f32 %v2947, %v3135
    %3137 = vadd.xlane.f32.xlu0 %v3136
    %v3138 = vpop.xlane.xlu0 %3137
    %v3139 = vsel %vm226, %v2950, 0.0
    %v3140 = vadd.f32 %v2949, %v3139
    %3141 = vadd.xlane.f32.xlu0 %v3140
    %v3142 = vpop.xlane.xlu0 %3141
    %v3143 = vsel %vm226, %v2952, 0.0
    %v3144 = vadd.f32 %v2951, %v3143
    %3145 = vadd.xlane.f32.xlu0 %v3144
    %v3146 = vpop.xlane.xlu0 %3145
    %v3147 = vsel %vm226, %v2954, 0.0
    %v3148 = vadd.f32 %v2953, %v3147
    %3149 = vadd.xlane.f32.xlu0 %v3148
    %v3150 = vpop.xlane.xlu0 %3149
    %v3151 = vsel %vm226, %v2956, 0.0
    %v3152 = vadd.f32 %v2955, %v3151
    %3153 = vadd.xlane.f32.xlu0 %v3152
    %v3154 = vpop.xlane.xlu0 %3153
    %v3155 = vsel %vm226, %v2958, 0.0
    %v3156 = vadd.f32 %v2957, %v3155
    %3157 = vadd.xlane.f32.xlu0 %v3156
    %v3158 = vpop.xlane.xlu0 %3157
    %v3159 = vsel %vm226, %v2960, 0.0
    %v3160 = vadd.f32 %v2959, %v3159
    %3161 = vadd.xlane.f32.xlu0 %v3160
    %v3162 = vpop.xlane.xlu0 %3161
    %v3163 = vsel %vm226, %v2962, 0.0
    %v3164 = vadd.f32 %v2961, %v3163
    %3165 = vadd.xlane.f32.xlu0 %v3164
    %v3166 = vpop.xlane.xlu0 %3165
    %v3167 = vsel %vm226, %v2964, 0.0
    %v3168 = vadd.f32 %v2963, %v3167
    %3169 = vadd.xlane.f32.xlu0 %v3168
    %v3170 = vpop.xlane.xlu0 %3169
    %v3171 = vsel %vm226, %v2966, 0.0
    %v3172 = vadd.f32 %v2965, %v3171
    %3173 = vadd.xlane.f32.xlu0 %v3172
    %v3174 = vpop.xlane.xlu0 %3173
    %v3175 = vsel %vm226, %v2968, 0.0
    %v3176 = vadd.f32 %v2967, %v3175
    %3177 = vadd.xlane.f32.xlu0 %v3176
    %v3178 = vpop.xlane.xlu0 %3177
    %v3179 = vsel %vm226, %v2970, 0.0
    %v3180 = vadd.f32 %v2969, %v3179
    %3181 = vadd.xlane.f32.xlu0 %v3180
    %v3182 = vpop.xlane.xlu0 %3181
    %v3183 = vsel %vm226, %v2972, 0.0
    %v3184 = vadd.f32 %v2971, %v3183
    %3185 = vadd.xlane.f32.xlu0 %v3184
    %v3186 = vpop.xlane.xlu0 %3185
    %v3187 = vsel %vm226, %v2974, 0.0
    %v3188 = vadd.f32 %v2973, %v3187
    %3189 = vadd.xlane.f32.xlu0 %v3188
    %v3190 = vpop.xlane.xlu0 %3189
    %v3191 = vsel %vm226, %v2976, 0.0
    %v3192 = vadd.f32 %v2975, %v3191
    %3193 = vadd.xlane.f32.xlu0 %v3192
    %v3194 = vpop.xlane.xlu0 %3193
    %v3195 = vsel %vm226, %v2978, 0.0
    %v3196 = vadd.f32 %v2977, %v3195
    %3197 = vadd.xlane.f32.xlu0 %v3196
    %v3198 = vpop.xlane.xlu0 %3197
    %v3199 = vsel %vm226, %v2980, 0.0
    %v3200 = vadd.f32 %v2979, %v3199
    %3201 = vadd.xlane.f32.xlu0 %v3200
    %v3202 = vpop.xlane.xlu0 %3201
    %v3203 = vsel %vm226, %v2982, 0.0
    %v3204 = vadd.f32 %v2981, %v3203
    %3205 = vadd.xlane.f32.xlu0 %v3204
    %v3206 = vpop.xlane.xlu0 %3205
    %v3263 = vlaneseq
    %v3264 = vshrl.u32 %v3263, 7
    %v3265 = vsub.s32 %v508, %v3264
    %v3266 = vrot.slane %v2986, %v3265
    %v3267 = vlaneseq
    %v3268 = vshrl.u32 %v3267, 7
    %v3269 = vsub.s32 %v513, %v3268
    %v3270 = vrot.slane %v2990, %v3269
    %v3271 = vsel %vm518, %v3270, %v3266
    %v3272 = vlaneseq
    %v3273 = vshrl.u32 %v3272, 7
    %v3274 = vsub.s32 %v520, %v3273
    %v3275 = vrot.slane %v2994, %v3274
    %v3276 = vsel %vm525, %v3275, %v3271
    %v3277 = vlaneseq
    %v3278 = vshrl.u32 %v3277, 7
    %v3279 = vsub.s32 %v527, %v3278
    %v3280 = vrot.slane %v2998, %v3279
    %v3281 = vsel %vm532, %v3280, %v3276
    %v3282 = vlaneseq
    %v3283 = vshrl.u32 %v3282, 7
    %v3284 = vsub.s32 %v534, %v3283
    %v3285 = vrot.slane %v3002, %v3284
    %v3286 = vsel %vm539, %v3285, %v3281
    %v3287 = vlaneseq
    %v3288 = vshrl.u32 %v3287, 7
    %v3289 = vsub.s32 %v541, %v3288
    %v3290 = vrot.slane %v3006, %v3289
    %v3291 = vsel %vm546, %v3290, %v3286
    %v3292 = vlaneseq
    %v3293 = vshrl.u32 %v3292, 7
    %v3294 = vsub.s32 %v548, %v3293
    %v3295 = vrot.slane %v3010, %v3294
    %v3296 = vsel %vm553, %v3295, %v3291
    %v3297 = vlaneseq
    %v3298 = vshrl.u32 %v3297, 7
    %v3299 = vsub.s32 %v555, %v3298
    %v3300 = vrot.slane %v3014, %v3299
    %v3301 = vsel %vm560, %v3300, %v3296
    %v3302 = vlaneseq
    %v3303 = vshrl.u32 %v3302, 7
    %v3304 = vsub.s32 %v562, %v3303
    %v3305 = vrot.slane %v3018, %v3304
    %v3306 = vsel %vm567, %v3305, %v3301
    %v3307 = vlaneseq
    %v3308 = vshrl.u32 %v3307, 7
    %v3309 = vsub.s32 %v569, %v3308
    %v3310 = vrot.slane %v3022, %v3309
    %v3311 = vsel %vm574, %v3310, %v3306
    %v3312 = vlaneseq
    %v3313 = vshrl.u32 %v3312, 7
    %v3314 = vsub.s32 %v576, %v3313
    %v3315 = vrot.slane %v3026, %v3314
    %v3316 = vsel %vm581, %v3315, %v3311
    %v3317 = vlaneseq
    %v3318 = vshrl.u32 %v3317, 7
    %v3319 = vsub.s32 %v583, %v3318
    %v3320 = vrot.slane %v3030, %v3319
    %v3321 = vsel %vm588, %v3320, %v3316
    %v3322 = vlaneseq
    %v3323 = vshrl.u32 %v3322, 7
    %v3324 = vsub.s32 %v590, %v3323
    %v3325 = vrot.slane %v3034, %v3324
    %v3326 = vsel %vm595, %v3325, %v3321
    %v3327 = vlaneseq
    %v3328 = vshrl.u32 %v3327, 7
    %v3329 = vsub.s32 %v597, %v3328
    %v3330 = vrot.slane %v3038, %v3329
    %v3331 = vsel %vm602, %v3330, %v3326
    %v3332 = vlaneseq
    %v3333 = vshrl.u32 %v3332, 7
    %v3334 = vsub.s32 %v604, %v3333
    %v3335 = vrot.slane %v3042, %v3334
    %v3336 = vsel %vm609, %v3335, %v3331
    %v3337 = vlaneseq
    %v3338 = vshrl.u32 %v3337, 7
    %v3339 = vsub.s32 %v611, %v3338
    %v3340 = vrot.slane %v3046, %v3339
    %v3341 = vsel %vm616, %v3340, %v3336
    %v3342 = vlaneseq
    %v3343 = vshrl.u32 %v3342, 7
    %v3344 = vsub.s32 %v508, %v3343
    %v3345 = vrot.slane %v3050, %v3344
    %v3346 = vlaneseq
    %v3347 = vshrl.u32 %v3346, 7
    %v3348 = vsub.s32 %v513, %v3347
    %v3349 = vrot.slane %v3054, %v3348
    %v3350 = vsel %vm518, %v3349, %v3345
    %v3351 = vlaneseq
    %v3352 = vshrl.u32 %v3351, 7
    %v3353 = vsub.s32 %v520, %v3352
    %v3354 = vrot.slane %v3058, %v3353
    %v3355 = vsel %vm525, %v3354, %v3350
    %v3356 = vlaneseq
    %v3357 = vshrl.u32 %v3356, 7
    %v3358 = vsub.s32 %v527, %v3357
    %v3359 = vrot.slane %v3062, %v3358
    %v3360 = vsel %vm532, %v3359, %v3355
    %v3361 = vlaneseq
    %v3362 = vshrl.u32 %v3361, 7
    %v3363 = vsub.s32 %v534, %v3362
    %v3364 = vrot.slane %v3066, %v3363
    %v3365 = vsel %vm539, %v3364, %v3360
    %v3366 = vlaneseq
    %v3367 = vshrl.u32 %v3366, 7
    %v3368 = vsub.s32 %v541, %v3367
    %v3369 = vrot.slane %v3070, %v3368
    %v3370 = vsel %vm546, %v3369, %v3365
    %v3371 = vlaneseq
    %v3372 = vshrl.u32 %v3371, 7
    %v3373 = vsub.s32 %v548, %v3372
    %v3374 = vrot.slane %v3074, %v3373
    %v3375 = vsel %vm553, %v3374, %v3370
    %v3376 = vlaneseq
    %v3377 = vshrl.u32 %v3376, 7
    %v3378 = vsub.s32 %v555, %v3377
    %v3379 = vrot.slane %v3078, %v3378
    %v3380 = vsel %vm560, %v3379, %v3375
    %v3381 = vlaneseq
    %v3382 = vshrl.u32 %v3381, 7
    %v3383 = vsub.s32 %v562, %v3382
    %v3384 = vrot.slane %v3082, %v3383
    %v3385 = vsel %vm567, %v3384, %v3380
    %v3386 = vlaneseq
    %v3387 = vshrl.u32 %v3386, 7
    %v3388 = vsub.s32 %v569, %v3387
    %v3389 = vrot.slane %v3086, %v3388
    %v3390 = vsel %vm574, %v3389, %v3385
    %v3391 = vlaneseq
    %v3392 = vshrl.u32 %v3391, 7
    %v3393 = vsub.s32 %v576, %v3392
    %v3394 = vrot.slane %v3090, %v3393
    %v3395 = vsel %vm581, %v3394, %v3390
    %v3396 = vlaneseq
    %v3397 = vshrl.u32 %v3396, 7
    %v3398 = vsub.s32 %v583, %v3397
    %v3399 = vrot.slane %v3094, %v3398
    %v3400 = vsel %vm588, %v3399, %v3395
    %v3401 = vlaneseq
    %v3402 = vshrl.u32 %v3401, 7
    %v3403 = vsub.s32 %v508, %v3402
    %v3404 = vrot.slane %v3098, %v3403
    %v3405 = vlaneseq
    %v3406 = vshrl.u32 %v3405, 7
    %v3407 = vsub.s32 %v513, %v3406
    %v3408 = vrot.slane %v3102, %v3407
    %v3409 = vsel %vm518, %v3408, %v3404
    %v3410 = vlaneseq
    %v3411 = vshrl.u32 %v3410, 7
    %v3412 = vsub.s32 %v520, %v3411
    %v3413 = vrot.slane %v3106, %v3412
    %v3414 = vsel %vm525, %v3413, %v3409
    %v3415 = vlaneseq
    %v3416 = vshrl.u32 %v3415, 7
    %v3417 = vsub.s32 %v527, %v3416
    %v3418 = vrot.slane %v3110, %v3417
    %v3419 = vsel %vm532, %v3418, %v3414
    %v3420 = vlaneseq
    %v3421 = vshrl.u32 %v3420, 7
    %v3422 = vsub.s32 %v534, %v3421
    %v3423 = vrot.slane %v3114, %v3422
    %v3424 = vsel %vm539, %v3423, %v3419
    %v3425 = vlaneseq
    %v3426 = vshrl.u32 %v3425, 7
    %v3427 = vsub.s32 %v541, %v3426
    %v3428 = vrot.slane %v3118, %v3427
    %v3429 = vsel %vm546, %v3428, %v3424
    %v3430 = vlaneseq
    %v3431 = vshrl.u32 %v3430, 7
    %v3432 = vsub.s32 %v548, %v3431
    %v3433 = vrot.slane %v3122, %v3432
    %v3434 = vsel %vm553, %v3433, %v3429
    %v3435 = vlaneseq
    %v3436 = vshrl.u32 %v3435, 7
    %v3437 = vsub.s32 %v555, %v3436
    %v3438 = vrot.slane %v3126, %v3437
    %v3439 = vsel %vm560, %v3438, %v3434
    %v3440 = vlaneseq
    %v3441 = vshrl.u32 %v3440, 7
    %v3442 = vsub.s32 %v562, %v3441
    %v3443 = vrot.slane %v3130, %v3442
    %v3444 = vsel %vm567, %v3443, %v3439
    %v3445 = vlaneseq
    %v3446 = vshrl.u32 %v3445, 7
    %v3447 = vsub.s32 %v569, %v3446
    %v3448 = vrot.slane %v3134, %v3447
    %v3449 = vsel %vm574, %v3448, %v3444
    %v3450 = vlaneseq
    %v3451 = vshrl.u32 %v3450, 7
    %v3452 = vsub.s32 %v576, %v3451
    %v3453 = vrot.slane %v3138, %v3452
    %v3454 = vsel %vm581, %v3453, %v3449
    %v3455 = vlaneseq
    %v3456 = vshrl.u32 %v3455, 7
    %v3457 = vsub.s32 %v583, %v3456
    %v3458 = vrot.slane %v3142, %v3457
    %v3459 = vsel %vm588, %v3458, %v3454
    %v3460 = vlaneseq
    %v3461 = vshrl.u32 %v3460, 7
    %v3462 = vsub.s32 %v590, %v3461
    %v3463 = vrot.slane %v3146, %v3462
    %v3464 = vsel %vm595, %v3463, %v3459
    %v3465 = vlaneseq
    %v3466 = vshrl.u32 %v3465, 7
    %v3467 = vsub.s32 %v597, %v3466
    %v3468 = vrot.slane %v3150, %v3467
    %v3469 = vsel %vm602, %v3468, %v3464
    %v3470 = vlaneseq
    %v3471 = vshrl.u32 %v3470, 7
    %v3472 = vsub.s32 %v604, %v3471
    %v3473 = vrot.slane %v3154, %v3472
    %v3474 = vsel %vm609, %v3473, %v3469
    %v3475 = vlaneseq
    %v3476 = vshrl.u32 %v3475, 7
    %v3477 = vsub.s32 %v611, %v3476
    %v3478 = vrot.slane %v3158, %v3477
    %v3479 = vsel %vm616, %v3478, %v3474
    %v3480 = vlaneseq
    %v3481 = vshrl.u32 %v3480, 7
    %v3482 = vsub.s32 %v508, %v3481
    %v3483 = vrot.slane %v3162, %v3482
    %v3484 = vlaneseq
    %v3485 = vshrl.u32 %v3484, 7
    %v3486 = vsub.s32 %v513, %v3485
    %v3487 = vrot.slane %v3166, %v3486
    %v3488 = vsel %vm518, %v3487, %v3483
    %v3489 = vlaneseq
    %v3490 = vshrl.u32 %v3489, 7
    %v3491 = vsub.s32 %v520, %v3490
    %v3492 = vrot.slane %v3170, %v3491
    %v3493 = vsel %vm525, %v3492, %v3488
    %v3494 = vlaneseq
    %v3495 = vshrl.u32 %v3494, 7
    %v3496 = vsub.s32 %v527, %v3495
    %v3497 = vrot.slane %v3174, %v3496
    %v3498 = vsel %vm532, %v3497, %v3493
    %v3499 = vlaneseq
    %v3500 = vshrl.u32 %v3499, 7
    %v3501 = vsub.s32 %v534, %v3500
    %v3502 = vrot.slane %v3178, %v3501
    %v3503 = vsel %vm539, %v3502, %v3498
    %v3504 = vlaneseq
    %v3505 = vshrl.u32 %v3504, 7
    %v3506 = vsub.s32 %v541, %v3505
    %v3507 = vrot.slane %v3182, %v3506
    %v3508 = vsel %vm546, %v3507, %v3503
    %v3509 = vlaneseq
    %v3510 = vshrl.u32 %v3509, 7
    %v3511 = vsub.s32 %v548, %v3510
    %v3512 = vrot.slane %v3186, %v3511
    %v3513 = vsel %vm553, %v3512, %v3508
    %v3514 = vlaneseq
    %v3515 = vshrl.u32 %v3514, 7
    %v3516 = vsub.s32 %v555, %v3515
    %v3517 = vrot.slane %v3190, %v3516
    %v3518 = vsel %vm560, %v3517, %v3513
    %v3519 = vlaneseq
    %v3520 = vshrl.u32 %v3519, 7
    %v3521 = vsub.s32 %v562, %v3520
    %v3522 = vrot.slane %v3194, %v3521
    %v3523 = vsel %vm567, %v3522, %v3518
    %v3524 = vlaneseq
    %v3525 = vshrl.u32 %v3524, 7
    %v3526 = vsub.s32 %v569, %v3525
    %v3527 = vrot.slane %v3198, %v3526
    %v3528 = vsel %vm574, %v3527, %v3523
    %v3529 = vlaneseq
    %v3530 = vshrl.u32 %v3529, 7
    %v3531 = vsub.s32 %v576, %v3530
    %v3532 = vrot.slane %v3202, %v3531
    %v3533 = vsel %vm581, %v3532, %v3528
    %v3534 = vlaneseq
    %v3535 = vshrl.u32 %v3534, 7
    %v3536 = vsub.s32 %v583, %v3535
    %v3537 = vrot.slane %v3206, %v3536
    %v3538 = vsel %vm588, %v3537, %v3533
    %v3539 = vsel %vm815, %v3479, %v3341
    %v3540 = vsel %vm815, %v3538, %v3400
    %v3543 = vsel %vm820, %v3539, 0.0
    %v3544 = vsel %vm822, %v3540, 0.0
    %v3545 = vadd.f32 %v3543, %v3544
    %3546 = vadd.xlane.f32.xlu0 %v3545
    %v3547 = vpop.xlane.xlu0 %3546
    %v3548 = vmul.f32 %v3547, 1.9929847e-05
    %s3549 = scalar_lea.vmem [#allocation4], 448
    %v3550 = vld [vmem:[%s3549] sm:$0xff]
    %v3551 = vld [vmem:[%s3549 + $0x8] sm:$0xff]
    %v3552 = vld [vmem:[%s3549 + $0x10] sm:$0xff]
    %v3553 = vld [vmem:[%s3549 + $0x18] sm:$0xff]
    %v3554 = vld [vmem:[%s3549 + $0x20] sm:$0xff]
    %v3555 = vld [vmem:[%s3549 + $0x28] sm:$0xff]
    %v3556 = vld [vmem:[%s3549 + $0x30] sm:$0xff]
    %v3557 = vld [vmem:[%s3549 + $0x38] sm:$0xff]
    %v3558 = vld [vmem:[%s3549 + $0x40] sm:$0xff]
    %v3559 = vld [vmem:[%s3549 + $0x48] sm:$0xff]
    %v3560 = vld [vmem:[%s3549 + $0x50] sm:$0xff]
    %v3561 = vld [vmem:[%s3549 + $0x58] sm:$0xff]
    %v3562 = vld [vmem:[%s3549 + $0x60] sm:$0xff]
    %v3563 = vld [vmem:[%s3549 + $0x68] sm:$0xff]
    %v3564 = vld [vmem:[%s3549 + $0x70] sm:$0xff]
    %v3565 = vld [vmem:[%s3549 + $0x78] sm:$0xff]
    %v3566 = vld [vmem:[%s3549 + $0x80] sm:$0xff]
    %v3567 = vld [vmem:[%s3549 + $0x88] sm:$0xff]
    %v3568 = vld [vmem:[%s3549 + $0x90] sm:$0xff]
    %v3569 = vld [vmem:[%s3549 + $0x98] sm:$0xff]
    %v3570 = vld [vmem:[%s3549 + $0xa0] sm:$0xff]
    %v3571 = vld [vmem:[%s3549 + $0xa8] sm:$0xff]
    %v3572 = vld [vmem:[%s3549 + $0xb0] sm:$0xff]
    %v3573 = vld [vmem:[%s3549 + $0xb8] sm:$0xff]
    %v3574 = vld [vmem:[%s3549 + $0xc0] sm:$0xff]
    %v3575 = vld [vmem:[%s3549 + $0xc8] sm:$0xff]
    %v3576 = vld [vmem:[%s3549 + $0xd0] sm:$0xff]
    %v3577 = vld [vmem:[%s3549 + $0xd8] sm:$0xff]
    %v3578 = vld [vmem:[%s3549 + $0xe0] sm:$0xff]
    %v3579 = vld [vmem:[%s3549 + $0xe8] sm:$0xff]
    %v3580 = vld [vmem:[%s3549 + $0xf0] sm:$0xff]
    %v3581 = vld [vmem:[%s3549 + $0xf8] sm:$0xff]
    %v3582 = vld [vmem:[%s3549 + $0x100] sm:$0xff]
    %v3583 = vld [vmem:[%s3549 + $0x108] sm:$0xff]
    %v3584 = vld [vmem:[%s3549 + $0x110] sm:$0xff]
    %v3585 = vld [vmem:[%s3549 + $0x118] sm:$0xff]
    %v3586 = vld [vmem:[%s3549 + $0x120] sm:$0xff]
    %v3587 = vld [vmem:[%s3549 + $0x128] sm:$0xff]
    %v3588 = vld [vmem:[%s3549 + $0x130] sm:$0xff]
    %v3589 = vld [vmem:[%s3549 + $0x138] sm:$0xff]
    %v3590 = vld [vmem:[%s3549 + $0x140] sm:$0xff]
    %v3591 = vld [vmem:[%s3549 + $0x148] sm:$0xff]
    %v3592 = vld [vmem:[%s3549 + $0x150] sm:$0xff]
    %v3593 = vld [vmem:[%s3549 + $0x158] sm:$0xff]
    %v3594 = vld [vmem:[%s3549 + $0x160] sm:$0xff]
    %v3595 = vld [vmem:[%s3549 + $0x168] sm:$0xff]
    %v3596 = vld [vmem:[%s3549 + $0x170] sm:$0xff]
    %v3597 = vld [vmem:[%s3549 + $0x178] sm:$0xff]
    %v3598 = vld [vmem:[%s3549 + $0x180] sm:$0xff]
    %v3599 = vld [vmem:[%s3549 + $0x188] sm:$0xff]
    %v3600 = vld [vmem:[%s3549 + $0x190] sm:$0xff]
    %v3601 = vld [vmem:[%s3549 + $0x198] sm:$0xff]
    %v3602 = vld [vmem:[%s3549 + $0x1a0] sm:$0xff]
    %v3603 = vld [vmem:[%s3549 + $0x1a8] sm:$0xff]
    %v3604 = vld [vmem:[%s3549 + $0x1b0] sm:$0xff]
    %v3605 = vld [vmem:[%s3549 + $0x1b8] sm:$0xff]
    %v3606 = vld [vmem:[%s3549 + $0x700] sm:$0xff]
    %v3607 = vld [vmem:[%s3549 + $0x708] sm:$0xff]
    %v3608 = vld [vmem:[%s3549 + $0x710] sm:$0xff]
    %v3609 = vld [vmem:[%s3549 + $0x718] sm:$0xff]
    %v3610 = vld [vmem:[%s3549 + $0x720] sm:$0xff]
    %v3611 = vld [vmem:[%s3549 + $0x728] sm:$0xff]
    %v3612 = vld [vmem:[%s3549 + $0x730] sm:$0xff]
    %v3613 = vld [vmem:[%s3549 + $0x738] sm:$0xff]
    %v3614 = vld [vmem:[%s3549 + $0x740] sm:$0xff]
    %v3615 = vld [vmem:[%s3549 + $0x748] sm:$0xff]
    %v3616 = vld [vmem:[%s3549 + $0x750] sm:$0xff]
    %v3617 = vld [vmem:[%s3549 + $0x758] sm:$0xff]
    %v3618 = vld [vmem:[%s3549 + $0x760] sm:$0xff]
    %v3619 = vld [vmem:[%s3549 + $0x768] sm:$0xff]
    %v3620 = vld [vmem:[%s3549 + $0x770] sm:$0xff]
    %v3621 = vld [vmem:[%s3549 + $0x778] sm:$0xff]
    %v3622 = vld [vmem:[%s3549 + $0x780] sm:$0xff]
    %v3623 = vld [vmem:[%s3549 + $0x788] sm:$0xff]
    %v3624 = vld [vmem:[%s3549 + $0x790] sm:$0xff]
    %v3625 = vld [vmem:[%s3549 + $0x798] sm:$0xff]
    %v3626 = vld [vmem:[%s3549 + $0x7a0] sm:$0xff]
    %v3627 = vld [vmem:[%s3549 + $0x7a8] sm:$0xff]
    %v3628 = vld [vmem:[%s3549 + $0x7b0] sm:$0xff]
    %v3629 = vld [vmem:[%s3549 + $0x7b8] sm:$0xff]
    %v3630 = vld [vmem:[%s3549 + $0x7c0] sm:$0xff]
    %v3631 = vld [vmem:[%s3549 + $0x7c8] sm:$0xff]
    %v3632 = vld [vmem:[%s3549 + $0x7d0] sm:$0xff]
    %v3633 = vld [vmem:[%s3549 + $0x7d8] sm:$0xff]
    %v3634 = vld [vmem:[%s3549 + $0x7e0] sm:$0xff]
    %v3635 = vld [vmem:[%s3549 + $0x7e8] sm:$0xff]
    %v3636 = vld [vmem:[%s3549 + $0x7f0] sm:$0xff]
    %v3637 = vld [vmem:[%s3549 + $0x7f8] sm:$0xff]
    %v3638 = vld [vmem:[%s3549 + $0x800] sm:$0xff]
    %v3639 = vld [vmem:[%s3549 + $0x808] sm:$0xff]
    %v3640 = vld [vmem:[%s3549 + $0x810] sm:$0xff]
    %v3641 = vld [vmem:[%s3549 + $0x818] sm:$0xff]
    %v3642 = vld [vmem:[%s3549 + $0x820] sm:$0xff]
    %v3643 = vld [vmem:[%s3549 + $0x828] sm:$0xff]
    %v3644 = vld [vmem:[%s3549 + $0x830] sm:$0xff]
    %v3645 = vld [vmem:[%s3549 + $0x838] sm:$0xff]
    %v3646 = vld [vmem:[%s3549 + $0x840] sm:$0xff]
    %v3647 = vld [vmem:[%s3549 + $0x848] sm:$0xff]
    %v3648 = vld [vmem:[%s3549 + $0x850] sm:$0xff]
    %v3649 = vld [vmem:[%s3549 + $0x858] sm:$0xff]
    %v3650 = vld [vmem:[%s3549 + $0x860] sm:$0xff]
    %v3651 = vld [vmem:[%s3549 + $0x868] sm:$0xff]
    %v3652 = vld [vmem:[%s3549 + $0x870] sm:$0xff]
    %v3653 = vld [vmem:[%s3549 + $0x878] sm:$0xff]
    %v3654 = vld [vmem:[%s3549 + $0x880] sm:$0xff]
    %v3655 = vld [vmem:[%s3549 + $0x888] sm:$0xff]
    %v3656 = vld [vmem:[%s3549 + $0x890] sm:$0xff]
    %v3657 = vld [vmem:[%s3549 + $0x898] sm:$0xff]
    %v3658 = vld [vmem:[%s3549 + $0x8a0] sm:$0xff]
    %v3659 = vld [vmem:[%s3549 + $0x8a8] sm:$0xff]
    %v3660 = vld [vmem:[%s3549 + $0x8b0] sm:$0xff]
    %v3661 = vld [vmem:[%s3549 + $0x8b8] sm:$0xff]
    %v3662 = vsel %vm226, %v3551, 0.0
    %v3663 = vadd.f32 %v3550, %v3662
    %3664 = vadd.xlane.f32.xlu0 %v3663
    %v3665 = vpop.xlane.xlu0 %3664
    %v3666 = vsel %vm226, %v3553, 0.0
    %v3667 = vadd.f32 %v3552, %v3666
    %3668 = vadd.xlane.f32.xlu0 %v3667
    %v3669 = vpop.xlane.xlu0 %3668
    %v3670 = vsel %vm226, %v3555, 0.0
    %v3671 = vadd.f32 %v3554, %v3670
    %3672 = vadd.xlane.f32.xlu0 %v3671
    %v3673 = vpop.xlane.xlu0 %3672
    %v3674 = vsel %vm226, %v3557, 0.0
    %v3675 = vadd.f32 %v3556, %v3674
    %3676 = vadd.xlane.f32.xlu0 %v3675
    %v3677 = vpop.xlane.xlu0 %3676
    %v3678 = vsel %vm226, %v3559, 0.0
    %v3679 = vadd.f32 %v3558, %v3678
    %3680 = vadd.xlane.f32.xlu0 %v3679
    %v3681 = vpop.xlane.xlu0 %3680
    %v3682 = vsel %vm226, %v3561, 0.0
    %v3683 = vadd.f32 %v3560, %v3682
    %3684 = vadd.xlane.f32.xlu0 %v3683
    %v3685 = vpop.xlane.xlu0 %3684
    %v3686 = vsel %vm226, %v3563, 0.0
    %v3687 = vadd.f32 %v3562, %v3686
    %3688 = vadd.xlane.f32.xlu0 %v3687
    %v3689 = vpop.xlane.xlu0 %3688
    %v3690 = vsel %vm226, %v3565, 0.0
    %v3691 = vadd.f32 %v3564, %v3690
    %3692 = vadd.xlane.f32.xlu0 %v3691
    %v3693 = vpop.xlane.xlu0 %3692
    %v3694 = vsel %vm226, %v3567, 0.0
    %v3695 = vadd.f32 %v3566, %v3694
    %3696 = vadd.xlane.f32.xlu0 %v3695
    %v3697 = vpop.xlane.xlu0 %3696
    %v3698 = vsel %vm226, %v3569, 0.0
    %v3699 = vadd.f32 %v3568, %v3698
    %3700 = vadd.xlane.f32.xlu0 %v3699
    %v3701 = vpop.xlane.xlu0 %3700
    %v3702 = vsel %vm226, %v3571, 0.0
    %v3703 = vadd.f32 %v3570, %v3702
    %3704 = vadd.xlane.f32.xlu0 %v3703
    %v3705 = vpop.xlane.xlu0 %3704
    %v3706 = vsel %vm226, %v3573, 0.0
    %v3707 = vadd.f32 %v3572, %v3706
    %3708 = vadd.xlane.f32.xlu0 %v3707
    %v3709 = vpop.xlane.xlu0 %3708
    %v3710 = vsel %vm226, %v3575, 0.0
    %v3711 = vadd.f32 %v3574, %v3710
    %3712 = vadd.xlane.f32.xlu0 %v3711
    %v3713 = vpop.xlane.xlu0 %3712
    %v3714 = vsel %vm226, %v3577, 0.0
    %v3715 = vadd.f32 %v3576, %v3714
    %3716 = vadd.xlane.f32.xlu0 %v3715
    %v3717 = vpop.xlane.xlu0 %3716
    %v3718 = vsel %vm226, %v3579, 0.0
    %v3719 = vadd.f32 %v3578, %v3718
    %3720 = vadd.xlane.f32.xlu0 %v3719
    %v3721 = vpop.xlane.xlu0 %3720
    %v3722 = vsel %vm226, %v3581, 0.0
    %v3723 = vadd.f32 %v3580, %v3722
    %3724 = vadd.xlane.f32.xlu0 %v3723
    %v3725 = vpop.xlane.xlu0 %3724
    %v3726 = vsel %vm226, %v3583, 0.0
    %v3727 = vadd.f32 %v3582, %v3726
    %3728 = vadd.xlane.f32.xlu0 %v3727
    %v3729 = vpop.xlane.xlu0 %3728
    %v3730 = vsel %vm226, %v3585, 0.0
    %v3731 = vadd.f32 %v3584, %v3730
    %3732 = vadd.xlane.f32.xlu0 %v3731
    %v3733 = vpop.xlane.xlu0 %3732
    %v3734 = vsel %vm226, %v3587, 0.0
    %v3735 = vadd.f32 %v3586, %v3734
    %3736 = vadd.xlane.f32.xlu0 %v3735
    %v3737 = vpop.xlane.xlu0 %3736
    %v3738 = vsel %vm226, %v3589, 0.0
    %v3739 = vadd.f32 %v3588, %v3738
    %3740 = vadd.xlane.f32.xlu0 %v3739
    %v3741 = vpop.xlane.xlu0 %3740
    %v3742 = vsel %vm226, %v3591, 0.0
    %v3743 = vadd.f32 %v3590, %v3742
    %3744 = vadd.xlane.f32.xlu0 %v3743
    %v3745 = vpop.xlane.xlu0 %3744
    %v3746 = vsel %vm226, %v3593, 0.0
    %v3747 = vadd.f32 %v3592, %v3746
    %3748 = vadd.xlane.f32.xlu0 %v3747
    %v3749 = vpop.xlane.xlu0 %3748
    %v3750 = vsel %vm226, %v3595, 0.0
    %v3751 = vadd.f32 %v3594, %v3750
    %3752 = vadd.xlane.f32.xlu0 %v3751
    %v3753 = vpop.xlane.xlu0 %3752
    %v3754 = vsel %vm226, %v3597, 0.0
    %v3755 = vadd.f32 %v3596, %v3754
    %3756 = vadd.xlane.f32.xlu0 %v3755
    %v3757 = vpop.xlane.xlu0 %3756
    %v3758 = vsel %vm226, %v3599, 0.0
    %v3759 = vadd.f32 %v3598, %v3758
    %3760 = vadd.xlane.f32.xlu0 %v3759
    %v3761 = vpop.xlane.xlu0 %3760
    %v3762 = vsel %vm226, %v3601, 0.0
    %v3763 = vadd.f32 %v3600, %v3762
    %3764 = vadd.xlane.f32.xlu0 %v3763
    %v3765 = vpop.xlane.xlu0 %3764
    %v3766 = vsel %vm226, %v3603, 0.0
    %v3767 = vadd.f32 %v3602, %v3766
    %3768 = vadd.xlane.f32.xlu0 %v3767
    %v3769 = vpop.xlane.xlu0 %3768
    %v3770 = vsel %vm226, %v3605, 0.0
    %v3771 = vadd.f32 %v3604, %v3770
    %3772 = vadd.xlane.f32.xlu0 %v3771
    %v3773 = vpop.xlane.xlu0 %3772
    %v3774 = vsel %vm226, %v3607, 0.0
    %v3775 = vadd.f32 %v3606, %v3774
    %3776 = vadd.xlane.f32.xlu0 %v3775
    %v3777 = vpop.xlane.xlu0 %3776
    %v3778 = vsel %vm226, %v3609, 0.0
    %v3779 = vadd.f32 %v3608, %v3778
    %3780 = vadd.xlane.f32.xlu0 %v3779
    %v3781 = vpop.xlane.xlu0 %3780
    %v3782 = vsel %vm226, %v3611, 0.0
    %v3783 = vadd.f32 %v3610, %v3782
    %3784 = vadd.xlane.f32.xlu0 %v3783
    %v3785 = vpop.xlane.xlu0 %3784
    %v3786 = vsel %vm226, %v3613, 0.0
    %v3787 = vadd.f32 %v3612, %v3786
    %3788 = vadd.xlane.f32.xlu0 %v3787
    %v3789 = vpop.xlane.xlu0 %3788
    %v3790 = vsel %vm226, %v3615, 0.0
    %v3791 = vadd.f32 %v3614, %v3790
    %3792 = vadd.xlane.f32.xlu0 %v3791
    %v3793 = vpop.xlane.xlu0 %3792
    %v3794 = vsel %vm226, %v3617, 0.0
    %v3795 = vadd.f32 %v3616, %v3794
    %3796 = vadd.xlane.f32.xlu0 %v3795
    %v3797 = vpop.xlane.xlu0 %3796
    %v3798 = vsel %vm226, %v3619, 0.0
    %v3799 = vadd.f32 %v3618, %v3798
    %3800 = vadd.xlane.f32.xlu0 %v3799
    %v3801 = vpop.xlane.xlu0 %3800
    %v3802 = vsel %vm226, %v3621, 0.0
    %v3803 = vadd.f32 %v3620, %v3802
    %3804 = vadd.xlane.f32.xlu0 %v3803
    %v3805 = vpop.xlane.xlu0 %3804
    %v3806 = vsel %vm226, %v3623, 0.0
    %v3807 = vadd.f32 %v3622, %v3806
    %3808 = vadd.xlane.f32.xlu0 %v3807
    %v3809 = vpop.xlane.xlu0 %3808
    %v3810 = vsel %vm226, %v3625, 0.0
    %v3811 = vadd.f32 %v3624, %v3810
    %3812 = vadd.xlane.f32.xlu0 %v3811
    %v3813 = vpop.xlane.xlu0 %3812
    %v3814 = vsel %vm226, %v3627, 0.0
    %v3815 = vadd.f32 %v3626, %v3814
    %3816 = vadd.xlane.f32.xlu0 %v3815
    %v3817 = vpop.xlane.xlu0 %3816
    %v3818 = vsel %vm226, %v3629, 0.0
    %v3819 = vadd.f32 %v3628, %v3818
    %3820 = vadd.xlane.f32.xlu0 %v3819
    %v3821 = vpop.xlane.xlu0 %3820
    %v3822 = vsel %vm226, %v3631, 0.0
    %v3823 = vadd.f32 %v3630, %v3822
    %3824 = vadd.xlane.f32.xlu0 %v3823
    %v3825 = vpop.xlane.xlu0 %3824
    %v3826 = vsel %vm226, %v3633, 0.0
    %v3827 = vadd.f32 %v3632, %v3826
    %3828 = vadd.xlane.f32.xlu0 %v3827
    %v3829 = vpop.xlane.xlu0 %3828
    %v3830 = vsel %vm226, %v3635, 0.0
    %v3831 = vadd.f32 %v3634, %v3830
    %3832 = vadd.xlane.f32.xlu0 %v3831
    %v3833 = vpop.xlane.xlu0 %3832
    %v3834 = vsel %vm226, %v3637, 0.0
    %v3835 = vadd.f32 %v3636, %v3834
    %3836 = vadd.xlane.f32.xlu0 %v3835
    %v3837 = vpop.xlane.xlu0 %3836
    %v3838 = vsel %vm226, %v3639, 0.0
    %v3839 = vadd.f32 %v3638, %v3838
    %3840 = vadd.xlane.f32.xlu0 %v3839
    %v3841 = vpop.xlane.xlu0 %3840
    %v3842 = vsel %vm226, %v3641, 0.0
    %v3843 = vadd.f32 %v3640, %v3842
    %3844 = vadd.xlane.f32.xlu0 %v3843
    %v3845 = vpop.xlane.xlu0 %3844
    %v3846 = vsel %vm226, %v3643, 0.0
    %v3847 = vadd.f32 %v3642, %v3846
    %3848 = vadd.xlane.f32.xlu0 %v3847
    %v3849 = vpop.xlane.xlu0 %3848
    %v3850 = vsel %vm226, %v3645, 0.0
    %v3851 = vadd.f32 %v3644, %v3850
    %3852 = vadd.xlane.f32.xlu0 %v3851
    %v3853 = vpop.xlane.xlu0 %3852
    %v3854 = vsel %vm226, %v3647, 0.0
    %v3855 = vadd.f32 %v3646, %v3854
    %3856 = vadd.xlane.f32.xlu0 %v3855
    %v3857 = vpop.xlane.xlu0 %3856
    %v3858 = vsel %vm226, %v3649, 0.0
    %v3859 = vadd.f32 %v3648, %v3858
    %3860 = vadd.xlane.f32.xlu0 %v3859
    %v3861 = vpop.xlane.xlu0 %3860
    %v3862 = vsel %vm226, %v3651, 0.0
    %v3863 = vadd.f32 %v3650, %v3862
    %3864 = vadd.xlane.f32.xlu0 %v3863
    %v3865 = vpop.xlane.xlu0 %3864
    %v3866 = vsel %vm226, %v3653, 0.0
    %v3867 = vadd.f32 %v3652, %v3866
    %3868 = vadd.xlane.f32.xlu0 %v3867
    %v3869 = vpop.xlane.xlu0 %3868
    %v3870 = vsel %vm226, %v3655, 0.0
    %v3871 = vadd.f32 %v3654, %v3870
    %3872 = vadd.xlane.f32.xlu0 %v3871
    %v3873 = vpop.xlane.xlu0 %3872
    %v3874 = vsel %vm226, %v3657, 0.0
    %v3875 = vadd.f32 %v3656, %v3874
    %3876 = vadd.xlane.f32.xlu0 %v3875
    %v3877 = vpop.xlane.xlu0 %3876
    %v3878 = vsel %vm226, %v3659, 0.0
    %v3879 = vadd.f32 %v3658, %v3878
    %3880 = vadd.xlane.f32.xlu0 %v3879
    %v3881 = vpop.xlane.xlu0 %3880
    %v3882 = vsel %vm226, %v3661, 0.0
    %v3883 = vadd.f32 %v3660, %v3882
    %3884 = vadd.xlane.f32.xlu0 %v3883
    %v3885 = vpop.xlane.xlu0 %3884
    %v3942 = vlaneseq
    %v3943 = vshrl.u32 %v3942, 7
    %v3944 = vsub.s32 %v508, %v3943
    %v3945 = vrot.slane %v3665, %v3944
    %v3946 = vlaneseq
    %v3947 = vshrl.u32 %v3946, 7
    %v3948 = vsub.s32 %v513, %v3947
    %v3949 = vrot.slane %v3669, %v3948
    %v3950 = vsel %vm518, %v3949, %v3945
    %v3951 = vlaneseq
    %v3952 = vshrl.u32 %v3951, 7
    %v3953 = vsub.s32 %v520, %v3952
    %v3954 = vrot.slane %v3673, %v3953
    %v3955 = vsel %vm525, %v3954, %v3950
    %v3956 = vlaneseq
    %v3957 = vshrl.u32 %v3956, 7
    %v3958 = vsub.s32 %v527, %v3957
    %v3959 = vrot.slane %v3677, %v3958
    %v3960 = vsel %vm532, %v3959, %v3955
    %v3961 = vlaneseq
    %v3962 = vshrl.u32 %v3961, 7
    %v3963 = vsub.s32 %v534, %v3962
    %v3964 = vrot.slane %v3681, %v3963
    %v3965 = vsel %vm539, %v3964, %v3960
    %v3966 = vlaneseq
    %v3967 = vshrl.u32 %v3966, 7
    %v3968 = vsub.s32 %v541, %v3967
    %v3969 = vrot.slane %v3685, %v3968
    %v3970 = vsel %vm546, %v3969, %v3965
    %v3971 = vlaneseq
    %v3972 = vshrl.u32 %v3971, 7
    %v3973 = vsub.s32 %v548, %v3972
    %v3974 = vrot.slane %v3689, %v3973
    %v3975 = vsel %vm553, %v3974, %v3970
    %v3976 = vlaneseq
    %v3977 = vshrl.u32 %v3976, 7
    %v3978 = vsub.s32 %v555, %v3977
    %v3979 = vrot.slane %v3693, %v3978
    %v3980 = vsel %vm560, %v3979, %v3975
    %v3981 = vlaneseq
    %v3982 = vshrl.u32 %v3981, 7
    %v3983 = vsub.s32 %v562, %v3982
    %v3984 = vrot.slane %v3697, %v3983
    %v3985 = vsel %vm567, %v3984, %v3980
    %v3986 = vlaneseq
    %v3987 = vshrl.u32 %v3986, 7
    %v3988 = vsub.s32 %v569, %v3987
    %v3989 = vrot.slane %v3701, %v3988
    %v3990 = vsel %vm574, %v3989, %v3985
    %v3991 = vlaneseq
    %v3992 = vshrl.u32 %v3991, 7
    %v3993 = vsub.s32 %v576, %v3992
    %v3994 = vrot.slane %v3705, %v3993
    %v3995 = vsel %vm581, %v3994, %v3990
    %v3996 = vlaneseq
    %v3997 = vshrl.u32 %v3996, 7
    %v3998 = vsub.s32 %v583, %v3997
    %v3999 = vrot.slane %v3709, %v3998
    %v4000 = vsel %vm588, %v3999, %v3995
    %v4001 = vlaneseq
    %v4002 = vshrl.u32 %v4001, 7
    %v4003 = vsub.s32 %v590, %v4002
    %v4004 = vrot.slane %v3713, %v4003
    %v4005 = vsel %vm595, %v4004, %v4000
    %v4006 = vlaneseq
    %v4007 = vshrl.u32 %v4006, 7
    %v4008 = vsub.s32 %v597, %v4007
    %v4009 = vrot.slane %v3717, %v4008
    %v4010 = vsel %vm602, %v4009, %v4005
    %v4011 = vlaneseq
    %v4012 = vshrl.u32 %v4011, 7
    %v4013 = vsub.s32 %v604, %v4012
    %v4014 = vrot.slane %v3721, %v4013
    %v4015 = vsel %vm609, %v4014, %v4010
    %v4016 = vlaneseq
    %v4017 = vshrl.u32 %v4016, 7
    %v4018 = vsub.s32 %v611, %v4017
    %v4019 = vrot.slane %v3725, %v4018
    %v4020 = vsel %vm616, %v4019, %v4015
    %v4021 = vlaneseq
    %v4022 = vshrl.u32 %v4021, 7
    %v4023 = vsub.s32 %v508, %v4022
    %v4024 = vrot.slane %v3729, %v4023
    %v4025 = vlaneseq
    %v4026 = vshrl.u32 %v4025, 7
    %v4027 = vsub.s32 %v513, %v4026
    %v4028 = vrot.slane %v3733, %v4027
    %v4029 = vsel %vm518, %v4028, %v4024
    %v4030 = vlaneseq
    %v4031 = vshrl.u32 %v4030, 7
    %v4032 = vsub.s32 %v520, %v4031
    %v4033 = vrot.slane %v3737, %v4032
    %v4034 = vsel %vm525, %v4033, %v4029
    %v4035 = vlaneseq
    %v4036 = vshrl.u32 %v4035, 7
    %v4037 = vsub.s32 %v527, %v4036
    %v4038 = vrot.slane %v3741, %v4037
    %v4039 = vsel %vm532, %v4038, %v4034
    %v4040 = vlaneseq
    %v4041 = vshrl.u32 %v4040, 7
    %v4042 = vsub.s32 %v534, %v4041
    %v4043 = vrot.slane %v3745, %v4042
    %v4044 = vsel %vm539, %v4043, %v4039
    %v4045 = vlaneseq
    %v4046 = vshrl.u32 %v4045, 7
    %v4047 = vsub.s32 %v541, %v4046
    %v4048 = vrot.slane %v3749, %v4047
    %v4049 = vsel %vm546, %v4048, %v4044
    %v4050 = vlaneseq
    %v4051 = vshrl.u32 %v4050, 7
    %v4052 = vsub.s32 %v548, %v4051
    %v4053 = vrot.slane %v3753, %v4052
    %v4054 = vsel %vm553, %v4053, %v4049
    %v4055 = vlaneseq
    %v4056 = vshrl.u32 %v4055, 7
    %v4057 = vsub.s32 %v555, %v4056
    %v4058 = vrot.slane %v3757, %v4057
    %v4059 = vsel %vm560, %v4058, %v4054
    %v4060 = vlaneseq
    %v4061 = vshrl.u32 %v4060, 7
    %v4062 = vsub.s32 %v562, %v4061
    %v4063 = vrot.slane %v3761, %v4062
    %v4064 = vsel %vm567, %v4063, %v4059
    %v4065 = vlaneseq
    %v4066 = vshrl.u32 %v4065, 7
    %v4067 = vsub.s32 %v569, %v4066
    %v4068 = vrot.slane %v3765, %v4067
    %v4069 = vsel %vm574, %v4068, %v4064
    %v4070 = vlaneseq
    %v4071 = vshrl.u32 %v4070, 7
    %v4072 = vsub.s32 %v576, %v4071
    %v4073 = vrot.slane %v3769, %v4072
    %v4074 = vsel %vm581, %v4073, %v4069
    %v4075 = vlaneseq
    %v4076 = vshrl.u32 %v4075, 7
    %v4077 = vsub.s32 %v583, %v4076
    %v4078 = vrot.slane %v3773, %v4077
    %v4079 = vsel %vm588, %v4078, %v4074
    %v4080 = vlaneseq
    %v4081 = vshrl.u32 %v4080, 7
    %v4082 = vsub.s32 %v508, %v4081
    %v4083 = vrot.slane %v3777, %v4082
    %v4084 = vlaneseq
    %v4085 = vshrl.u32 %v4084, 7
    %v4086 = vsub.s32 %v513, %v4085
    %v4087 = vrot.slane %v3781, %v4086
    %v4088 = vsel %vm518, %v4087, %v4083
    %v4089 = vlaneseq
    %v4090 = vshrl.u32 %v4089, 7
    %v4091 = vsub.s32 %v520, %v4090
    %v4092 = vrot.slane %v3785, %v4091
    %v4093 = vsel %vm525, %v4092, %v4088
    %v4094 = vlaneseq
    %v4095 = vshrl.u32 %v4094, 7
    %v4096 = vsub.s32 %v527, %v4095
    %v4097 = vrot.slane %v3789, %v4096
    %v4098 = vsel %vm532, %v4097, %v4093
    %v4099 = vlaneseq
    %v4100 = vshrl.u32 %v4099, 7
    %v4101 = vsub.s32 %v534, %v4100
    %v4102 = vrot.slane %v3793, %v4101
    %v4103 = vsel %vm539, %v4102, %v4098
    %v4104 = vlaneseq
    %v4105 = vshrl.u32 %v4104, 7
    %v4106 = vsub.s32 %v541, %v4105
    %v4107 = vrot.slane %v3797, %v4106
    %v4108 = vsel %vm546, %v4107, %v4103
    %v4109 = vlaneseq
    %v4110 = vshrl.u32 %v4109, 7
    %v4111 = vsub.s32 %v548, %v4110
    %v4112 = vrot.slane %v3801, %v4111
    %v4113 = vsel %vm553, %v4112, %v4108
    %v4114 = vlaneseq
    %v4115 = vshrl.u32 %v4114, 7
    %v4116 = vsub.s32 %v555, %v4115
    %v4117 = vrot.slane %v3805, %v4116
    %v4118 = vsel %vm560, %v4117, %v4113
    %v4119 = vlaneseq
    %v4120 = vshrl.u32 %v4119, 7
    %v4121 = vsub.s32 %v562, %v4120
    %v4122 = vrot.slane %v3809, %v4121
    %v4123 = vsel %vm567, %v4122, %v4118
    %v4124 = vlaneseq
    %v4125 = vshrl.u32 %v4124, 7
    %v4126 = vsub.s32 %v569, %v4125
    %v4127 = vrot.slane %v3813, %v4126
    %v4128 = vsel %vm574, %v4127, %v4123
    %v4129 = vlaneseq
    %v4130 = vshrl.u32 %v4129, 7
    %v4131 = vsub.s32 %v576, %v4130
    %v4132 = vrot.slane %v3817, %v4131
    %v4133 = vsel %vm581, %v4132, %v4128
    %v4134 = vlaneseq
    %v4135 = vshrl.u32 %v4134, 7
    %v4136 = vsub.s32 %v583, %v4135
    %v4137 = vrot.slane %v3821, %v4136
    %v4138 = vsel %vm588, %v4137, %v4133
    %v4139 = vlaneseq
    %v4140 = vshrl.u32 %v4139, 7
    %v4141 = vsub.s32 %v590, %v4140
    %v4142 = vrot.slane %v3825, %v4141
    %v4143 = vsel %vm595, %v4142, %v4138
    %v4144 = vlaneseq
    %v4145 = vshrl.u32 %v4144, 7
    %v4146 = vsub.s32 %v597, %v4145
    %v4147 = vrot.slane %v3829, %v4146
    %v4148 = vsel %vm602, %v4147, %v4143
    %v4149 = vlaneseq
    %v4150 = vshrl.u32 %v4149, 7
    %v4151 = vsub.s32 %v604, %v4150
    %v4152 = vrot.slane %v3833, %v4151
    %v4153 = vsel %vm609, %v4152, %v4148
    %v4154 = vlaneseq
    %v4155 = vshrl.u32 %v4154, 7
    %v4156 = vsub.s32 %v611, %v4155
    %v4157 = vrot.slane %v3837, %v4156
    %v4158 = vsel %vm616, %v4157, %v4153
    %v4159 = vlaneseq
    %v4160 = vshrl.u32 %v4159, 7
    %v4161 = vsub.s32 %v508, %v4160
    %v4162 = vrot.slane %v3841, %v4161
    %v4163 = vlaneseq
    %v4164 = vshrl.u32 %v4163, 7
    %v4165 = vsub.s32 %v513, %v4164
    %v4166 = vrot.slane %v3845, %v4165
    %v4167 = vsel %vm518, %v4166, %v4162
    %v4168 = vlaneseq
    %v4169 = vshrl.u32 %v4168, 7
    %v4170 = vsub.s32 %v520, %v4169
    %v4171 = vrot.slane %v3849, %v4170
    %v4172 = vsel %vm525, %v4171, %v4167
    %v4173 = vlaneseq
    %v4174 = vshrl.u32 %v4173, 7
    %v4175 = vsub.s32 %v527, %v4174
    %v4176 = vrot.slane %v3853, %v4175
    %v4177 = vsel %vm532, %v4176, %v4172
    %v4178 = vlaneseq
    %v4179 = vshrl.u32 %v4178, 7
    %v4180 = vsub.s32 %v534, %v4179
    %v4181 = vrot.slane %v3857, %v4180
    %v4182 = vsel %vm539, %v4181, %v4177
    %v4183 = vlaneseq
    %v4184 = vshrl.u32 %v4183, 7
    %v4185 = vsub.s32 %v541, %v4184
    %v4186 = vrot.slane %v3861, %v4185
    %v4187 = vsel %vm546, %v4186, %v4182
    %v4188 = vlaneseq
    %v4189 = vshrl.u32 %v4188, 7
    %v4190 = vsub.s32 %v548, %v4189
    %v4191 = vrot.slane %v3865, %v4190
    %v4192 = vsel %vm553, %v4191, %v4187
    %v4193 = vlaneseq
    %v4194 = vshrl.u32 %v4193, 7
    %v4195 = vsub.s32 %v555, %v4194
    %v4196 = vrot.slane %v3869, %v4195
    %v4197 = vsel %vm560, %v4196, %v4192
    %v4198 = vlaneseq
    %v4199 = vshrl.u32 %v4198, 7
    %v4200 = vsub.s32 %v562, %v4199
    %v4201 = vrot.slane %v3873, %v4200
    %v4202 = vsel %vm567, %v4201, %v4197
    %v4203 = vlaneseq
    %v4204 = vshrl.u32 %v4203, 7
    %v4205 = vsub.s32 %v569, %v4204
    %v4206 = vrot.slane %v3877, %v4205
    %v4207 = vsel %vm574, %v4206, %v4202
    %v4208 = vlaneseq
    %v4209 = vshrl.u32 %v4208, 7
    %v4210 = vsub.s32 %v576, %v4209
    %v4211 = vrot.slane %v3881, %v4210
    %v4212 = vsel %vm581, %v4211, %v4207
    %v4213 = vlaneseq
    %v4214 = vshrl.u32 %v4213, 7
    %v4215 = vsub.s32 %v583, %v4214
    %v4216 = vrot.slane %v3885, %v4215
    %v4217 = vsel %vm588, %v4216, %v4212
    %v4218 = vsel %vm815, %v4158, %v4020
    %v4219 = vsel %vm815, %v4217, %v4079
    %v4222 = vsel %vm820, %v4218, 0.0
    %v4223 = vsel %vm822, %v4219, 0.0
    %v4224 = vadd.f32 %v4222, %v4223
    %4225 = vadd.xlane.f32.xlu0 %v4224
    %v4226 = vpop.xlane.xlu0 %4225
    %v4227 = vmul.f32 %v4226, 1.9929847e-05
    %s4228 = scalar_lea.vmem [#allocation4], 896
    %v4229 = vld [vmem:[%s4228] sm:$0xff]
    %v4230 = vld [vmem:[%s4228 + $0x8] sm:$0xff]
    %v4231 = vld [vmem:[%s4228 + $0x10] sm:$0xff]
    %v4232 = vld [vmem:[%s4228 + $0x18] sm:$0xff]
    %v4233 = vld [vmem:[%s4228 + $0x20] sm:$0xff]
    %v4234 = vld [vmem:[%s4228 + $0x28] sm:$0xff]
    %v4235 = vld [vmem:[%s4228 + $0x30] sm:$0xff]
    %v4236 = vld [vmem:[%s4228 + $0x38] sm:$0xff]
    %v4237 = vld [vmem:[%s4228 + $0x40] sm:$0xff]
    %v4238 = vld [vmem:[%s4228 + $0x48] sm:$0xff]
    %v4239 = vld [vmem:[%s4228 + $0x50] sm:$0xff]
    %v4240 = vld [vmem:[%s4228 + $0x58] sm:$0xff]
    %v4241 = vld [vmem:[%s4228 + $0x60] sm:$0xff]
    %v4242 = vld [vmem:[%s4228 + $0x68] sm:$0xff]
    %v4243 = vld [vmem:[%s4228 + $0x70] sm:$0xff]
    %v4244 = vld [vmem:[%s4228 + $0x78] sm:$0xff]
    %v4245 = vld [vmem:[%s4228 + $0x80] sm:$0xff]
    %v4246 = vld [vmem:[%s4228 + $0x88] sm:$0xff]
    %v4247 = vld [vmem:[%s4228 + $0x90] sm:$0xff]
    %v4248 = vld [vmem:[%s4228 + $0x98] sm:$0xff]
    %v4249 = vld [vmem:[%s4228 + $0xa0] sm:$0xff]
    %v4250 = vld [vmem:[%s4228 + $0xa8] sm:$0xff]
    %v4251 = vld [vmem:[%s4228 + $0xb0] sm:$0xff]
    %v4252 = vld [vmem:[%s4228 + $0xb8] sm:$0xff]
    %v4253 = vld [vmem:[%s4228 + $0xc0] sm:$0xff]
    %v4254 = vld [vmem:[%s4228 + $0xc8] sm:$0xff]
    %v4255 = vld [vmem:[%s4228 + $0xd0] sm:$0xff]
    %v4256 = vld [vmem:[%s4228 + $0xd8] sm:$0xff]
    %v4257 = vld [vmem:[%s4228 + $0xe0] sm:$0xff]
    %v4258 = vld [vmem:[%s4228 + $0xe8] sm:$0xff]
    %v4259 = vld [vmem:[%s4228 + $0xf0] sm:$0xff]
    %v4260 = vld [vmem:[%s4228 + $0xf8] sm:$0xff]
    %v4261 = vld [vmem:[%s4228 + $0x100] sm:$0xff]
    %v4262 = vld [vmem:[%s4228 + $0x108] sm:$0xff]
    %v4263 = vld [vmem:[%s4228 + $0x110] sm:$0xff]
    %v4264 = vld [vmem:[%s4228 + $0x118] sm:$0xff]
    %v4265 = vld [vmem:[%s4228 + $0x120] sm:$0xff]
    %v4266 = vld [vmem:[%s4228 + $0x128] sm:$0xff]
    %v4267 = vld [vmem:[%s4228 + $0x130] sm:$0xff]
    %v4268 = vld [vmem:[%s4228 + $0x138] sm:$0xff]
    %v4269 = vld [vmem:[%s4228 + $0x140] sm:$0xff]
    %v4270 = vld [vmem:[%s4228 + $0x148] sm:$0xff]
    %v4271 = vld [vmem:[%s4228 + $0x150] sm:$0xff]
    %v4272 = vld [vmem:[%s4228 + $0x158] sm:$0xff]
    %v4273 = vld [vmem:[%s4228 + $0x160] sm:$0xff]
    %v4274 = vld [vmem:[%s4228 + $0x168] sm:$0xff]
    %v4275 = vld [vmem:[%s4228 + $0x170] sm:$0xff]
    %v4276 = vld [vmem:[%s4228 + $0x178] sm:$0xff]
    %v4277 = vld [vmem:[%s4228 + $0x180] sm:$0xff]
    %v4278 = vld [vmem:[%s4228 + $0x188] sm:$0xff]
    %v4279 = vld [vmem:[%s4228 + $0x190] sm:$0xff]
    %v4280 = vld [vmem:[%s4228 + $0x198] sm:$0xff]
    %v4281 = vld [vmem:[%s4228 + $0x1a0] sm:$0xff]
    %v4282 = vld [vmem:[%s4228 + $0x1a8] sm:$0xff]
    %v4283 = vld [vmem:[%s4228 + $0x1b0] sm:$0xff]
    %v4284 = vld [vmem:[%s4228 + $0x1b8] sm:$0xff]
    %v4285 = vld [vmem:[%s4228 + $0x700] sm:$0xff]
    %v4286 = vld [vmem:[%s4228 + $0x708] sm:$0xff]
    %v4287 = vld [vmem:[%s4228 + $0x710] sm:$0xff]
    %v4288 = vld [vmem:[%s4228 + $0x718] sm:$0xff]
    %v4289 = vld [vmem:[%s4228 + $0x720] sm:$0xff]
    %v4290 = vld [vmem:[%s4228 + $0x728] sm:$0xff]
    %v4291 = vld [vmem:[%s4228 + $0x730] sm:$0xff]
    %v4292 = vld [vmem:[%s4228 + $0x738] sm:$0xff]
    %v4293 = vld [vmem:[%s4228 + $0x740] sm:$0xff]
    %v4294 = vld [vmem:[%s4228 + $0x748] sm:$0xff]
    %v4295 = vld [vmem:[%s4228 + $0x750] sm:$0xff]
    %v4296 = vld [vmem:[%s4228 + $0x758] sm:$0xff]
    %v4297 = vld [vmem:[%s4228 + $0x760] sm:$0xff]
    %v4298 = vld [vmem:[%s4228 + $0x768] sm:$0xff]
    %v4299 = vld [vmem:[%s4228 + $0x770] sm:$0xff]
    %v4300 = vld [vmem:[%s4228 + $0x778] sm:$0xff]
    %v4301 = vld [vmem:[%s4228 + $0x780] sm:$0xff]
    %v4302 = vld [vmem:[%s4228 + $0x788] sm:$0xff]
    %v4303 = vld [vmem:[%s4228 + $0x790] sm:$0xff]
    %v4304 = vld [vmem:[%s4228 + $0x798] sm:$0xff]
    %v4305 = vld [vmem:[%s4228 + $0x7a0] sm:$0xff]
    %v4306 = vld [vmem:[%s4228 + $0x7a8] sm:$0xff]
    %v4307 = vld [vmem:[%s4228 + $0x7b0] sm:$0xff]
    %v4308 = vld [vmem:[%s4228 + $0x7b8] sm:$0xff]
    %v4309 = vld [vmem:[%s4228 + $0x7c0] sm:$0xff]
    %v4310 = vld [vmem:[%s4228 + $0x7c8] sm:$0xff]
    %v4311 = vld [vmem:[%s4228 + $0x7d0] sm:$0xff]
    %v4312 = vld [vmem:[%s4228 + $0x7d8] sm:$0xff]
    %v4313 = vld [vmem:[%s4228 + $0x7e0] sm:$0xff]
    %v4314 = vld [vmem:[%s4228 + $0x7e8] sm:$0xff]
    %v4315 = vld [vmem:[%s4228 + $0x7f0] sm:$0xff]
    %v4316 = vld [vmem:[%s4228 + $0x7f8] sm:$0xff]
    %v4317 = vld [vmem:[%s4228 + $0x800] sm:$0xff]
    %v4318 = vld [vmem:[%s4228 + $0x808] sm:$0xff]
    %v4319 = vld [vmem:[%s4228 + $0x810] sm:$0xff]
    %v4320 = vld [vmem:[%s4228 + $0x818] sm:$0xff]
    %v4321 = vld [vmem:[%s4228 + $0x820] sm:$0xff]
    %v4322 = vld [vmem:[%s4228 + $0x828] sm:$0xff]
    %v4323 = vld [vmem:[%s4228 + $0x830] sm:$0xff]
    %v4324 = vld [vmem:[%s4228 + $0x838] sm:$0xff]
    %v4325 = vld [vmem:[%s4228 + $0x840] sm:$0xff]
    %v4326 = vld [vmem:[%s4228 + $0x848] sm:$0xff]
    %v4327 = vld [vmem:[%s4228 + $0x850] sm:$0xff]
    %v4328 = vld [vmem:[%s4228 + $0x858] sm:$0xff]
    %v4329 = vld [vmem:[%s4228 + $0x860] sm:$0xff]
    %v4330 = vld [vmem:[%s4228 + $0x868] sm:$0xff]
    %v4331 = vld [vmem:[%s4228 + $0x870] sm:$0xff]
    %v4332 = vld [vmem:[%s4228 + $0x878] sm:$0xff]
    %v4333 = vld [vmem:[%s4228 + $0x880] sm:$0xff]
    %v4334 = vld [vmem:[%s4228 + $0x888] sm:$0xff]
    %v4335 = vld [vmem:[%s4228 + $0x890] sm:$0xff]
    %v4336 = vld [vmem:[%s4228 + $0x898] sm:$0xff]
    %v4337 = vld [vmem:[%s4228 + $0x8a0] sm:$0xff]
    %v4338 = vld [vmem:[%s4228 + $0x8a8] sm:$0xff]
    %v4339 = vld [vmem:[%s4228 + $0x8b0] sm:$0xff]
    %v4340 = vld [vmem:[%s4228 + $0x8b8] sm:$0xff]
    %v4341 = vsel %vm226, %v4230, 0.0
    %v4342 = vadd.f32 %v4229, %v4341
    %4343 = vadd.xlane.f32.xlu0 %v4342
    %v4344 = vpop.xlane.xlu0 %4343
    %v4345 = vsel %vm226, %v4232, 0.0
    %v4346 = vadd.f32 %v4231, %v4345
    %4347 = vadd.xlane.f32.xlu0 %v4346
    %v4348 = vpop.xlane.xlu0 %4347
    %v4349 = vsel %vm226, %v4234, 0.0
    %v4350 = vadd.f32 %v4233, %v4349
    %4351 = vadd.xlane.f32.xlu0 %v4350
    %v4352 = vpop.xlane.xlu0 %4351
    %v4353 = vsel %vm226, %v4236, 0.0
    %v4354 = vadd.f32 %v4235, %v4353
    %4355 = vadd.xlane.f32.xlu0 %v4354
    %v4356 = vpop.xlane.xlu0 %4355
    %v4357 = vsel %vm226, %v4238, 0.0
    %v4358 = vadd.f32 %v4237, %v4357
    %4359 = vadd.xlane.f32.xlu0 %v4358
    %v4360 = vpop.xlane.xlu0 %4359
    %v4361 = vsel %vm226, %v4240, 0.0
    %v4362 = vadd.f32 %v4239, %v4361
    %4363 = vadd.xlane.f32.xlu0 %v4362
    %v4364 = vpop.xlane.xlu0 %4363
    %v4365 = vsel %vm226, %v4242, 0.0
    %v4366 = vadd.f32 %v4241, %v4365
    %4367 = vadd.xlane.f32.xlu0 %v4366
    %v4368 = vpop.xlane.xlu0 %4367
    %v4369 = vsel %vm226, %v4244, 0.0
    %v4370 = vadd.f32 %v4243, %v4369
    %4371 = vadd.xlane.f32.xlu0 %v4370
    %v4372 = vpop.xlane.xlu0 %4371
    %v4373 = vsel %vm226, %v4246, 0.0
    %v4374 = vadd.f32 %v4245, %v4373
    %4375 = vadd.xlane.f32.xlu0 %v4374
    %v4376 = vpop.xlane.xlu0 %4375
    %v4377 = vsel %vm226, %v4248, 0.0
    %v4378 = vadd.f32 %v4247, %v4377
    %4379 = vadd.xlane.f32.xlu0 %v4378
    %v4380 = vpop.xlane.xlu0 %4379
    %v4381 = vsel %vm226, %v4250, 0.0
    %v4382 = vadd.f32 %v4249, %v4381
    %4383 = vadd.xlane.f32.xlu0 %v4382
    %v4384 = vpop.xlane.xlu0 %4383
    %v4385 = vsel %vm226, %v4252, 0.0
    %v4386 = vadd.f32 %v4251, %v4385
    %4387 = vadd.xlane.f32.xlu0 %v4386
    %v4388 = vpop.xlane.xlu0 %4387
    %v4389 = vsel %vm226, %v4254, 0.0
    %v4390 = vadd.f32 %v4253, %v4389
    %4391 = vadd.xlane.f32.xlu0 %v4390
    %v4392 = vpop.xlane.xlu0 %4391
    %v4393 = vsel %vm226, %v4256, 0.0
    %v4394 = vadd.f32 %v4255, %v4393
    %4395 = vadd.xlane.f32.xlu0 %v4394
    %v4396 = vpop.xlane.xlu0 %4395
    %v4397 = vsel %vm226, %v4258, 0.0
    %v4398 = vadd.f32 %v4257, %v4397
    %4399 = vadd.xlane.f32.xlu0 %v4398
    %v4400 = vpop.xlane.xlu0 %4399
    %v4401 = vsel %vm226, %v4260, 0.0
    %v4402 = vadd.f32 %v4259, %v4401
    %4403 = vadd.xlane.f32.xlu0 %v4402
    %v4404 = vpop.xlane.xlu0 %4403
    %v4405 = vsel %vm226, %v4262, 0.0
    %v4406 = vadd.f32 %v4261, %v4405
    %4407 = vadd.xlane.f32.xlu0 %v4406
    %v4408 = vpop.xlane.xlu0 %4407
    %v4409 = vsel %vm226, %v4264, 0.0
    %v4410 = vadd.f32 %v4263, %v4409
    %4411 = vadd.xlane.f32.xlu0 %v4410
    %v4412 = vpop.xlane.xlu0 %4411
    %v4413 = vsel %vm226, %v4266, 0.0
    %v4414 = vadd.f32 %v4265, %v4413
    %4415 = vadd.xlane.f32.xlu0 %v4414
    %v4416 = vpop.xlane.xlu0 %4415
    %v4417 = vsel %vm226, %v4268, 0.0
    %v4418 = vadd.f32 %v4267, %v4417
    %4419 = vadd.xlane.f32.xlu0 %v4418
    %v4420 = vpop.xlane.xlu0 %4419
    %v4421 = vsel %vm226, %v4270, 0.0
    %v4422 = vadd.f32 %v4269, %v4421
    %4423 = vadd.xlane.f32.xlu0 %v4422
    %v4424 = vpop.xlane.xlu0 %4423
    %v4425 = vsel %vm226, %v4272, 0.0
    %v4426 = vadd.f32 %v4271, %v4425
    %4427 = vadd.xlane.f32.xlu0 %v4426
    %v4428 = vpop.xlane.xlu0 %4427
    %v4429 = vsel %vm226, %v4274, 0.0
    %v4430 = vadd.f32 %v4273, %v4429
    %4431 = vadd.xlane.f32.xlu0 %v4430
    %v4432 = vpop.xlane.xlu0 %4431
    %v4433 = vsel %vm226, %v4276, 0.0
    %v4434 = vadd.f32 %v4275, %v4433
    %4435 = vadd.xlane.f32.xlu0 %v4434
    %v4436 = vpop.xlane.xlu0 %4435
    %v4437 = vsel %vm226, %v4278, 0.0
    %v4438 = vadd.f32 %v4277, %v4437
    %4439 = vadd.xlane.f32.xlu0 %v4438
    %v4440 = vpop.xlane.xlu0 %4439
    %v4441 = vsel %vm226, %v4280, 0.0
    %v4442 = vadd.f32 %v4279, %v4441
    %4443 = vadd.xlane.f32.xlu0 %v4442
    %v4444 = vpop.xlane.xlu0 %4443
    %v4445 = vsel %vm226, %v4282, 0.0
    %v4446 = vadd.f32 %v4281, %v4445
    %4447 = vadd.xlane.f32.xlu0 %v4446
    %v4448 = vpop.xlane.xlu0 %4447
    %v4449 = vsel %vm226, %v4284, 0.0
    %v4450 = vadd.f32 %v4283, %v4449
    %4451 = vadd.xlane.f32.xlu0 %v4450
    %v4452 = vpop.xlane.xlu0 %4451
    %v4453 = vsel %vm226, %v4286, 0.0
    %v4454 = vadd.f32 %v4285, %v4453
    %4455 = vadd.xlane.f32.xlu0 %v4454
    %v4456 = vpop.xlane.xlu0 %4455
    %v4457 = vsel %vm226, %v4288, 0.0
    %v4458 = vadd.f32 %v4287, %v4457
    %4459 = vadd.xlane.f32.xlu0 %v4458
    %v4460 = vpop.xlane.xlu0 %4459
    %v4461 = vsel %vm226, %v4290, 0.0
    %v4462 = vadd.f32 %v4289, %v4461
    %4463 = vadd.xlane.f32.xlu0 %v4462
    %v4464 = vpop.xlane.xlu0 %4463
    %v4465 = vsel %vm226, %v4292, 0.0
    %v4466 = vadd.f32 %v4291, %v4465
    %4467 = vadd.xlane.f32.xlu0 %v4466
    %v4468 = vpop.xlane.xlu0 %4467
    %v4469 = vsel %vm226, %v4294, 0.0
    %v4470 = vadd.f32 %v4293, %v4469
    %4471 = vadd.xlane.f32.xlu0 %v4470
    %v4472 = vpop.xlane.xlu0 %4471
    %v4473 = vsel %vm226, %v4296, 0.0
    %v4474 = vadd.f32 %v4295, %v4473
    %4475 = vadd.xlane.f32.xlu0 %v4474
    %v4476 = vpop.xlane.xlu0 %4475
    %v4477 = vsel %vm226, %v4298, 0.0
    %v4478 = vadd.f32 %v4297, %v4477
    %4479 = vadd.xlane.f32.xlu0 %v4478
    %v4480 = vpop.xlane.xlu0 %4479
    %v4481 = vsel %vm226, %v4300, 0.0
    %v4482 = vadd.f32 %v4299, %v4481
    %4483 = vadd.xlane.f32.xlu0 %v4482
    %v4484 = vpop.xlane.xlu0 %4483
    %v4485 = vsel %vm226, %v4302, 0.0
    %v4486 = vadd.f32 %v4301, %v4485
    %4487 = vadd.xlane.f32.xlu0 %v4486
    %v4488 = vpop.xlane.xlu0 %4487
    %v4489 = vsel %vm226, %v4304, 0.0
    %v4490 = vadd.f32 %v4303, %v4489
    %4491 = vadd.xlane.f32.xlu0 %v4490
    %v4492 = vpop.xlane.xlu0 %4491
    %v4493 = vsel %vm226, %v4306, 0.0
    %v4494 = vadd.f32 %v4305, %v4493
    %4495 = vadd.xlane.f32.xlu0 %v4494
    %v4496 = vpop.xlane.xlu0 %4495
    %v4497 = vsel %vm226, %v4308, 0.0
    %v4498 = vadd.f32 %v4307, %v4497
    %4499 = vadd.xlane.f32.xlu0 %v4498
    %v4500 = vpop.xlane.xlu0 %4499
    %v4501 = vsel %vm226, %v4310, 0.0
    %v4502 = vadd.f32 %v4309, %v4501
    %4503 = vadd.xlane.f32.xlu0 %v4502
    %v4504 = vpop.xlane.xlu0 %4503
    %v4505 = vsel %vm226, %v4312, 0.0
    %v4506 = vadd.f32 %v4311, %v4505
    %4507 = vadd.xlane.f32.xlu0 %v4506
    %v4508 = vpop.xlane.xlu0 %4507
    %v4509 = vsel %vm226, %v4314, 0.0
    %v4510 = vadd.f32 %v4313, %v4509
    %4511 = vadd.xlane.f32.xlu0 %v4510
    %v4512 = vpop.xlane.xlu0 %4511
    %v4513 = vsel %vm226, %v4316, 0.0
    %v4514 = vadd.f32 %v4315, %v4513
    %4515 = vadd.xlane.f32.xlu0 %v4514
    %v4516 = vpop.xlane.xlu0 %4515
    %v4517 = vsel %vm226, %v4318, 0.0
    %v4518 = vadd.f32 %v4317, %v4517
    %4519 = vadd.xlane.f32.xlu0 %v4518
    %v4520 = vpop.xlane.xlu0 %4519
    %v4521 = vsel %vm226, %v4320, 0.0
    %v4522 = vadd.f32 %v4319, %v4521
    %4523 = vadd.xlane.f32.xlu0 %v4522
    %v4524 = vpop.xlane.xlu0 %4523
    %v4525 = vsel %vm226, %v4322, 0.0
    %v4526 = vadd.f32 %v4321, %v4525
    %4527 = vadd.xlane.f32.xlu0 %v4526
    %v4528 = vpop.xlane.xlu0 %4527
    %v4529 = vsel %vm226, %v4324, 0.0
    %v4530 = vadd.f32 %v4323, %v4529
    %4531 = vadd.xlane.f32.xlu0 %v4530
    %v4532 = vpop.xlane.xlu0 %4531
    %v4533 = vsel %vm226, %v4326, 0.0
    %v4534 = vadd.f32 %v4325, %v4533
    %4535 = vadd.xlane.f32.xlu0 %v4534
    %v4536 = vpop.xlane.xlu0 %4535
    %v4537 = vsel %vm226, %v4328, 0.0
    %v4538 = vadd.f32 %v4327, %v4537
    %4539 = vadd.xlane.f32.xlu0 %v4538
    %v4540 = vpop.xlane.xlu0 %4539
    %v4541 = vsel %vm226, %v4330, 0.0
    %v4542 = vadd.f32 %v4329, %v4541
    %4543 = vadd.xlane.f32.xlu0 %v4542
    %v4544 = vpop.xlane.xlu0 %4543
    %v4545 = vsel %vm226, %v4332, 0.0
    %v4546 = vadd.f32 %v4331, %v4545
    %4547 = vadd.xlane.f32.xlu0 %v4546
    %v4548 = vpop.xlane.xlu0 %4547
    %v4549 = vsel %vm226, %v4334, 0.0
    %v4550 = vadd.f32 %v4333, %v4549
    %4551 = vadd.xlane.f32.xlu0 %v4550
    %v4552 = vpop.xlane.xlu0 %4551
    %v4553 = vsel %vm226, %v4336, 0.0
    %v4554 = vadd.f32 %v4335, %v4553
    %4555 = vadd.xlane.f32.xlu0 %v4554
    %v4556 = vpop.xlane.xlu0 %4555
    %v4557 = vsel %vm226, %v4338, 0.0
    %v4558 = vadd.f32 %v4337, %v4557
    %4559 = vadd.xlane.f32.xlu0 %v4558
    %v4560 = vpop.xlane.xlu0 %4559
    %v4561 = vsel %vm226, %v4340, 0.0
    %v4562 = vadd.f32 %v4339, %v4561
    %4563 = vadd.xlane.f32.xlu0 %v4562
    %v4564 = vpop.xlane.xlu0 %4563
    %v4621 = vlaneseq
    %v4622 = vshrl.u32 %v4621, 7
    %v4623 = vsub.s32 %v508, %v4622
    %v4624 = vrot.slane %v4344, %v4623
    %v4625 = vlaneseq
    %v4626 = vshrl.u32 %v4625, 7
    %v4627 = vsub.s32 %v513, %v4626
    %v4628 = vrot.slane %v4348, %v4627
    %v4629 = vsel %vm518, %v4628, %v4624
    %v4630 = vlaneseq
    %v4631 = vshrl.u32 %v4630, 7
    %v4632 = vsub.s32 %v520, %v4631
    %v4633 = vrot.slane %v4352, %v4632
    %v4634 = vsel %vm525, %v4633, %v4629
    %v4635 = vlaneseq
    %v4636 = vshrl.u32 %v4635, 7
    %v4637 = vsub.s32 %v527, %v4636
    %v4638 = vrot.slane %v4356, %v4637
    %v4639 = vsel %vm532, %v4638, %v4634
    %v4640 = vlaneseq
    %v4641 = vshrl.u32 %v4640, 7
    %v4642 = vsub.s32 %v534, %v4641
    %v4643 = vrot.slane %v4360, %v4642
    %v4644 = vsel %vm539, %v4643, %v4639
    %v4645 = vlaneseq
    %v4646 = vshrl.u32 %v4645, 7
    %v4647 = vsub.s32 %v541, %v4646
    %v4648 = vrot.slane %v4364, %v4647
    %v4649 = vsel %vm546, %v4648, %v4644
    %v4650 = vlaneseq
    %v4651 = vshrl.u32 %v4650, 7
    %v4652 = vsub.s32 %v548, %v4651
    %v4653 = vrot.slane %v4368, %v4652
    %v4654 = vsel %vm553, %v4653, %v4649
    %v4655 = vlaneseq
    %v4656 = vshrl.u32 %v4655, 7
    %v4657 = vsub.s32 %v555, %v4656
    %v4658 = vrot.slane %v4372, %v4657
    %v4659 = vsel %vm560, %v4658, %v4654
    %v4660 = vlaneseq
    %v4661 = vshrl.u32 %v4660, 7
    %v4662 = vsub.s32 %v562, %v4661
    %v4663 = vrot.slane %v4376, %v4662
    %v4664 = vsel %vm567, %v4663, %v4659
    %v4665 = vlaneseq
    %v4666 = vshrl.u32 %v4665, 7
    %v4667 = vsub.s32 %v569, %v4666
    %v4668 = vrot.slane %v4380, %v4667
    %v4669 = vsel %vm574, %v4668, %v4664
    %v4670 = vlaneseq
    %v4671 = vshrl.u32 %v4670, 7
    %v4672 = vsub.s32 %v576, %v4671
    %v4673 = vrot.slane %v4384, %v4672
    %v4674 = vsel %vm581, %v4673, %v4669
    %v4675 = vlaneseq
    %v4676 = vshrl.u32 %v4675, 7
    %v4677 = vsub.s32 %v583, %v4676
    %v4678 = vrot.slane %v4388, %v4677
    %v4679 = vsel %vm588, %v4678, %v4674
    %v4680 = vlaneseq
    %v4681 = vshrl.u32 %v4680, 7
    %v4682 = vsub.s32 %v590, %v4681
    %v4683 = vrot.slane %v4392, %v4682
    %v4684 = vsel %vm595, %v4683, %v4679
    %v4685 = vlaneseq
    %v4686 = vshrl.u32 %v4685, 7
    %v4687 = vsub.s32 %v597, %v4686
    %v4688 = vrot.slane %v4396, %v4687
    %v4689 = vsel %vm602, %v4688, %v4684
    %v4690 = vlaneseq
    %v4691 = vshrl.u32 %v4690, 7
    %v4692 = vsub.s32 %v604, %v4691
    %v4693 = vrot.slane %v4400, %v4692
    %v4694 = vsel %vm609, %v4693, %v4689
    %v4695 = vlaneseq
    %v4696 = vshrl.u32 %v4695, 7
    %v4697 = vsub.s32 %v611, %v4696
    %v4698 = vrot.slane %v4404, %v4697
    %v4699 = vsel %vm616, %v4698, %v4694
    %v4700 = vlaneseq
    %v4701 = vshrl.u32 %v4700, 7
    %v4702 = vsub.s32 %v508, %v4701
    %v4703 = vrot.slane %v4408, %v4702
    %v4704 = vlaneseq
    %v4705 = vshrl.u32 %v4704, 7
    %v4706 = vsub.s32 %v513, %v4705
    %v4707 = vrot.slane %v4412, %v4706
    %v4708 = vsel %vm518, %v4707, %v4703
    %v4709 = vlaneseq
    %v4710 = vshrl.u32 %v4709, 7
    %v4711 = vsub.s32 %v520, %v4710
    %v4712 = vrot.slane %v4416, %v4711
    %v4713 = vsel %vm525, %v4712, %v4708
    %v4714 = vlaneseq
    %v4715 = vshrl.u32 %v4714, 7
    %v4716 = vsub.s32 %v527, %v4715
    %v4717 = vrot.slane %v4420, %v4716
    %v4718 = vsel %vm532, %v4717, %v4713
    %v4719 = vlaneseq
    %v4720 = vshrl.u32 %v4719, 7
    %v4721 = vsub.s32 %v534, %v4720
    %v4722 = vrot.slane %v4424, %v4721
    %v4723 = vsel %vm539, %v4722, %v4718
    %v4724 = vlaneseq
    %v4725 = vshrl.u32 %v4724, 7
    %v4726 = vsub.s32 %v541, %v4725
    %v4727 = vrot.slane %v4428, %v4726
    %v4728 = vsel %vm546, %v4727, %v4723
    %v4729 = vlaneseq
    %v4730 = vshrl.u32 %v4729, 7
    %v4731 = vsub.s32 %v548, %v4730
    %v4732 = vrot.slane %v4432, %v4731
    %v4733 = vsel %vm553, %v4732, %v4728
    %v4734 = vlaneseq
    %v4735 = vshrl.u32 %v4734, 7
    %v4736 = vsub.s32 %v555, %v4735
    %v4737 = vrot.slane %v4436, %v4736
    %v4738 = vsel %vm560, %v4737, %v4733
    %v4739 = vlaneseq
    %v4740 = vshrl.u32 %v4739, 7
    %v4741 = vsub.s32 %v562, %v4740
    %v4742 = vrot.slane %v4440, %v4741
    %v4743 = vsel %vm567, %v4742, %v4738
    %v4744 = vlaneseq
    %v4745 = vshrl.u32 %v4744, 7
    %v4746 = vsub.s32 %v569, %v4745
    %v4747 = vrot.slane %v4444, %v4746
    %v4748 = vsel %vm574, %v4747, %v4743
    %v4749 = vlaneseq
    %v4750 = vshrl.u32 %v4749, 7
    %v4751 = vsub.s32 %v576, %v4750
    %v4752 = vrot.slane %v4448, %v4751
    %v4753 = vsel %vm581, %v4752, %v4748
    %v4754 = vlaneseq
    %v4755 = vshrl.u32 %v4754, 7
    %v4756 = vsub.s32 %v583, %v4755
    %v4757 = vrot.slane %v4452, %v4756
    %v4758 = vsel %vm588, %v4757, %v4753
    %v4759 = vlaneseq
    %v4760 = vshrl.u32 %v4759, 7
    %v4761 = vsub.s32 %v508, %v4760
    %v4762 = vrot.slane %v4456, %v4761
    %v4763 = vlaneseq
    %v4764 = vshrl.u32 %v4763, 7
    %v4765 = vsub.s32 %v513, %v4764
    %v4766 = vrot.slane %v4460, %v4765
    %v4767 = vsel %vm518, %v4766, %v4762
    %v4768 = vlaneseq
    %v4769 = vshrl.u32 %v4768, 7
    %v4770 = vsub.s32 %v520, %v4769
    %v4771 = vrot.slane %v4464, %v4770
    %v4772 = vsel %vm525, %v4771, %v4767
    %v4773 = vlaneseq
    %v4774 = vshrl.u32 %v4773, 7
    %v4775 = vsub.s32 %v527, %v4774
    %v4776 = vrot.slane %v4468, %v4775
    %v4777 = vsel %vm532, %v4776, %v4772
    %v4778 = vlaneseq
    %v4779 = vshrl.u32 %v4778, 7
    %v4780 = vsub.s32 %v534, %v4779
    %v4781 = vrot.slane %v4472, %v4780
    %v4782 = vsel %vm539, %v4781, %v4777
    %v4783 = vlaneseq
    %v4784 = vshrl.u32 %v4783, 7
    %v4785 = vsub.s32 %v541, %v4784
    %v4786 = vrot.slane %v4476, %v4785
    %v4787 = vsel %vm546, %v4786, %v4782
    %v4788 = vlaneseq
    %v4789 = vshrl.u32 %v4788, 7
    %v4790 = vsub.s32 %v548, %v4789
    %v4791 = vrot.slane %v4480, %v4790
    %v4792 = vsel %vm553, %v4791, %v4787
    %v4793 = vlaneseq
    %v4794 = vshrl.u32 %v4793, 7
    %v4795 = vsub.s32 %v555, %v4794
    %v4796 = vrot.slane %v4484, %v4795
    %v4797 = vsel %vm560, %v4796, %v4792
    %v4798 = vlaneseq
    %v4799 = vshrl.u32 %v4798, 7
    %v4800 = vsub.s32 %v562, %v4799
    %v4801 = vrot.slane %v4488, %v4800
    %v4802 = vsel %vm567, %v4801, %v4797
    %v4803 = vlaneseq
    %v4804 = vshrl.u32 %v4803, 7
    %v4805 = vsub.s32 %v569, %v4804
    %v4806 = vrot.slane %v4492, %v4805
    %v4807 = vsel %vm574, %v4806, %v4802
    %v4808 = vlaneseq
    %v4809 = vshrl.u32 %v4808, 7
    %v4810 = vsub.s32 %v576, %v4809
    %v4811 = vrot.slane %v4496, %v4810
    %v4812 = vsel %vm581, %v4811, %v4807
    %v4813 = vlaneseq
    %v4814 = vshrl.u32 %v4813, 7
    %v4815 = vsub.s32 %v583, %v4814
    %v4816 = vrot.slane %v4500, %v4815
    %v4817 = vsel %vm588, %v4816, %v4812
    %v4818 = vlaneseq
    %v4819 = vshrl.u32 %v4818, 7
    %v4820 = vsub.s32 %v590, %v4819
    %v4821 = vrot.slane %v4504, %v4820
    %v4822 = vsel %vm595, %v4821, %v4817
    %v4823 = vlaneseq
    %v4824 = vshrl.u32 %v4823, 7
    %v4825 = vsub.s32 %v597, %v4824
    %v4826 = vrot.slane %v4508, %v4825
    %v4827 = vsel %vm602, %v4826, %v4822
    %v4828 = vlaneseq
    %v4829 = vshrl.u32 %v4828, 7
    %v4830 = vsub.s32 %v604, %v4829
    %v4831 = vrot.slane %v4512, %v4830
    %v4832 = vsel %vm609, %v4831, %v4827
    %v4833 = vlaneseq
    %v4834 = vshrl.u32 %v4833, 7
    %v4835 = vsub.s32 %v611, %v4834
    %v4836 = vrot.slane %v4516, %v4835
    %v4837 = vsel %vm616, %v4836, %v4832
    %v4838 = vlaneseq
    %v4839 = vshrl.u32 %v4838, 7
    %v4840 = vsub.s32 %v508, %v4839
    %v4841 = vrot.slane %v4520, %v4840
    %v4842 = vlaneseq
    %v4843 = vshrl.u32 %v4842, 7
    %v4844 = vsub.s32 %v513, %v4843
    %v4845 = vrot.slane %v4524, %v4844
    %v4846 = vsel %vm518, %v4845, %v4841
    %v4847 = vlaneseq
    %v4848 = vshrl.u32 %v4847, 7
    %v4849 = vsub.s32 %v520, %v4848
    %v4850 = vrot.slane %v4528, %v4849
    %v4851 = vsel %vm525, %v4850, %v4846
    %v4852 = vlaneseq
    %v4853 = vshrl.u32 %v4852, 7
    %v4854 = vsub.s32 %v527, %v4853
    %v4855 = vrot.slane %v4532, %v4854
    %v4856 = vsel %vm532, %v4855, %v4851
    %v4857 = vlaneseq
    %v4858 = vshrl.u32 %v4857, 7
    %v4859 = vsub.s32 %v534, %v4858
    %v4860 = vrot.slane %v4536, %v4859
    %v4861 = vsel %vm539, %v4860, %v4856
    %v4862 = vlaneseq
    %v4863 = vshrl.u32 %v4862, 7
    %v4864 = vsub.s32 %v541, %v4863
    %v4865 = vrot.slane %v4540, %v4864
    %v4866 = vsel %vm546, %v4865, %v4861
    %v4867 = vlaneseq
    %v4868 = vshrl.u32 %v4867, 7
    %v4869 = vsub.s32 %v548, %v4868
    %v4870 = vrot.slane %v4544, %v4869
    %v4871 = vsel %vm553, %v4870, %v4866
    %v4872 = vlaneseq
    %v4873 = vshrl.u32 %v4872, 7
    %v4874 = vsub.s32 %v555, %v4873
    %v4875 = vrot.slane %v4548, %v4874
    %v4876 = vsel %vm560, %v4875, %v4871
    %v4877 = vlaneseq
    %v4878 = vshrl.u32 %v4877, 7
    %v4879 = vsub.s32 %v562, %v4878
    %v4880 = vrot.slane %v4552, %v4879
    %v4881 = vsel %vm567, %v4880, %v4876
    %v4882 = vlaneseq
    %v4883 = vshrl.u32 %v4882, 7
    %v4884 = vsub.s32 %v569, %v4883
    %v4885 = vrot.slane %v4556, %v4884
    %v4886 = vsel %vm574, %v4885, %v4881
    %v4887 = vlaneseq
    %v4888 = vshrl.u32 %v4887, 7
    %v4889 = vsub.s32 %v576, %v4888
    %v4890 = vrot.slane %v4560, %v4889
    %v4891 = vsel %vm581, %v4890, %v4886
    %v4892 = vlaneseq
    %v4893 = vshrl.u32 %v4892, 7
    %v4894 = vsub.s32 %v583, %v4893
    %v4895 = vrot.slane %v4564, %v4894
    %v4896 = vsel %vm588, %v4895, %v4891
    %v4897 = vsel %vm815, %v4837, %v4699
    %v4898 = vsel %vm815, %v4896, %v4758
    %v4901 = vsel %vm820, %v4897, 0.0
    %v4902 = vsel %vm822, %v4898, 0.0
    %v4903 = vadd.f32 %v4901, %v4902
    %4904 = vadd.xlane.f32.xlu0 %v4903
    %v4905 = vpop.xlane.xlu0 %4904
    %v4906 = vmul.f32 %v4905, 1.9929847e-05
    %s4907 = scalar_lea.vmem [#allocation4], 1344
    %v4908 = vld [vmem:[%s4907] sm:$0xff]
    %v4909 = vld [vmem:[%s4907 + $0x8] sm:$0xff]
    %v4910 = vld [vmem:[%s4907 + $0x10] sm:$0xff]
    %v4911 = vld [vmem:[%s4907 + $0x18] sm:$0xff]
    %v4912 = vld [vmem:[%s4907 + $0x20] sm:$0xff]
    %v4913 = vld [vmem:[%s4907 + $0x28] sm:$0xff]
    %v4914 = vld [vmem:[%s4907 + $0x30] sm:$0xff]
    %v4915 = vld [vmem:[%s4907 + $0x38] sm:$0xff]
    %v4916 = vld [vmem:[%s4907 + $0x40] sm:$0xff]
    %v4917 = vld [vmem:[%s4907 + $0x48] sm:$0xff]
    %v4918 = vld [vmem:[%s4907 + $0x50] sm:$0xff]
    %v4919 = vld [vmem:[%s4907 + $0x58] sm:$0xff]
    %v4920 = vld [vmem:[%s4907 + $0x60] sm:$0xff]
    %v4921 = vld [vmem:[%s4907 + $0x68] sm:$0xff]
    %v4922 = vld [vmem:[%s4907 + $0x70] sm:$0xff]
    %v4923 = vld [vmem:[%s4907 + $0x78] sm:$0xff]
    %v4924 = vld [vmem:[%s4907 + $0x80] sm:$0xff]
    %v4925 = vld [vmem:[%s4907 + $0x88] sm:$0xff]
    %v4926 = vld [vmem:[%s4907 + $0x90] sm:$0xff]
    %v4927 = vld [vmem:[%s4907 + $0x98] sm:$0xff]
    %v4928 = vld [vmem:[%s4907 + $0xa0] sm:$0xff]
    %v4929 = vld [vmem:[%s4907 + $0xa8] sm:$0xff]
    %v4930 = vld [vmem:[%s4907 + $0xb0] sm:$0xff]
    %v4931 = vld [vmem:[%s4907 + $0xb8] sm:$0xff]
    %v4932 = vld [vmem:[%s4907 + $0xc0] sm:$0xff]
    %v4933 = vld [vmem:[%s4907 + $0xc8] sm:$0xff]
    %v4934 = vld [vmem:[%s4907 + $0xd0] sm:$0xff]
    %v4935 = vld [vmem:[%s4907 + $0xd8] sm:$0xff]
    %v4936 = vld [vmem:[%s4907 + $0xe0] sm:$0xff]
    %v4937 = vld [vmem:[%s4907 + $0xe8] sm:$0xff]
    %v4938 = vld [vmem:[%s4907 + $0xf0] sm:$0xff]
    %v4939 = vld [vmem:[%s4907 + $0xf8] sm:$0xff]
    %v4940 = vld [vmem:[%s4907 + $0x100] sm:$0xff]
    %v4941 = vld [vmem:[%s4907 + $0x108] sm:$0xff]
    %v4942 = vld [vmem:[%s4907 + $0x110] sm:$0xff]
    %v4943 = vld [vmem:[%s4907 + $0x118] sm:$0xff]
    %v4944 = vld [vmem:[%s4907 + $0x120] sm:$0xff]
    %v4945 = vld [vmem:[%s4907 + $0x128] sm:$0xff]
    %v4946 = vld [vmem:[%s4907 + $0x130] sm:$0xff]
    %v4947 = vld [vmem:[%s4907 + $0x138] sm:$0xff]
    %v4948 = vld [vmem:[%s4907 + $0x140] sm:$0xff]
    %v4949 = vld [vmem:[%s4907 + $0x148] sm:$0xff]
    %v4950 = vld [vmem:[%s4907 + $0x150] sm:$0xff]
    %v4951 = vld [vmem:[%s4907 + $0x158] sm:$0xff]
    %v4952 = vld [vmem:[%s4907 + $0x160] sm:$0xff]
    %v4953 = vld [vmem:[%s4907 + $0x168] sm:$0xff]
    %v4954 = vld [vmem:[%s4907 + $0x170] sm:$0xff]
    %v4955 = vld [vmem:[%s4907 + $0x178] sm:$0xff]
    %v4956 = vld [vmem:[%s4907 + $0x180] sm:$0xff]
    %v4957 = vld [vmem:[%s4907 + $0x188] sm:$0xff]
    %v4958 = vld [vmem:[%s4907 + $0x190] sm:$0xff]
    %v4959 = vld [vmem:[%s4907 + $0x198] sm:$0xff]
    %v4960 = vld [vmem:[%s4907 + $0x1a0] sm:$0xff]
    %v4961 = vld [vmem:[%s4907 + $0x1a8] sm:$0xff]
    %v4962 = vld [vmem:[%s4907 + $0x1b0] sm:$0xff]
    %v4963 = vld [vmem:[%s4907 + $0x1b8] sm:$0xff]
    %v4964 = vld [vmem:[%s4907 + $0x700] sm:$0xff]
    %v4965 = vld [vmem:[%s4907 + $0x708] sm:$0xff]
    %v4966 = vld [vmem:[%s4907 + $0x710] sm:$0xff]
    %v4967 = vld [vmem:[%s4907 + $0x718] sm:$0xff]
    %v4968 = vld [vmem:[%s4907 + $0x720] sm:$0xff]
    %v4969 = vld [vmem:[%s4907 + $0x728] sm:$0xff]
    %v4970 = vld [vmem:[%s4907 + $0x730] sm:$0xff]
    %v4971 = vld [vmem:[%s4907 + $0x738] sm:$0xff]
    %v4972 = vld [vmem:[%s4907 + $0x740] sm:$0xff]
    %v4973 = vld [vmem:[%s4907 + $0x748] sm:$0xff]
    %v4974 = vld [vmem:[%s4907 + $0x750] sm:$0xff]
    %v4975 = vld [vmem:[%s4907 + $0x758] sm:$0xff]
    %v4976 = vld [vmem:[%s4907 + $0x760] sm:$0xff]
    %v4977 = vld [vmem:[%s4907 + $0x768] sm:$0xff]
    %v4978 = vld [vmem:[%s4907 + $0x770] sm:$0xff]
    %v4979 = vld [vmem:[%s4907 + $0x778] sm:$0xff]
    %v4980 = vld [vmem:[%s4907 + $0x780] sm:$0xff]
    %v4981 = vld [vmem:[%s4907 + $0x788] sm:$0xff]
    %v4982 = vld [vmem:[%s4907 + $0x790] sm:$0xff]
    %v4983 = vld [vmem:[%s4907 + $0x798] sm:$0xff]
    %v4984 = vld [vmem:[%s4907 + $0x7a0] sm:$0xff]
    %v4985 = vld [vmem:[%s4907 + $0x7a8] sm:$0xff]
    %v4986 = vld [vmem:[%s4907 + $0x7b0] sm:$0xff]
    %v4987 = vld [vmem:[%s4907 + $0x7b8] sm:$0xff]
    %v4988 = vld [vmem:[%s4907 + $0x7c0] sm:$0xff]
    %v4989 = vld [vmem:[%s4907 + $0x7c8] sm:$0xff]
    %v4990 = vld [vmem:[%s4907 + $0x7d0] sm:$0xff]
    %v4991 = vld [vmem:[%s4907 + $0x7d8] sm:$0xff]
    %v4992 = vld [vmem:[%s4907 + $0x7e0] sm:$0xff]
    %v4993 = vld [vmem:[%s4907 + $0x7e8] sm:$0xff]
    %v4994 = vld [vmem:[%s4907 + $0x7f0] sm:$0xff]
    %v4995 = vld [vmem:[%s4907 + $0x7f8] sm:$0xff]
    %v4996 = vld [vmem:[%s4907 + $0x800] sm:$0xff]
    %v4997 = vld [vmem:[%s4907 + $0x808] sm:$0xff]
    %v4998 = vld [vmem:[%s4907 + $0x810] sm:$0xff]
    %v4999 = vld [vmem:[%s4907 + $0x818] sm:$0xff]
    %v5000 = vld [vmem:[%s4907 + $0x820] sm:$0xff]
    %v5001 = vld [vmem:[%s4907 + $0x828] sm:$0xff]
    %v5002 = vld [vmem:[%s4907 + $0x830] sm:$0xff]
    %v5003 = vld [vmem:[%s4907 + $0x838] sm:$0xff]
    %v5004 = vld [vmem:[%s4907 + $0x840] sm:$0xff]
    %v5005 = vld [vmem:[%s4907 + $0x848] sm:$0xff]
    %v5006 = vld [vmem:[%s4907 + $0x850] sm:$0xff]
    %v5007 = vld [vmem:[%s4907 + $0x858] sm:$0xff]
    %v5008 = vld [vmem:[%s4907 + $0x860] sm:$0xff]
    %v5009 = vld [vmem:[%s4907 + $0x868] sm:$0xff]
    %v5010 = vld [vmem:[%s4907 + $0x870] sm:$0xff]
    %v5011 = vld [vmem:[%s4907 + $0x878] sm:$0xff]
    %v5012 = vld [vmem:[%s4907 + $0x880] sm:$0xff]
    %v5013 = vld [vmem:[%s4907 + $0x888] sm:$0xff]
    %v5014 = vld [vmem:[%s4907 + $0x890] sm:$0xff]
    %v5015 = vld [vmem:[%s4907 + $0x898] sm:$0xff]
    %v5016 = vld [vmem:[%s4907 + $0x8a0] sm:$0xff]
    %v5017 = vld [vmem:[%s4907 + $0x8a8] sm:$0xff]
    %v5018 = vld [vmem:[%s4907 + $0x8b0] sm:$0xff]
    %v5019 = vld [vmem:[%s4907 + $0x8b8] sm:$0xff]
    %v5020 = vsel %vm226, %v4909, 0.0
    %v5021 = vadd.f32 %v4908, %v5020
    %5022 = vadd.xlane.f32.xlu0 %v5021
    %v5023 = vpop.xlane.xlu0 %5022
    %v5024 = vsel %vm226, %v4911, 0.0
    %v5025 = vadd.f32 %v4910, %v5024
    %5026 = vadd.xlane.f32.xlu0 %v5025
    %v5027 = vpop.xlane.xlu0 %5026
    %v5028 = vsel %vm226, %v4913, 0.0
    %v5029 = vadd.f32 %v4912, %v5028
    %5030 = vadd.xlane.f32.xlu0 %v5029
    %v5031 = vpop.xlane.xlu0 %5030
    %v5032 = vsel %vm226, %v4915, 0.0
    %v5033 = vadd.f32 %v4914, %v5032
    %5034 = vadd.xlane.f32.xlu0 %v5033
    %v5035 = vpop.xlane.xlu0 %5034
    %v5036 = vsel %vm226, %v4917, 0.0
    %v5037 = vadd.f32 %v4916, %v5036
    %5038 = vadd.xlane.f32.xlu0 %v5037
    %v5039 = vpop.xlane.xlu0 %5038
    %v5040 = vsel %vm226, %v4919, 0.0
    %v5041 = vadd.f32 %v4918, %v5040
    %5042 = vadd.xlane.f32.xlu0 %v5041
    %v5043 = vpop.xlane.xlu0 %5042
    %v5044 = vsel %vm226, %v4921, 0.0
    %v5045 = vadd.f32 %v4920, %v5044
    %5046 = vadd.xlane.f32.xlu0 %v5045
    %v5047 = vpop.xlane.xlu0 %5046
    %v5048 = vsel %vm226, %v4923, 0.0
    %v5049 = vadd.f32 %v4922, %v5048
    %5050 = vadd.xlane.f32.xlu0 %v5049
    %v5051 = vpop.xlane.xlu0 %5050
    %v5052 = vsel %vm226, %v4925, 0.0
    %v5053 = vadd.f32 %v4924, %v5052
    %5054 = vadd.xlane.f32.xlu0 %v5053
    %v5055 = vpop.xlane.xlu0 %5054
    %v5056 = vsel %vm226, %v4927, 0.0
    %v5057 = vadd.f32 %v4926, %v5056
    %5058 = vadd.xlane.f32.xlu0 %v5057
    %v5059 = vpop.xlane.xlu0 %5058
    %v5060 = vsel %vm226, %v4929, 0.0
    %v5061 = vadd.f32 %v4928, %v5060
    %5062 = vadd.xlane.f32.xlu0 %v5061
    %v5063 = vpop.xlane.xlu0 %5062
    %v5064 = vsel %vm226, %v4931, 0.0
    %v5065 = vadd.f32 %v4930, %v5064
    %5066 = vadd.xlane.f32.xlu0 %v5065
    %v5067 = vpop.xlane.xlu0 %5066
    %v5068 = vsel %vm226, %v4933, 0.0
    %v5069 = vadd.f32 %v4932, %v5068
    %5070 = vadd.xlane.f32.xlu0 %v5069
    %v5071 = vpop.xlane.xlu0 %5070
    %v5072 = vsel %vm226, %v4935, 0.0
    %v5073 = vadd.f32 %v4934, %v5072
    %5074 = vadd.xlane.f32.xlu0 %v5073
    %v5075 = vpop.xlane.xlu0 %5074
    %v5076 = vsel %vm226, %v4937, 0.0
    %v5077 = vadd.f32 %v4936, %v5076
    %5078 = vadd.xlane.f32.xlu0 %v5077
    %v5079 = vpop.xlane.xlu0 %5078
    %v5080 = vsel %vm226, %v4939, 0.0
    %v5081 = vadd.f32 %v4938, %v5080
    %5082 = vadd.xlane.f32.xlu0 %v5081
    %v5083 = vpop.xlane.xlu0 %5082
    %v5084 = vsel %vm226, %v4941, 0.0
    %v5085 = vadd.f32 %v4940, %v5084
    %5086 = vadd.xlane.f32.xlu0 %v5085
    %v5087 = vpop.xlane.xlu0 %5086
    %v5088 = vsel %vm226, %v4943, 0.0
    %v5089 = vadd.f32 %v4942, %v5088
    %5090 = vadd.xlane.f32.xlu0 %v5089
    %v5091 = vpop.xlane.xlu0 %5090
    %v5092 = vsel %vm226, %v4945, 0.0
    %v5093 = vadd.f32 %v4944, %v5092
    %5094 = vadd.xlane.f32.xlu0 %v5093
    %v5095 = vpop.xlane.xlu0 %5094
    %v5096 = vsel %vm226, %v4947, 0.0
    %v5097 = vadd.f32 %v4946, %v5096
    %5098 = vadd.xlane.f32.xlu0 %v5097
    %v5099 = vpop.xlane.xlu0 %5098
    %v5100 = vsel %vm226, %v4949, 0.0
    %v5101 = vadd.f32 %v4948, %v5100
    %5102 = vadd.xlane.f32.xlu0 %v5101
    %v5103 = vpop.xlane.xlu0 %5102
    %v5104 = vsel %vm226, %v4951, 0.0
    %v5105 = vadd.f32 %v4950, %v5104
    %5106 = vadd.xlane.f32.xlu0 %v5105
    %v5107 = vpop.xlane.xlu0 %5106
    %v5108 = vsel %vm226, %v4953, 0.0
    %v5109 = vadd.f32 %v4952, %v5108
    %5110 = vadd.xlane.f32.xlu0 %v5109
    %v5111 = vpop.xlane.xlu0 %5110
    %v5112 = vsel %vm226, %v4955, 0.0
    %v5113 = vadd.f32 %v4954, %v5112
    %5114 = vadd.xlane.f32.xlu0 %v5113
    %v5115 = vpop.xlane.xlu0 %5114
    %v5116 = vsel %vm226, %v4957, 0.0
    %v5117 = vadd.f32 %v4956, %v5116
    %5118 = vadd.xlane.f32.xlu0 %v5117
    %v5119 = vpop.xlane.xlu0 %5118
    %v5120 = vsel %vm226, %v4959, 0.0
    %v5121 = vadd.f32 %v4958, %v5120
    %5122 = vadd.xlane.f32.xlu0 %v5121
    %v5123 = vpop.xlane.xlu0 %5122
    %v5124 = vsel %vm226, %v4961, 0.0
    %v5125 = vadd.f32 %v4960, %v5124
    %5126 = vadd.xlane.f32.xlu0 %v5125
    %v5127 = vpop.xlane.xlu0 %5126
    %v5128 = vsel %vm226, %v4963, 0.0
    %v5129 = vadd.f32 %v4962, %v5128
    %5130 = vadd.xlane.f32.xlu0 %v5129
    %v5131 = vpop.xlane.xlu0 %5130
    %v5132 = vsel %vm226, %v4965, 0.0
    %v5133 = vadd.f32 %v4964, %v5132
    %5134 = vadd.xlane.f32.xlu0 %v5133
    %v5135 = vpop.xlane.xlu0 %5134
    %v5136 = vsel %vm226, %v4967, 0.0
    %v5137 = vadd.f32 %v4966, %v5136
    %5138 = vadd.xlane.f32.xlu0 %v5137
    %v5139 = vpop.xlane.xlu0 %5138
    %v5140 = vsel %vm226, %v4969, 0.0
    %v5141 = vadd.f32 %v4968, %v5140
    %5142 = vadd.xlane.f32.xlu0 %v5141
    %v5143 = vpop.xlane.xlu0 %5142
    %v5144 = vsel %vm226, %v4971, 0.0
    %v5145 = vadd.f32 %v4970, %v5144
    %5146 = vadd.xlane.f32.xlu0 %v5145
    %v5147 = vpop.xlane.xlu0 %5146
    %v5148 = vsel %vm226, %v4973, 0.0
    %v5149 = vadd.f32 %v4972, %v5148
    %5150 = vadd.xlane.f32.xlu0 %v5149
    %v5151 = vpop.xlane.xlu0 %5150
    %v5152 = vsel %vm226, %v4975, 0.0
    %v5153 = vadd.f32 %v4974, %v5152
    %5154 = vadd.xlane.f32.xlu0 %v5153
    %v5155 = vpop.xlane.xlu0 %5154
    %v5156 = vsel %vm226, %v4977, 0.0
    %v5157 = vadd.f32 %v4976, %v5156
    %5158 = vadd.xlane.f32.xlu0 %v5157
    %v5159 = vpop.xlane.xlu0 %5158
    %v5160 = vsel %vm226, %v4979, 0.0
    %v5161 = vadd.f32 %v4978, %v5160
    %5162 = vadd.xlane.f32.xlu0 %v5161
    %v5163 = vpop.xlane.xlu0 %5162
    %v5164 = vsel %vm226, %v4981, 0.0
    %v5165 = vadd.f32 %v4980, %v5164
    %5166 = vadd.xlane.f32.xlu0 %v5165
    %v5167 = vpop.xlane.xlu0 %5166
    %v5168 = vsel %vm226, %v4983, 0.0
    %v5169 = vadd.f32 %v4982, %v5168
    %5170 = vadd.xlane.f32.xlu0 %v5169
    %v5171 = vpop.xlane.xlu0 %5170
    %v5172 = vsel %vm226, %v4985, 0.0
    %v5173 = vadd.f32 %v4984, %v5172
    %5174 = vadd.xlane.f32.xlu0 %v5173
    %v5175 = vpop.xlane.xlu0 %5174
    %v5176 = vsel %vm226, %v4987, 0.0
    %v5177 = vadd.f32 %v4986, %v5176
    %5178 = vadd.xlane.f32.xlu0 %v5177
    %v5179 = vpop.xlane.xlu0 %5178
    %v5180 = vsel %vm226, %v4989, 0.0
    %v5181 = vadd.f32 %v4988, %v5180
    %5182 = vadd.xlane.f32.xlu0 %v5181
    %v5183 = vpop.xlane.xlu0 %5182
    %v5184 = vsel %vm226, %v4991, 0.0
    %v5185 = vadd.f32 %v4990, %v5184
    %5186 = vadd.xlane.f32.xlu0 %v5185
    %v5187 = vpop.xlane.xlu0 %5186
    %v5188 = vsel %vm226, %v4993, 0.0
    %v5189 = vadd.f32 %v4992, %v5188
    %5190 = vadd.xlane.f32.xlu0 %v5189
    %v5191 = vpop.xlane.xlu0 %5190
    %v5192 = vsel %vm226, %v4995, 0.0
    %v5193 = vadd.f32 %v4994, %v5192
    %5194 = vadd.xlane.f32.xlu0 %v5193
    %v5195 = vpop.xlane.xlu0 %5194
    %v5196 = vsel %vm226, %v4997, 0.0
    %v5197 = vadd.f32 %v4996, %v5196
    %5198 = vadd.xlane.f32.xlu0 %v5197
    %v5199 = vpop.xlane.xlu0 %5198
    %v5200 = vsel %vm226, %v4999, 0.0
    %v5201 = vadd.f32 %v4998, %v5200
    %5202 = vadd.xlane.f32.xlu0 %v5201
    %v5203 = vpop.xlane.xlu0 %5202
    %v5204 = vsel %vm226, %v5001, 0.0
    %v5205 = vadd.f32 %v5000, %v5204
    %5206 = vadd.xlane.f32.xlu0 %v5205
    %v5207 = vpop.xlane.xlu0 %5206
    %v5208 = vsel %vm226, %v5003, 0.0
    %v5209 = vadd.f32 %v5002, %v5208
    %5210 = vadd.xlane.f32.xlu0 %v5209
    %v5211 = vpop.xlane.xlu0 %5210
    %v5212 = vsel %vm226, %v5005, 0.0
    %v5213 = vadd.f32 %v5004, %v5212
    %5214 = vadd.xlane.f32.xlu0 %v5213
    %v5215 = vpop.xlane.xlu0 %5214
    %v5216 = vsel %vm226, %v5007, 0.0
    %v5217 = vadd.f32 %v5006, %v5216
    %5218 = vadd.xlane.f32.xlu0 %v5217
    %v5219 = vpop.xlane.xlu0 %5218
    %v5220 = vsel %vm226, %v5009, 0.0
    %v5221 = vadd.f32 %v5008, %v5220
    %5222 = vadd.xlane.f32.xlu0 %v5221
    %v5223 = vpop.xlane.xlu0 %5222
    %v5224 = vsel %vm226, %v5011, 0.0
    %v5225 = vadd.f32 %v5010, %v5224
    %5226 = vadd.xlane.f32.xlu0 %v5225
    %v5227 = vpop.xlane.xlu0 %5226
    %v5228 = vsel %vm226, %v5013, 0.0
    %v5229 = vadd.f32 %v5012, %v5228
    %5230 = vadd.xlane.f32.xlu0 %v5229
    %v5231 = vpop.xlane.xlu0 %5230
    %v5232 = vsel %vm226, %v5015, 0.0
    %v5233 = vadd.f32 %v5014, %v5232
    %5234 = vadd.xlane.f32.xlu0 %v5233
    %v5235 = vpop.xlane.xlu0 %5234
    %v5236 = vsel %vm226, %v5017, 0.0
    %v5237 = vadd.f32 %v5016, %v5236
    %5238 = vadd.xlane.f32.xlu0 %v5237
    %v5239 = vpop.xlane.xlu0 %5238
    %v5240 = vsel %vm226, %v5019, 0.0
    %v5241 = vadd.f32 %v5018, %v5240
    %5242 = vadd.xlane.f32.xlu0 %v5241
    %v5243 = vpop.xlane.xlu0 %5242
    %v5300 = vlaneseq
    %v5301 = vshrl.u32 %v5300, 7
    %v5302 = vsub.s32 %v508, %v5301
    %v5303 = vrot.slane %v5023, %v5302
    %v5304 = vlaneseq
    %v5305 = vshrl.u32 %v5304, 7
    %v5306 = vsub.s32 %v513, %v5305
    %v5307 = vrot.slane %v5027, %v5306
    %v5308 = vsel %vm518, %v5307, %v5303
    %v5309 = vlaneseq
    %v5310 = vshrl.u32 %v5309, 7
    %v5311 = vsub.s32 %v520, %v5310
    %v5312 = vrot.slane %v5031, %v5311
    %v5313 = vsel %vm525, %v5312, %v5308
    %v5314 = vlaneseq
    %v5315 = vshrl.u32 %v5314, 7
    %v5316 = vsub.s32 %v527, %v5315
    %v5317 = vrot.slane %v5035, %v5316
    %v5318 = vsel %vm532, %v5317, %v5313
    %v5319 = vlaneseq
    %v5320 = vshrl.u32 %v5319, 7
    %v5321 = vsub.s32 %v534, %v5320
    %v5322 = vrot.slane %v5039, %v5321
    %v5323 = vsel %vm539, %v5322, %v5318
    %v5324 = vlaneseq
    %v5325 = vshrl.u32 %v5324, 7
    %v5326 = vsub.s32 %v541, %v5325
    %v5327 = vrot.slane %v5043, %v5326
    %v5328 = vsel %vm546, %v5327, %v5323
    %v5329 = vlaneseq
    %v5330 = vshrl.u32 %v5329, 7
    %v5331 = vsub.s32 %v548, %v5330
    %v5332 = vrot.slane %v5047, %v5331
    %v5333 = vsel %vm553, %v5332, %v5328
    %v5334 = vlaneseq
    %v5335 = vshrl.u32 %v5334, 7
    %v5336 = vsub.s32 %v555, %v5335
    %v5337 = vrot.slane %v5051, %v5336
    %v5338 = vsel %vm560, %v5337, %v5333
    %v5339 = vlaneseq
    %v5340 = vshrl.u32 %v5339, 7
    %v5341 = vsub.s32 %v562, %v5340
    %v5342 = vrot.slane %v5055, %v5341
    %v5343 = vsel %vm567, %v5342, %v5338
    %v5344 = vlaneseq
    %v5345 = vshrl.u32 %v5344, 7
    %v5346 = vsub.s32 %v569, %v5345
    %v5347 = vrot.slane %v5059, %v5346
    %v5348 = vsel %vm574, %v5347, %v5343
    %v5349 = vlaneseq
    %v5350 = vshrl.u32 %v5349, 7
    %v5351 = vsub.s32 %v576, %v5350
    %v5352 = vrot.slane %v5063, %v5351
    %v5353 = vsel %vm581, %v5352, %v5348
    %v5354 = vlaneseq
    %v5355 = vshrl.u32 %v5354, 7
    %v5356 = vsub.s32 %v583, %v5355
    %v5357 = vrot.slane %v5067, %v5356
    %v5358 = vsel %vm588, %v5357, %v5353
    %v5359 = vlaneseq
    %v5360 = vshrl.u32 %v5359, 7
    %v5361 = vsub.s32 %v590, %v5360
    %v5362 = vrot.slane %v5071, %v5361
    %v5363 = vsel %vm595, %v5362, %v5358
    %v5364 = vlaneseq
    %v5365 = vshrl.u32 %v5364, 7
    %v5366 = vsub.s32 %v597, %v5365
    %v5367 = vrot.slane %v5075, %v5366
    %v5368 = vsel %vm602, %v5367, %v5363
    %v5369 = vlaneseq
    %v5370 = vshrl.u32 %v5369, 7
    %v5371 = vsub.s32 %v604, %v5370
    %v5372 = vrot.slane %v5079, %v5371
    %v5373 = vsel %vm609, %v5372, %v5368
    %v5374 = vlaneseq
    %v5375 = vshrl.u32 %v5374, 7
    %v5376 = vsub.s32 %v611, %v5375
    %v5377 = vrot.slane %v5083, %v5376
    %v5378 = vsel %vm616, %v5377, %v5373
    %v5379 = vlaneseq
    %v5380 = vshrl.u32 %v5379, 7
    %v5381 = vsub.s32 %v508, %v5380
    %v5382 = vrot.slane %v5087, %v5381
    %v5383 = vlaneseq
    %v5384 = vshrl.u32 %v5383, 7
    %v5385 = vsub.s32 %v513, %v5384
    %v5386 = vrot.slane %v5091, %v5385
    %v5387 = vsel %vm518, %v5386, %v5382
    %v5388 = vlaneseq
    %v5389 = vshrl.u32 %v5388, 7
    %v5390 = vsub.s32 %v520, %v5389
    %v5391 = vrot.slane %v5095, %v5390
    %v5392 = vsel %vm525, %v5391, %v5387
    %v5393 = vlaneseq
    %v5394 = vshrl.u32 %v5393, 7
    %v5395 = vsub.s32 %v527, %v5394
    %v5396 = vrot.slane %v5099, %v5395
    %v5397 = vsel %vm532, %v5396, %v5392
    %v5398 = vlaneseq
    %v5399 = vshrl.u32 %v5398, 7
    %v5400 = vsub.s32 %v534, %v5399
    %v5401 = vrot.slane %v5103, %v5400
    %v5402 = vsel %vm539, %v5401, %v5397
    %v5403 = vlaneseq
    %v5404 = vshrl.u32 %v5403, 7
    %v5405 = vsub.s32 %v541, %v5404
    %v5406 = vrot.slane %v5107, %v5405
    %v5407 = vsel %vm546, %v5406, %v5402
    %v5408 = vlaneseq
    %v5409 = vshrl.u32 %v5408, 7
    %v5410 = vsub.s32 %v548, %v5409
    %v5411 = vrot.slane %v5111, %v5410
    %v5412 = vsel %vm553, %v5411, %v5407
    %v5413 = vlaneseq
    %v5414 = vshrl.u32 %v5413, 7
    %v5415 = vsub.s32 %v555, %v5414
    %v5416 = vrot.slane %v5115, %v5415
    %v5417 = vsel %vm560, %v5416, %v5412
    %v5418 = vlaneseq
    %v5419 = vshrl.u32 %v5418, 7
    %v5420 = vsub.s32 %v562, %v5419
    %v5421 = vrot.slane %v5119, %v5420
    %v5422 = vsel %vm567, %v5421, %v5417
    %v5423 = vlaneseq
    %v5424 = vshrl.u32 %v5423, 7
    %v5425 = vsub.s32 %v569, %v5424
    %v5426 = vrot.slane %v5123, %v5425
    %v5427 = vsel %vm574, %v5426, %v5422
    %v5428 = vlaneseq
    %v5429 = vshrl.u32 %v5428, 7
    %v5430 = vsub.s32 %v576, %v5429
    %v5431 = vrot.slane %v5127, %v5430
    %v5432 = vsel %vm581, %v5431, %v5427
    %v5433 = vlaneseq
    %v5434 = vshrl.u32 %v5433, 7
    %v5435 = vsub.s32 %v583, %v5434
    %v5436 = vrot.slane %v5131, %v5435
    %v5437 = vsel %vm588, %v5436, %v5432
    %v5438 = vlaneseq
    %v5439 = vshrl.u32 %v5438, 7
    %v5440 = vsub.s32 %v508, %v5439
    %v5441 = vrot.slane %v5135, %v5440
    %v5442 = vlaneseq
    %v5443 = vshrl.u32 %v5442, 7
    %v5444 = vsub.s32 %v513, %v5443
    %v5445 = vrot.slane %v5139, %v5444
    %v5446 = vsel %vm518, %v5445, %v5441
    %v5447 = vlaneseq
    %v5448 = vshrl.u32 %v5447, 7
    %v5449 = vsub.s32 %v520, %v5448
    %v5450 = vrot.slane %v5143, %v5449
    %v5451 = vsel %vm525, %v5450, %v5446
    %v5452 = vlaneseq
    %v5453 = vshrl.u32 %v5452, 7
    %v5454 = vsub.s32 %v527, %v5453
    %v5455 = vrot.slane %v5147, %v5454
    %v5456 = vsel %vm532, %v5455, %v5451
    %v5457 = vlaneseq
    %v5458 = vshrl.u32 %v5457, 7
    %v5459 = vsub.s32 %v534, %v5458
    %v5460 = vrot.slane %v5151, %v5459
    %v5461 = vsel %vm539, %v5460, %v5456
    %v5462 = vlaneseq
    %v5463 = vshrl.u32 %v5462, 7
    %v5464 = vsub.s32 %v541, %v5463
    %v5465 = vrot.slane %v5155, %v5464
    %v5466 = vsel %vm546, %v5465, %v5461
    %v5467 = vlaneseq
    %v5468 = vshrl.u32 %v5467, 7
    %v5469 = vsub.s32 %v548, %v5468
    %v5470 = vrot.slane %v5159, %v5469
    %v5471 = vsel %vm553, %v5470, %v5466
    %v5472 = vlaneseq
    %v5473 = vshrl.u32 %v5472, 7
    %v5474 = vsub.s32 %v555, %v5473
    %v5475 = vrot.slane %v5163, %v5474
    %v5476 = vsel %vm560, %v5475, %v5471
    %v5477 = vlaneseq
    %v5478 = vshrl.u32 %v5477, 7
    %v5479 = vsub.s32 %v562, %v5478
    %v5480 = vrot.slane %v5167, %v5479
    %v5481 = vsel %vm567, %v5480, %v5476
    %v5482 = vlaneseq
    %v5483 = vshrl.u32 %v5482, 7
    %v5484 = vsub.s32 %v569, %v5483
    %v5485 = vrot.slane %v5171, %v5484
    %v5486 = vsel %vm574, %v5485, %v5481
    %v5487 = vlaneseq
    %v5488 = vshrl.u32 %v5487, 7
    %v5489 = vsub.s32 %v576, %v5488
    %v5490 = vrot.slane %v5175, %v5489
    %v5491 = vsel %vm581, %v5490, %v5486
    %v5492 = vlaneseq
    %v5493 = vshrl.u32 %v5492, 7
    %v5494 = vsub.s32 %v583, %v5493
    %v5495 = vrot.slane %v5179, %v5494
    %v5496 = vsel %vm588, %v5495, %v5491
    %v5497 = vlaneseq
    %v5498 = vshrl.u32 %v5497, 7
    %v5499 = vsub.s32 %v590, %v5498
    %v5500 = vrot.slane %v5183, %v5499
    %v5501 = vsel %vm595, %v5500, %v5496
    %v5502 = vlaneseq
    %v5503 = vshrl.u32 %v5502, 7
    %v5504 = vsub.s32 %v597, %v5503
    %v5505 = vrot.slane %v5187, %v5504
    %v5506 = vsel %vm602, %v5505, %v5501
    %v5507 = vlaneseq
    %v5508 = vshrl.u32 %v5507, 7
    %v5509 = vsub.s32 %v604, %v5508
    %v5510 = vrot.slane %v5191, %v5509
    %v5511 = vsel %vm609, %v5510, %v5506
    %v5512 = vlaneseq
    %v5513 = vshrl.u32 %v5512, 7
    %v5514 = vsub.s32 %v611, %v5513
    %v5515 = vrot.slane %v5195, %v5514
    %v5516 = vsel %vm616, %v5515, %v5511
    %v5517 = vlaneseq
    %v5518 = vshrl.u32 %v5517, 7
    %v5519 = vsub.s32 %v508, %v5518
    %v5520 = vrot.slane %v5199, %v5519
    %v5521 = vlaneseq
    %v5522 = vshrl.u32 %v5521, 7
    %v5523 = vsub.s32 %v513, %v5522
    %v5524 = vrot.slane %v5203, %v5523
    %v5525 = vsel %vm518, %v5524, %v5520
    %v5526 = vlaneseq
    %v5527 = vshrl.u32 %v5526, 7
    %v5528 = vsub.s32 %v520, %v5527
    %v5529 = vrot.slane %v5207, %v5528
    %v5530 = vsel %vm525, %v5529, %v5525
    %v5531 = vlaneseq
    %v5532 = vshrl.u32 %v5531, 7
    %v5533 = vsub.s32 %v527, %v5532
    %v5534 = vrot.slane %v5211, %v5533
    %v5535 = vsel %vm532, %v5534, %v5530
    %v5536 = vlaneseq
    %v5537 = vshrl.u32 %v5536, 7
    %v5538 = vsub.s32 %v534, %v5537
    %v5539 = vrot.slane %v5215, %v5538
    %v5540 = vsel %vm539, %v5539, %v5535
    %v5541 = vlaneseq
    %v5542 = vshrl.u32 %v5541, 7
    %v5543 = vsub.s32 %v541, %v5542
    %v5544 = vrot.slane %v5219, %v5543
    %v5545 = vsel %vm546, %v5544, %v5540
    %v5546 = vlaneseq
    %v5547 = vshrl.u32 %v5546, 7
    %v5548 = vsub.s32 %v548, %v5547
    %v5549 = vrot.slane %v5223, %v5548
    %v5550 = vsel %vm553, %v5549, %v5545
    %v5551 = vlaneseq
    %v5552 = vshrl.u32 %v5551, 7
    %v5553 = vsub.s32 %v555, %v5552
    %v5554 = vrot.slane %v5227, %v5553
    %v5555 = vsel %vm560, %v5554, %v5550
    %v5556 = vlaneseq
    %v5557 = vshrl.u32 %v5556, 7
    %v5558 = vsub.s32 %v562, %v5557
    %v5559 = vrot.slane %v5231, %v5558
    %v5560 = vsel %vm567, %v5559, %v5555
    %v5561 = vlaneseq
    %v5562 = vshrl.u32 %v5561, 7
    %v5563 = vsub.s32 %v569, %v5562
    %v5564 = vrot.slane %v5235, %v5563
    %v5565 = vsel %vm574, %v5564, %v5560
    %v5566 = vlaneseq
    %v5567 = vshrl.u32 %v5566, 7
    %v5568 = vsub.s32 %v576, %v5567
    %v5569 = vrot.slane %v5239, %v5568
    %v5570 = vsel %vm581, %v5569, %v5565
    %v5571 = vlaneseq
    %v5572 = vshrl.u32 %v5571, 7
    %v5573 = vsub.s32 %v583, %v5572
    %v5574 = vrot.slane %v5243, %v5573
    %v5575 = vsel %vm588, %v5574, %v5570
    %v5576 = vsel %vm815, %v5516, %v5378
    %v5577 = vsel %vm815, %v5575, %v5437
    %v5580 = vsel %vm820, %v5576, 0.0
    %v5581 = vsel %vm822, %v5577, 0.0
    %v5582 = vadd.f32 %v5580, %v5581
    %5583 = vadd.xlane.f32.xlu0 %v5582
    %v5584 = vpop.xlane.xlu0 %5583
    %v5585 = vmul.f32 %v5584, 1.9929847e-05
    %v5586 = vmul.f32 %v3548, %v4906
    %v5587 = vmul.f32 %v4227, %v5585
    %v5588 = vadd.f32 %v3548, %v4906
    %v5589 = vadd.f32 %v4227, %v5585
    %v5590 = vmul.f32 %v5588, %v5589
    %v5591 = vmul.f32 %v5586, %v5587
    %v5592 = vld [vmem:[#allocation6] sm:$0xff]
    %v5593 = vld [vmem:[#allocation7] sm:$0xff]
    %v5594 = vld [vmem:[#allocation9] sm:$0x1]
    %v5595 = vlaneseq
    %v5596 = vshrl.u32 %v5595, 7
    %v5597 = vsub.s32 0, %v5596
    %v5598 = vrot.slane %v5592, %v5597
    %v5599 = vmul.f32 %v827, %v5598
    %v5601 = vlaneseq
    %v5602 = vshrl.u32 %v5601, 7
    %v5603 = vsub.s32 0, %v5602
    %v5604 = vrot.slane %v5594, %v5603
    %v5606 = vadd.f32 %v5604, %v5599
    %v5607 = vlaneseq
    %v5608 = vshrl.u32 %v5607, 7
    %v5609 = vsub.s32 0, %v5608
    %v5610 = vrot.slane %v5593, %v5609
    %v5611 = vmul.f32 %v3548, %v5610
    %v5612 = vadd.f32 %v5606, %v5611
    %v5613 = vlaneseq
    %v5614 = vshrl.u32 %v5613, 7
    %v5615 = vsub.s32 1, %v5614
    %v5616 = vrot.slane %v5592, %v5615
    %v5617 = vmul.f32 %v1506, %v5616
    %v5618 = vadd.f32 %v5612, %v5617
    %v5619 = vlaneseq
    %v5620 = vshrl.u32 %v5619, 7
    %v5621 = vsub.s32 1, %v5620
    %v5622 = vrot.slane %v5593, %v5621
    %v5623 = vmul.f32 %v4227, %v5622
    %v5624 = vadd.f32 %v5618, %v5623
    %v5625 = vlaneseq
    %v5626 = vshrl.u32 %v5625, 7
    %v5627 = vsub.s32 2, %v5626
    %v5628 = vrot.slane %v5592, %v5627
    %v5629 = vmul.f32 %v2185, %v5628
    %v5630 = vadd.f32 %v5624, %v5629
    %v5631 = vlaneseq
    %v5632 = vshrl.u32 %v5631, 7
    %v5633 = vsub.s32 2, %v5632
    %v5634 = vrot.slane %v5593, %v5633
    %v5635 = vmul.f32 %v4906, %v5634
    %v5636 = vadd.f32 %v5630, %v5635
    %v5637 = vlaneseq
    %v5638 = vshrl.u32 %v5637, 7
    %v5639 = vsub.s32 3, %v5638
    %v5640 = vrot.slane %v5592, %v5639
    %v5641 = vmul.f32 %v2864, %v5640
    %v5642 = vadd.f32 %v5636, %v5641
    %v5643 = vlaneseq
    %v5644 = vshrl.u32 %v5643, 7
    %v5645 = vsub.s32 3, %v5644
    %v5646 = vrot.slane %v5593, %v5645
    %v5647 = vmul.f32 %v5585, %v5646
    %v5648 = vadd.f32 %v5642, %v5647
    %v5649 = vlaneseq
    %v5650 = vshrl.u32 %v5649, 7
    %v5651 = vsub.s32 4, %v5650
    %v5652 = vrot.slane %v5592, %v5651
    %v5653 = vmul.f32 %v2869, %v5652
    %v5654 = vadd.f32 %v5648, %v5653
    %v5655 = vlaneseq
    %v5656 = vshrl.u32 %v5655, 7
    %v5657 = vsub.s32 4, %v5656
    %v5658 = vrot.slane %v5593, %v5657
    %v5659 = vmul.f32 %v5590, %v5658
    %v5660 = vadd.f32 %v5654, %v5659
    %v5661 = vlaneseq
    %v5662 = vshrl.u32 %v5661, 7
    %v5663 = vsub.s32 5, %v5662
    %v5664 = vrot.slane %v5592, %v5663
    %v5665 = vmul.f32 %v2865, %v5664
    %v5666 = vadd.f32 %v5660, %v5665
    %v5667 = vlaneseq
    %v5668 = vshrl.u32 %v5667, 7
    %v5669 = vsub.s32 5, %v5668
    %v5670 = vrot.slane %v5593, %v5669
    %v5671 = vmul.f32 %v5586, %v5670
    %v5672 = vadd.f32 %v5666, %v5671
    %v5673 = vlaneseq
    %v5674 = vshrl.u32 %v5673, 7
    %v5675 = vsub.s32 6, %v5674
    %v5676 = vrot.slane %v5592, %v5675
    %v5677 = vmul.f32 %v2866, %v5676
    %v5678 = vadd.f32 %v5672, %v5677
    %v5679 = vlaneseq
    %v5680 = vshrl.u32 %v5679, 7
    %v5681 = vsub.s32 6, %v5680
    %v5682 = vrot.slane %v5593, %v5681
    %v5683 = vmul.f32 %v5587, %v5682
    %v5684 = vadd.f32 %v5678, %v5683
    %v5685 = vlaneseq
    %v5686 = vshrl.u32 %v5685, 7
    %v5687 = vsub.s32 7, %v5686
    %v5688 = vrot.slane %v5592, %v5687
    %v5689 = vmul.f32 %v2870, %v5688
    %v5690 = vadd.f32 %v5684, %v5689
    %v5691 = vlaneseq
    %v5692 = vshrl.u32 %v5691, 7
    %v5693 = vsub.s32 7, %v5692
    %v5694 = vrot.slane %v5593, %v5693
    %v5695 = vmul.f32 %v5591, %v5694
    %v5696 = vadd.f32 %v5690, %v5695
    %v5697 = vmax.f32 %v5696, 0.0
    %v5698 = vld [vmem:[#allocation10] sm:$0x3]
    %v5699 = vld [vmem:[#allocation12] sm:$0x1]
    %v5700 = vlaneseq
    %v5701 = vshrl.u32 %v5700, 7
    %v5702 = vsub.s32 0, %v5701
    %v5703 = vrot.slane %v5698, %v5702
    %v5704 = vmul.f32 %v5697, %v5703
    %vm5705 = vcmask 254976
    %v5706 = vsel %vm5705, %v5704, 0.0
    %5707 = vadd.xlane.f32.xlu0 %v5706
    %v5708 = vpop.xlane.xlu0 %5707
    %v5710 = vlaneseq
    %v5711 = vshrl.u32 %v5710, 7
    %v5712 = vsub.s32 0, %v5711
    %v5713 = vrot.slane %v5699, %v5712
    %v5715 = vadd.f32 %v5708, %v5713
    %v5716 = vlaneseq
    %v5717 = vshrl.u32 %v5716, 7
    %v5718 = vsub.s32 1, %v5717
    %v5719 = vrot.slane %v5698, %v5718
    %v5720 = vmul.f32 %v5697, %v5719
    %v5721 = vsel %vm5705, %v5720, 0.0
    %5722 = vadd.xlane.f32.xlu0 %v5721
    %v5723 = vpop.xlane.xlu0 %5722
    %v5724 = vadd.f32 %v5723, %v5713
    %v5725 = vld [vmem:[%s2] sm:$0x3]
    %vm5726 = vcmp.eq.s32.totalorder %v5725, 1
    %5728 = vrot.lane.b32.xlu0 %v5724, 127
    %v5729 = vpop.permute.xlu0 %5728
    %v5731 = vsel %vm5726, %v5729, %v5715
    %v5732 = vxor.u32 %v5731, 2147483648
    %v5733 = vmul.f32 %v5732, 1.442695
    %v5734 = vpow.pop %v5733
    %v5735 = vadd.f32 %v5734, 1.0
    %v5736 = vrcp.pop %v5735
    %v5737 = vmul.f32 1.0, %v5736
    %vm5738 = vcmask 1024
    %5739 = vst.msk [vmem:[%s8] sm:$0x3] %vm5738, %v5737
    // Predicated region
    $region62: #{tpu_custom_call.1} parent=1 // pred_check
      _
    $region63: #{tpu_custom_call.1} parent=1 // pred_check_branch
      %5741 = sbr.rel (0) target = $region65
    $region64: #{tpu_custom_call.1} parent=1 // pred_region
      _
    $region65: #{tpu_custom_call.1} parent=1 // pred_fallthru
      _
    // Predicated region
    $region66: #{tpu_custom_call.1} parent=1 // pred_check
      _
    $region67: #{tpu_custom_call.1} parent=1 // pred_check_branch
      %5743 = sbr.rel (0) target = $region69
    $region68: #{tpu_custom_call.1} parent=1 // pred_region
      _
    $region69: #{tpu_custom_call.1} parent=1 // pred_fallthru
      _
    %5744 = vsyncpa [#allocation3], 1
    %5745 = vsyncpa [#allocation5], 1
    %5746 = vsyncpa [#allocation8], 1
    %5747 = vsyncpa [#allocation11], 1

</llo_original>
